<compile_context>
chip_gen: v7x
topology: tpu7x:2x2x1
jax: 0.10.0
libtpu: 0.0.40
codegen_flags: <defaults>
</compile_context>

<pallas_src>
import jax
import jax.numpy as jnp
from jax.experimental import pallas as pl
from jax.experimental.pallas import tpu as pltpu


# ----------------------------------------------------------------------------
# Fused kernel factory.  All sizes are static and baked in via closure.
# Ref order: ids, emb, [per layer: w_ih_t(both dirs), b(both dirs), w_hh_t per
# dir], dec1_w, dec1_b, dec2_w, dec2_b, out.
# Gate order matches PyTorch nn.LSTM: i, f, g, o.
# ----------------------------------------------------------------------------
def _make_fused_kernel(*, T, B, V, E, H, num_layers, n_class, num_dir):
    bidirectional = num_dir == 2
    G = 4 * H

    def kernel(*refs):
        it = iter(refs)
        ids_ref = next(it)                     # [T*B, 1] int32 (time-major)
        emb_ref = next(it)                     # [V, E]  (V padded to 128)
        layers = []
        for _ in range(num_layers):
            w_ih_ref = next(it)                # [D, G*num_dir]
            b_ref = next(it)                   # [1, G*num_dir]
            w_hh_refs = [next(it) for _ in range(num_dir)]   # [H, G] each
            layers.append((w_ih_ref, b_ref, w_hh_refs))
        d1w_ref = next(it)                     # [2*H*num_dir, H]
        d1b_ref = next(it)                     # [1, H]
        d2w_ref = next(it)                     # [H, n_class]
        d2b_ref = next(it)                     # [1, n_class]
        out_ref = next(it)                     # [B, n_class]

        # ---- Embedding lookup as a one-hot matmul (table is tiny; in VMEM).
        ids = ids_ref[...]                                              # [T*B, 1]
        vocab_iota = jax.lax.broadcasted_iota(jnp.int32, (T * B, V), 1)
        onehot = (vocab_iota == ids).astype(jnp.float32)                # [T*B, V]
        x = jnp.dot(onehot, emb_ref[...],
                    preferred_element_type=jnp.float32)                 # [T*B, E]

        def cell(gates, c):
            # TODO(synk): gate slices are 32-lane cuts; fine at H=32 (XLU slack),
            # revisit layout if hidden_dim is scaled to >=128.
            i_g = jax.nn.sigmoid(gates[:, 0 * H:1 * H])
            f_g = jax.nn.sigmoid(gates[:, 1 * H:2 * H])
            g_g = jnp.tanh(gates[:, 2 * H:3 * H])
            o_g = jax.nn.sigmoid(gates[:, 3 * H:4 * H])
            c_new = f_g * c + i_g * g_g
            h_new = o_g * jnp.tanh(c_new)
            return h_new, c_new

        for (w_ih_ref, b_ref, w_hh_refs) in layers:
            # Hoisted input projection for BOTH directions (time-independent):
            # one [T*B, D] x [D, 4H*num_dir] matmul + one bias add.
            gates_in = jnp.dot(x, w_ih_ref[...],
                               preferred_element_type=jnp.float32) + b_ref[...]

            w_hh_f = w_hh_refs[0][...]
            h_f = jnp.zeros((B, H), jnp.float32)
            c_f = jnp.zeros((B, H), jnp.float32)
            outs_f = [None] * T
            if bidirectional:
                w_hh_b = w_hh_refs[1][...]
                h_b = jnp.zeros((B, H), jnp.float32)
                c_b = jnp.zeros((B, H), jnp.float32)
                outs_b = [None] * T

            # Both directions advance in the same unrolled time loop.
            for s in range(T):
                g_f = gates_in[s * B:(s + 1) * B, 0:G] + jnp.dot(
                    h_f, w_hh_f, preferred_element_type=jnp.float32)
                h_f, c_f = cell(g_f, c_f)
                outs_f[s] = h_f
                if bidirectional:
                    p = T - 1 - s
                    g_b = gates_in[p * B:(p + 1) * B, G:2 * G] + jnp.dot(
                        h_b, w_hh_b, preferred_element_type=jnp.float32)
                    h_b, c_b = cell(g_b, c_b)
                    outs_b[p] = h_b

            out_f = jnp.concatenate(outs_f, axis=0)           # [T*B, H]
            if bidirectional:
                out_b = jnp.concatenate(outs_b, axis=0)       # [T*B, H]
                x = jnp.concatenate([out_f, out_b], axis=1)   # [T*B, 2H]
            else:
                x = out_f                                     # [T*B, H]

        # encoding = concat(states[0], states[-1]) along features.
        enc = jnp.concatenate([x[0:B], x[(T - 1) * B:T * B]], axis=1)
        h1 = jnp.dot(enc, d1w_ref[...],
                     preferred_element_type=jnp.float32) + d1b_ref[...]
        out = jnp.dot(h1, d2w_ref[...],
                      preferred_element_type=jnp.float32) + d2b_ref[...]
        out_ref[...] = out.astype(out_ref.dtype)

    return kernel


# ----------------------------------------------------------------------------
# Parameter init (deterministic, synthetic), PyTorch-compatible layout.
# ----------------------------------------------------------------------------
def init_params(key, vocab_size, embedding_dim, hidden_dim, num_layers,
                n_class, bidirectional):
    num_dir = 2 if bidirectional else 1
    keys = iter(jax.random.split(key, 128))
    scale = 1.0 / float(hidden_dim) ** 0.5
    H = hidden_dim

    params = {
        "embedding": 0.1 * jax.random.normal(
            next(keys), (vocab_size, embedding_dim), jnp.float32),
        "lstm": [],
    }
    for layer in range(num_layers):
        in_dim = embedding_dim if layer == 0 else H * num_dir
        w_ih_cols, b_cols, w_hh_list = [], [], []
        for _d in range(num_dir):
            w_ih = jax.random.uniform(next(keys), (4 * H, in_dim),
                                      jnp.float32, -scale, scale)
            w_hh = jax.random.uniform(next(keys), (4 * H, H),
                                      jnp.float32, -scale, scale)
            b_ih = jax.random.uniform(next(keys), (4 * H,),
                                      jnp.float32, -scale, scale)
            b_hh = jax.random.uniform(next(keys), (4 * H,),
                                      jnp.float32, -scale, scale)
            w_ih_cols.append(w_ih.T)            # [in_dim, 4H]
            b_cols.append(b_ih + b_hh)          # [4H]
            w_hh_list.append(w_hh.T)            # [H, 4H]
        params["lstm"].append({
            "w_ih_t": jnp.concatenate(w_ih_cols, axis=1),    # [in_dim, 4H*nd]
            "b": jnp.concatenate(b_cols).reshape(1, -1),     # [1, 4H*nd]
            "w_hh_t": w_hh_list,                             # list of [H, 4H]
        })

    dec1_in = H * 2 * num_dir
    params["dec1_w_t"] = jax.random.uniform(next(keys), (dec1_in, H),
                                            jnp.float32, -scale, scale)
    params["dec1_b"] = jax.random.uniform(next(keys), (1, H),
                                          jnp.float32, -scale, scale)
    params["dec2_w_t"] = jax.random.uniform(next(keys), (H, n_class),
                                            jnp.float32, -scale, scale)
    params["dec2_b"] = jax.random.uniform(next(keys), (1, n_class),
                                          jnp.float32, -scale, scale)
    return params


# ----------------------------------------------------------------------------
# Forward pass: one fused pallas_call.
# ----------------------------------------------------------------------------
def lstm_model_forward(params, inputs, *, hidden_dim, num_layers, n_class,
                       bidirectional):
    B, T = inputs.shape
    V, E = params["embedding"].shape
    num_dir = 2 if bidirectional else 1

    # Token ids, time-major and flattened to [T*B, 1] (tiny int op).
    ids_tm = jnp.transpose(inputs).reshape(T * B, 1).astype(jnp.int32)
    # Pad the vocab (contraction) dim to 128 so the in-kernel one-hot matmul is
    # tile-aligned; padded rows are never selected (ids < V).
    V_pad = ((V + 127) // 128) * 128
    emb_pad = jnp.pad(params["embedding"], ((0, V_pad - V), (0, 0)))

    args = [ids_tm, emb_pad]
    for lp in params["lstm"]:
        args.append(lp["w_ih_t"])
        args.append(lp["b"])
        args.extend(lp["w_hh_t"])
    args += [params["dec1_w_t"], params["dec1_b"],
             params["dec2_w_t"], params["dec2_b"]]

    kernel = _make_fused_kernel(T=T, B=B, V=V_pad, E=E, H=hidden_dim,
                                num_layers=num_layers, n_class=n_class,
                                num_dir=num_dir)
    return pl.pallas_call(
        kernel,
        out_shape=jax.ShapeDtypeStruct((B, n_class), jnp.float32),
        in_specs=[pl.BlockSpec(memory_space=pltpu.MemorySpace.VMEM)] * len(args),
        out_specs=pl.BlockSpec(memory_space=pltpu.MemorySpace.VMEM),
    )(*args)


# ----------------------------------------------------------------------------
# Pure-JAX reference (mirrors PyTorch semantics) for a correctness check.
# ----------------------------------------------------------------------------
def lstm_model_reference(params, inputs, *, hidden_dim, bidirectional):
    H = hidden_dim
    num_dir = 2 if bidirectional else 1
    G = 4 * H
    emb = jnp.take(params["embedding"], inputs, axis=0)       # [B, T, E]
    x = jnp.transpose(emb, (1, 0, 2))                         # [T, B, E]
    T, B, _ = x.shape

    def run_dir(x_seq, w_ih_t, w_hh_t, b):
        h = jnp.zeros((B, H), jnp.float32)
        c = jnp.zeros((B, H), jnp.float32)
        outs = []
        for t in range(x_seq.shape[0]):
            gates = x_seq[t] @ w_ih_t + h @ w_hh_t + b
            i_g = jax.nn.sigmoid(gates[:, 0 * H:1 * H])
            f_g = jax.nn.sigmoid(gates[:, 1 * H:2 * H])
            g_g = jnp.tanh(gates[:, 2 * H:3 * H])
            o_g = jax.nn.sigmoid(gates[:, 3 * H:4 * H])
            c = f_g * c + i_g * g_g
            h = o_g * jnp.tanh(c)
            outs.append(h)
        return jnp.stack(outs, axis=0)

    for lp in params["lstm"]:
        outs = []
        for d in range(num_dir):
            w_ih_t = lp["w_ih_t"][:, d * G:(d + 1) * G]
            b = lp["b"][0, d * G:(d + 1) * G]
            w_hh_t = lp["w_hh_t"][d]
            if d == 0:
                outs.append(run_dir(x, w_ih_t, w_hh_t, b))
            else:
                outs.append(run_dir(x[::-1], w_ih_t, w_hh_t, b)[::-1])
        x = jnp.concatenate(outs, axis=-1)

    enc = jnp.concatenate([x[0], x[-1]], axis=1)
    h1 = enc @ params["dec1_w_t"] + params["dec1_b"]
    return h1 @ params["dec2_w_t"] + params["dec2_b"]


if __name__ == "__main__":
    vocab_size = 50
    embedding_dim = 32
    hidden_dim = 32
    num_layers = 2
    n_class = 2
    bidirectional = True
    B, T = 2, 8

    key = jax.random.PRNGKey(0)
    pkey, ikey = jax.random.split(key)
    params = init_params(pkey, vocab_size, embedding_dim, hidden_dim,
                         num_layers, n_class, bidirectional)
    inputs = jax.random.randint(ikey, (B, T), 0, vocab_size, dtype=jnp.int32)

    fwd = jax.jit(lambda p, x: lstm_model_forward(
        p, x, hidden_dim=hidden_dim, num_layers=num_layers,
        n_class=n_class, bidirectional=bidirectional))
    out = fwd(params, inputs)
    jax.block_until_ready(out)

    assert out.shape == (B, n_class) and out.dtype == jnp.float32
    assert bool(jnp.all(jnp.isfinite(out)))

    ref = lstm_model_reference(params, inputs, hidden_dim=hidden_dim,
                               bidirectional=bidirectional)
    assert bool(jnp.allclose(out, ref, atol=5e-2, rtol=5e-2)), (out, ref)

    print("KERNEL_OK")
</pallas_src>

<mosaic_0001>
module attributes {stable_mosaic.version = 11 : i64} {
  func.func @kernel(%arg0: memref<16x1xi32, #tpu.memory_space<vmem>>, %arg1: memref<128x32xf32, #tpu.memory_space<vmem>>, %arg2: memref<32x256xf32, #tpu.memory_space<vmem>>, %arg3: memref<1x256xf32, #tpu.memory_space<vmem>>, %arg4: memref<32x128xf32, #tpu.memory_space<vmem>>, %arg5: memref<32x128xf32, #tpu.memory_space<vmem>>, %arg6: memref<64x256xf32, #tpu.memory_space<vmem>>, %arg7: memref<1x256xf32, #tpu.memory_space<vmem>>, %arg8: memref<32x128xf32, #tpu.memory_space<vmem>>, %arg9: memref<32x128xf32, #tpu.memory_space<vmem>>, %arg10: memref<128x32xf32, #tpu.memory_space<vmem>>, %arg11: memref<1x32xf32, #tpu.memory_space<vmem>>, %arg12: memref<32x2xf32, #tpu.memory_space<vmem>>, %arg13: memref<1x2xf32, #tpu.memory_space<vmem>>, %arg14: memref<2x2xf32, #tpu.memory_space<vmem>>) attributes {dimension_semantics = [], scalar_prefetch = 0 : i64, scratch_operands = 0 : i64, tpu.core_type = #tpu.core_type<tc>} {
    %c0 = arith.constant 0 : index
    %c0_0 = arith.constant 0 : index
    %0 = vector.load %arg0[%c0, %c0_0] : memref<16x1xi32, #tpu.memory_space<vmem>>, vector<16x1xi32>
    %1 = tpu.iota {dimensions = array<i32: 1>} : vector<16x128xi32>
    %2 = vector.broadcast %0 : vector<16x1xi32> to vector<16x128xi32>
    %3 = arith.cmpi eq, %1, %2 : vector<16x128xi32>
    %4 = arith.extui %3 : vector<16x128xi1> to vector<16x128xi32>
    %5 = arith.sitofp %4 : vector<16x128xi32> to vector<16x128xf32>
    %c0_1 = arith.constant 0 : index
    %c0_2 = arith.constant 0 : index
    %6 = vector.load %arg1[%c0_1, %c0_2] : memref<128x32xf32, #tpu.memory_space<vmem>>, vector<128x32xf32>
    %cst = arith.constant dense<0.000000e+00> : vector<16x32xf32>
    %7 = tpu.matmul %5, %6, %cst {dimension_numbers = #tpu.dot_dimension_numbers<[1], [0], [0], [1], [0, 0, 1, 1], [], []>} : vector<16x128xf32>, vector<128x32xf32>, vector<16x32xf32> -> vector<16x32xf32>
    %c0_3 = arith.constant 0 : index
    %c0_4 = arith.constant 0 : index
    %8 = vector.load %arg2[%c0_3, %c0_4] : memref<32x256xf32, #tpu.memory_space<vmem>>, vector<32x256xf32>
    %cst_5 = arith.constant dense<0.000000e+00> : vector<16x256xf32>
    %9 = tpu.matmul %7, %8, %cst_5 {dimension_numbers = #tpu.dot_dimension_numbers<[1], [0], [0], [1], [0, 0, 1, 1], [], []>} : vector<16x32xf32>, vector<32x256xf32>, vector<16x256xf32> -> vector<16x256xf32>
    %c0_6 = arith.constant 0 : index
    %c0_7 = arith.constant 0 : index
    %10 = vector.load %arg3[%c0_6, %c0_7] : memref<1x256xf32, #tpu.memory_space<vmem>>, vector<1x256xf32>
    %11 = vector.broadcast %10 : vector<1x256xf32> to vector<16x256xf32>
    %12 = arith.addf %9, %11 : vector<16x256xf32>
    %c0_8 = arith.constant 0 : index
    %c0_9 = arith.constant 0 : index
    %13 = vector.load %arg4[%c0_8, %c0_9] : memref<32x128xf32, #tpu.memory_space<vmem>>, vector<32x128xf32>
    %cst_10 = arith.constant 0.000000e+00 : f32
    %14 = vector.broadcast %cst_10 : f32 to vector<2x32xf32>
    %cst_11 = arith.constant 0.000000e+00 : f32
    %15 = vector.broadcast %cst_11 : f32 to vector<2x32xf32>
    %c0_12 = arith.constant 0 : index
    %c0_13 = arith.constant 0 : index
    %16 = vector.load %arg5[%c0_12, %c0_13] : memref<32x128xf32, #tpu.memory_space<vmem>>, vector<32x128xf32>
    %cst_14 = arith.constant 0.000000e+00 : f32
    %17 = vector.broadcast %cst_14 : f32 to vector<2x32xf32>
    %cst_15 = arith.constant 0.000000e+00 : f32
    %18 = vector.broadcast %cst_15 : f32 to vector<2x32xf32>
    %19 = vector.extract_strided_slice %12 {offsets = [0, 0], sizes = [2, 128], strides = [1, 1]} : vector<16x256xf32> to vector<2x128xf32>
    %cst_16 = arith.constant dense<0.000000e+00> : vector<2x128xf32>
    %20 = tpu.matmul %14, %13, %cst_16 {dimension_numbers = #tpu.dot_dimension_numbers<[1], [0], [0], [1], [0, 0, 1, 1], [], []>} : vector<2x32xf32>, vector<32x128xf32>, vector<2x128xf32> -> vector<2x128xf32>
    %21 = arith.addf %19, %20 : vector<2x128xf32>
    %22 = vector.extract_strided_slice %21 {offsets = [0, 0], sizes = [2, 32], strides = [1, 1]} : vector<2x128xf32> to vector<2x32xf32>
    %23 = arith.negf %22 : vector<2x32xf32>
    %24 = math.exp %23 : vector<2x32xf32>
    %cst_17 = arith.constant 1.000000e+00 : f32
    %25 = vector.broadcast %cst_17 : f32 to vector<2x32xf32>
    %26 = arith.addf %25, %24 : vector<2x32xf32>
    %27 = arith.divf %25, %26 : vector<2x32xf32>
    %28 = vector.extract_strided_slice %21 {offsets = [0, 32], sizes = [2, 32], strides = [1, 1]} : vector<2x128xf32> to vector<2x32xf32>
    %29 = arith.negf %28 : vector<2x32xf32>
    %30 = math.exp %29 : vector<2x32xf32>
    %cst_18 = arith.constant 1.000000e+00 : f32
    %31 = vector.broadcast %cst_18 : f32 to vector<2x32xf32>
    %32 = arith.addf %31, %30 : vector<2x32xf32>
    %33 = arith.divf %31, %32 : vector<2x32xf32>
    %34 = vector.extract_strided_slice %21 {offsets = [0, 64], sizes = [2, 32], strides = [1, 1]} : vector<2x128xf32> to vector<2x32xf32>
    %35 = math.tanh %34 : vector<2x32xf32>
    %36 = vector.extract_strided_slice %21 {offsets = [0, 96], sizes = [2, 32], strides = [1, 1]} : vector<2x128xf32> to vector<2x32xf32>
    %37 = arith.negf %36 : vector<2x32xf32>
    %38 = math.exp %37 : vector<2x32xf32>
    %cst_19 = arith.constant 1.000000e+00 : f32
    %39 = vector.broadcast %cst_19 : f32 to vector<2x32xf32>
    %40 = arith.addf %39, %38 : vector<2x32xf32>
    %41 = arith.divf %39, %40 : vector<2x32xf32>
    %42 = arith.mulf %33, %15 : vector<2x32xf32>
    %43 = arith.mulf %27, %35 : vector<2x32xf32>
    %44 = arith.addf %42, %43 : vector<2x32xf32>
    %45 = math.tanh %44 : vector<2x32xf32>
    %46 = arith.mulf %41, %45 : vector<2x32xf32>
    %47 = vector.extract_strided_slice %12 {offsets = [14, 128], sizes = [2, 128], strides = [1, 1]} : vector<16x256xf32> to vector<2x128xf32>
    %cst_20 = arith.constant dense<0.000000e+00> : vector<2x128xf32>
    %48 = tpu.matmul %17, %16, %cst_20 {dimension_numbers = #tpu.dot_dimension_numbers<[1], [0], [0], [1], [0, 0, 1, 1], [], []>} : vector<2x32xf32>, vector<32x128xf32>, vector<2x128xf32> -> vector<2x128xf32>
    %49 = arith.addf %47, %48 : vector<2x128xf32>
    %50 = vector.extract_strided_slice %49 {offsets = [0, 0], sizes = [2, 32], strides = [1, 1]} : vector<2x128xf32> to vector<2x32xf32>
    %51 = arith.negf %50 : vector<2x32xf32>
    %52 = math.exp %51 : vector<2x32xf32>
    %cst_21 = arith.constant 1.000000e+00 : f32
    %53 = vector.broadcast %cst_21 : f32 to vector<2x32xf32>
    %54 = arith.addf %53, %52 : vector<2x32xf32>
    %55 = arith.divf %53, %54 : vector<2x32xf32>
    %56 = vector.extract_strided_slice %49 {offsets = [0, 32], sizes = [2, 32], strides = [1, 1]} : vector<2x128xf32> to vector<2x32xf32>
    %57 = arith.negf %56 : vector<2x32xf32>
    %58 = math.exp %57 : vector<2x32xf32>
    %cst_22 = arith.constant 1.000000e+00 : f32
    %59 = vector.broadcast %cst_22 : f32 to vector<2x32xf32>
    %60 = arith.addf %59, %58 : vector<2x32xf32>
    %61 = arith.divf %59, %60 : vector<2x32xf32>
    %62 = vector.extract_strided_slice %49 {offsets = [0, 64], sizes = [2, 32], strides = [1, 1]} : vector<2x128xf32> to vector<2x32xf32>
    %63 = math.tanh %62 : vector<2x32xf32>
    %64 = vector.extract_strided_slice %49 {offsets = [0, 96], sizes = [2, 32], strides = [1, 1]} : vector<2x128xf32> to vector<2x32xf32>
    %65 = arith.negf %64 : vector<2x32xf32>
    %66 = math.exp %65 : vector<2x32xf32>
    %cst_23 = arith.constant 1.000000e+00 : f32
    %67 = vector.broadcast %cst_23 : f32 to vector<2x32xf32>
    %68 = arith.addf %67, %66 : vector<2x32xf32>
    %69 = arith.divf %67, %68 : vector<2x32xf32>
    %70 = arith.mulf %61, %18 : vector<2x32xf32>
    %71 = arith.mulf %55, %63 : vector<2x32xf32>
    %72 = arith.addf %70, %71 : vector<2x32xf32>
    %73 = math.tanh %72 : vector<2x32xf32>
    %74 = arith.mulf %69, %73 : vector<2x32xf32>
    %75 = vector.extract_strided_slice %12 {offsets = [2, 0], sizes = [2, 128], strides = [1, 1]} : vector<16x256xf32> to vector<2x128xf32>
    %cst_24 = arith.constant dense<0.000000e+00> : vector<2x128xf32>
    %76 = tpu.matmul %46, %13, %cst_24 {dimension_numbers = #tpu.dot_dimension_numbers<[1], [0], [0], [1], [0, 0, 1, 1], [], []>} : vector<2x32xf32>, vector<32x128xf32>, vector<2x128xf32> -> vector<2x128xf32>
    %77 = arith.addf %75, %76 : vector<2x128xf32>
    %78 = vector.extract_strided_slice %77 {offsets = [0, 0], sizes = [2, 32], strides = [1, 1]} : vector<2x128xf32> to vector<2x32xf32>
    %79 = arith.negf %78 : vector<2x32xf32>
    %80 = math.exp %79 : vector<2x32xf32>
    %cst_25 = arith.constant 1.000000e+00 : f32
    %81 = vector.broadcast %cst_25 : f32 to vector<2x32xf32>
    %82 = arith.addf %81, %80 : vector<2x32xf32>
    %83 = arith.divf %81, %82 : vector<2x32xf32>
    %84 = vector.extract_strided_slice %77 {offsets = [0, 32], sizes = [2, 32], strides = [1, 1]} : vector<2x128xf32> to vector<2x32xf32>
    %85 = arith.negf %84 : vector<2x32xf32>
    %86 = math.exp %85 : vector<2x32xf32>
    %cst_26 = arith.constant 1.000000e+00 : f32
    %87 = vector.broadcast %cst_26 : f32 to vector<2x32xf32>
    %88 = arith.addf %87, %86 : vector<2x32xf32>
    %89 = arith.divf %87, %88 : vector<2x32xf32>
    %90 = vector.extract_strided_slice %77 {offsets = [0, 64], sizes = [2, 32], strides = [1, 1]} : vector<2x128xf32> to vector<2x32xf32>
    %91 = math.tanh %90 : vector<2x32xf32>
    %92 = vector.extract_strided_slice %77 {offsets = [0, 96], sizes = [2, 32], strides = [1, 1]} : vector<2x128xf32> to vector<2x32xf32>
    %93 = arith.negf %92 : vector<2x32xf32>
    %94 = math.exp %93 : vector<2x32xf32>
    %cst_27 = arith.constant 1.000000e+00 : f32
    %95 = vector.broadcast %cst_27 : f32 to vector<2x32xf32>
    %96 = arith.addf %95, %94 : vector<2x32xf32>
    %97 = arith.divf %95, %96 : vector<2x32xf32>
    %98 = arith.mulf %89, %44 : vector<2x32xf32>
    %99 = arith.mulf %83, %91 : vector<2x32xf32>
    %100 = arith.addf %98, %99 : vector<2x32xf32>
    %101 = math.tanh %100 : vector<2x32xf32>
    %102 = arith.mulf %97, %101 : vector<2x32xf32>
    %103 = vector.extract_strided_slice %12 {offsets = [12, 128], sizes = [2, 128], strides = [1, 1]} : vector<16x256xf32> to vector<2x128xf32>
    %cst_28 = arith.constant dense<0.000000e+00> : vector<2x128xf32>
    %104 = tpu.matmul %74, %16, %cst_28 {dimension_numbers = #tpu.dot_dimension_numbers<[1], [0], [0], [1], [0, 0, 1, 1], [], []>} : vector<2x32xf32>, vector<32x128xf32>, vector<2x128xf32> -> vector<2x128xf32>
    %105 = arith.addf %103, %104 : vector<2x128xf32>
    %106 = vector.extract_strided_slice %105 {offsets = [0, 0], sizes = [2, 32], strides = [1, 1]} : vector<2x128xf32> to vector<2x32xf32>
    %107 = arith.negf %106 : vector<2x32xf32>
    %108 = math.exp %107 : vector<2x32xf32>
    %cst_29 = arith.constant 1.000000e+00 : f32
    %109 = vector.broadcast %cst_29 : f32 to vector<2x32xf32>
    %110 = arith.addf %109, %108 : vector<2x32xf32>
    %111 = arith.divf %109, %110 : vector<2x32xf32>
    %112 = vector.extract_strided_slice %105 {offsets = [0, 32], sizes = [2, 32], strides = [1, 1]} : vector<2x128xf32> to vector<2x32xf32>
    %113 = arith.negf %112 : vector<2x32xf32>
    %114 = math.exp %113 : vector<2x32xf32>
    %cst_30 = arith.constant 1.000000e+00 : f32
    %115 = vector.broadcast %cst_30 : f32 to vector<2x32xf32>
    %116 = arith.addf %115, %114 : vector<2x32xf32>
    %117 = arith.divf %115, %116 : vector<2x32xf32>
    %118 = vector.extract_strided_slice %105 {offsets = [0, 64], sizes = [2, 32], strides = [1, 1]} : vector<2x128xf32> to vector<2x32xf32>
    %119 = math.tanh %118 : vector<2x32xf32>
    %120 = vector.extract_strided_slice %105 {offsets = [0, 96], sizes = [2, 32], strides = [1, 1]} : vector<2x128xf32> to vector<2x32xf32>
    %121 = arith.negf %120 : vector<2x32xf32>
    %122 = math.exp %121 : vector<2x32xf32>
    %cst_31 = arith.constant 1.000000e+00 : f32
    %123 = vector.broadcast %cst_31 : f32 to vector<2x32xf32>
    %124 = arith.addf %123, %122 : vector<2x32xf32>
    %125 = arith.divf %123, %124 : vector<2x32xf32>
    %126 = arith.mulf %117, %72 : vector<2x32xf32>
    %127 = arith.mulf %111, %119 : vector<2x32xf32>
    %128 = arith.addf %126, %127 : vector<2x32xf32>
    %129 = math.tanh %128 : vector<2x32xf32>
    %130 = arith.mulf %125, %129 : vector<2x32xf32>
    %131 = vector.extract_strided_slice %12 {offsets = [4, 0], sizes = [2, 128], strides = [1, 1]} : vector<16x256xf32> to vector<2x128xf32>
    %cst_32 = arith.constant dense<0.000000e+00> : vector<2x128xf32>
    %132 = tpu.matmul %102, %13, %cst_32 {dimension_numbers = #tpu.dot_dimension_numbers<[1], [0], [0], [1], [0, 0, 1, 1], [], []>} : vector<2x32xf32>, vector<32x128xf32>, vector<2x128xf32> -> vector<2x128xf32>
    %133 = arith.addf %131, %132 : vector<2x128xf32>
    %134 = vector.extract_strided_slice %133 {offsets = [0, 0], sizes = [2, 32], strides = [1, 1]} : vector<2x128xf32> to vector<2x32xf32>
    %135 = arith.negf %134 : vector<2x32xf32>
    %136 = math.exp %135 : vector<2x32xf32>
    %cst_33 = arith.constant 1.000000e+00 : f32
    %137 = vector.broadcast %cst_33 : f32 to vector<2x32xf32>
    %138 = arith.addf %137, %136 : vector<2x32xf32>
    %139 = arith.divf %137, %138 : vector<2x32xf32>
    %140 = vector.extract_strided_slice %133 {offsets = [0, 32], sizes = [2, 32], strides = [1, 1]} : vector<2x128xf32> to vector<2x32xf32>
    %141 = arith.negf %140 : vector<2x32xf32>
    %142 = math.exp %141 : vector<2x32xf32>
    %cst_34 = arith.constant 1.000000e+00 : f32
    %143 = vector.broadcast %cst_34 : f32 to vector<2x32xf32>
    %144 = arith.addf %143, %142 : vector<2x32xf32>
    %145 = arith.divf %143, %144 : vector<2x32xf32>
    %146 = vector.extract_strided_slice %133 {offsets = [0, 64], sizes = [2, 32], strides = [1, 1]} : vector<2x128xf32> to vector<2x32xf32>
    %147 = math.tanh %146 : vector<2x32xf32>
    %148 = vector.extract_strided_slice %133 {offsets = [0, 96], sizes = [2, 32], strides = [1, 1]} : vector<2x128xf32> to vector<2x32xf32>
    %149 = arith.negf %148 : vector<2x32xf32>
    %150 = math.exp %149 : vector<2x32xf32>
    %cst_35 = arith.constant 1.000000e+00 : f32
    %151 = vector.broadcast %cst_35 : f32 to vector<2x32xf32>
    %152 = arith.addf %151, %150 : vector<2x32xf32>
    %153 = arith.divf %151, %152 : vector<2x32xf32>
    %154 = arith.mulf %145, %100 : vector<2x32xf32>
    %155 = arith.mulf %139, %147 : vector<2x32xf32>
    %156 = arith.addf %154, %155 : vector<2x32xf32>
    %157 = math.tanh %156 : vector<2x32xf32>
    %158 = arith.mulf %153, %157 : vector<2x32xf32>
    %159 = vector.extract_strided_slice %12 {offsets = [10, 128], sizes = [2, 128], strides = [1, 1]} : vector<16x256xf32> to vector<2x128xf32>
    %cst_36 = arith.constant dense<0.000000e+00> : vector<2x128xf32>
    %160 = tpu.matmul %130, %16, %cst_36 {dimension_numbers = #tpu.dot_dimension_numbers<[1], [0], [0], [1], [0, 0, 1, 1], [], []>} : vector<2x32xf32>, vector<32x128xf32>, vector<2x128xf32> -> vector<2x128xf32>
    %161 = arith.addf %159, %160 : vector<2x128xf32>
    %162 = vector.extract_strided_slice %161 {offsets = [0, 0], sizes = [2, 32], strides = [1, 1]} : vector<2x128xf32> to vector<2x32xf32>
    %163 = arith.negf %162 : vector<2x32xf32>
    %164 = math.exp %163 : vector<2x32xf32>
    %cst_37 = arith.constant 1.000000e+00 : f32
    %165 = vector.broadcast %cst_37 : f32 to vector<2x32xf32>
    %166 = arith.addf %165, %164 : vector<2x32xf32>
    %167 = arith.divf %165, %166 : vector<2x32xf32>
    %168 = vector.extract_strided_slice %161 {offsets = [0, 32], sizes = [2, 32], strides = [1, 1]} : vector<2x128xf32> to vector<2x32xf32>
    %169 = arith.negf %168 : vector<2x32xf32>
    %170 = math.exp %169 : vector<2x32xf32>
    %cst_38 = arith.constant 1.000000e+00 : f32
    %171 = vector.broadcast %cst_38 : f32 to vector<2x32xf32>
    %172 = arith.addf %171, %170 : vector<2x32xf32>
    %173 = arith.divf %171, %172 : vector<2x32xf32>
    %174 = vector.extract_strided_slice %161 {offsets = [0, 64], sizes = [2, 32], strides = [1, 1]} : vector<2x128xf32> to vector<2x32xf32>
    %175 = math.tanh %174 : vector<2x32xf32>
    %176 = vector.extract_strided_slice %161 {offsets = [0, 96], sizes = [2, 32], strides = [1, 1]} : vector<2x128xf32> to vector<2x32xf32>
    %177 = arith.negf %176 : vector<2x32xf32>
    %178 = math.exp %177 : vector<2x32xf32>
    %cst_39 = arith.constant 1.000000e+00 : f32
    %179 = vector.broadcast %cst_39 : f32 to vector<2x32xf32>
    %180 = arith.addf %179, %178 : vector<2x32xf32>
    %181 = arith.divf %179, %180 : vector<2x32xf32>
    %182 = arith.mulf %173, %128 : vector<2x32xf32>
    %183 = arith.mulf %167, %175 : vector<2x32xf32>
    %184 = arith.addf %182, %183 : vector<2x32xf32>
    %185 = math.tanh %184 : vector<2x32xf32>
    %186 = arith.mulf %181, %185 : vector<2x32xf32>
    %187 = vector.extract_strided_slice %12 {offsets = [6, 0], sizes = [2, 128], strides = [1, 1]} : vector<16x256xf32> to vector<2x128xf32>
    %cst_40 = arith.constant dense<0.000000e+00> : vector<2x128xf32>
    %188 = tpu.matmul %158, %13, %cst_40 {dimension_numbers = #tpu.dot_dimension_numbers<[1], [0], [0], [1], [0, 0, 1, 1], [], []>} : vector<2x32xf32>, vector<32x128xf32>, vector<2x128xf32> -> vector<2x128xf32>
    %189 = arith.addf %187, %188 : vector<2x128xf32>
    %190 = vector.extract_strided_slice %189 {offsets = [0, 0], sizes = [2, 32], strides = [1, 1]} : vector<2x128xf32> to vector<2x32xf32>
    %191 = arith.negf %190 : vector<2x32xf32>
    %192 = math.exp %191 : vector<2x32xf32>
    %cst_41 = arith.constant 1.000000e+00 : f32
    %193 = vector.broadcast %cst_41 : f32 to vector<2x32xf32>
    %194 = arith.addf %193, %192 : vector<2x32xf32>
    %195 = arith.divf %193, %194 : vector<2x32xf32>
    %196 = vector.extract_strided_slice %189 {offsets = [0, 32], sizes = [2, 32], strides = [1, 1]} : vector<2x128xf32> to vector<2x32xf32>
    %197 = arith.negf %196 : vector<2x32xf32>
    %198 = math.exp %197 : vector<2x32xf32>
    %cst_42 = arith.constant 1.000000e+00 : f32
    %199 = vector.broadcast %cst_42 : f32 to vector<2x32xf32>
    %200 = arith.addf %199, %198 : vector<2x32xf32>
    %201 = arith.divf %199, %200 : vector<2x32xf32>
    %202 = vector.extract_strided_slice %189 {offsets = [0, 64], sizes = [2, 32], strides = [1, 1]} : vector<2x128xf32> to vector<2x32xf32>
    %203 = math.tanh %202 : vector<2x32xf32>
    %204 = vector.extract_strided_slice %189 {offsets = [0, 96], sizes = [2, 32], strides = [1, 1]} : vector<2x128xf32> to vector<2x32xf32>
    %205 = arith.negf %204 : vector<2x32xf32>
    %206 = math.exp %205 : vector<2x32xf32>
    %cst_43 = arith.constant 1.000000e+00 : f32
    %207 = vector.broadcast %cst_43 : f32 to vector<2x32xf32>
    %208 = arith.addf %207, %206 : vector<2x32xf32>
    %209 = arith.divf %207, %208 : vector<2x32xf32>
    %210 = arith.mulf %201, %156 : vector<2x32xf32>
    %211 = arith.mulf %195, %203 : vector<2x32xf32>
    %212 = arith.addf %210, %211 : vector<2x32xf32>
    %213 = math.tanh %212 : vector<2x32xf32>
    %214 = arith.mulf %209, %213 : vector<2x32xf32>
    %215 = vector.extract_strided_slice %12 {offsets = [8, 128], sizes = [2, 128], strides = [1, 1]} : vector<16x256xf32> to vector<2x128xf32>
    %cst_44 = arith.constant dense<0.000000e+00> : vector<2x128xf32>
    %216 = tpu.matmul %186, %16, %cst_44 {dimension_numbers = #tpu.dot_dimension_numbers<[1], [0], [0], [1], [0, 0, 1, 1], [], []>} : vector<2x32xf32>, vector<32x128xf32>, vector<2x128xf32> -> vector<2x128xf32>
    %217 = arith.addf %215, %216 : vector<2x128xf32>
    %218 = vector.extract_strided_slice %217 {offsets = [0, 0], sizes = [2, 32], strides = [1, 1]} : vector<2x128xf32> to vector<2x32xf32>
    %219 = arith.negf %218 : vector<2x32xf32>
    %220 = math.exp %219 : vector<2x32xf32>
    %cst_45 = arith.constant 1.000000e+00 : f32
    %221 = vector.broadcast %cst_45 : f32 to vector<2x32xf32>
    %222 = arith.addf %221, %220 : vector<2x32xf32>
    %223 = arith.divf %221, %222 : vector<2x32xf32>
    %224 = vector.extract_strided_slice %217 {offsets = [0, 32], sizes = [2, 32], strides = [1, 1]} : vector<2x128xf32> to vector<2x32xf32>
    %225 = arith.negf %224 : vector<2x32xf32>
    %226 = math.exp %225 : vector<2x32xf32>
    %cst_46 = arith.constant 1.000000e+00 : f32
    %227 = vector.broadcast %cst_46 : f32 to vector<2x32xf32>
    %228 = arith.addf %227, %226 : vector<2x32xf32>
    %229 = arith.divf %227, %228 : vector<2x32xf32>
    %230 = vector.extract_strided_slice %217 {offsets = [0, 64], sizes = [2, 32], strides = [1, 1]} : vector<2x128xf32> to vector<2x32xf32>
    %231 = math.tanh %230 : vector<2x32xf32>
    %232 = vector.extract_strided_slice %217 {offsets = [0, 96], sizes = [2, 32], strides = [1, 1]} : vector<2x128xf32> to vector<2x32xf32>
    %233 = arith.negf %232 : vector<2x32xf32>
    %234 = math.exp %233 : vector<2x32xf32>
    %cst_47 = arith.constant 1.000000e+00 : f32
    %235 = vector.broadcast %cst_47 : f32 to vector<2x32xf32>
    %236 = arith.addf %235, %234 : vector<2x32xf32>
    %237 = arith.divf %235, %236 : vector<2x32xf32>
    %238 = arith.mulf %229, %184 : vector<2x32xf32>
    %239 = arith.mulf %223, %231 : vector<2x32xf32>
    %240 = arith.addf %238, %239 : vector<2x32xf32>
    %241 = math.tanh %240 : vector<2x32xf32>
    %242 = arith.mulf %237, %241 : vector<2x32xf32>
    %243 = vector.extract_strided_slice %12 {offsets = [8, 0], sizes = [2, 128], strides = [1, 1]} : vector<16x256xf32> to vector<2x128xf32>
    %cst_48 = arith.constant dense<0.000000e+00> : vector<2x128xf32>
    %244 = tpu.matmul %214, %13, %cst_48 {dimension_numbers = #tpu.dot_dimension_numbers<[1], [0], [0], [1], [0, 0, 1, 1], [], []>} : vector<2x32xf32>, vector<32x128xf32>, vector<2x128xf32> -> vector<2x128xf32>
    %245 = arith.addf %243, %244 : vector<2x128xf32>
    %246 = vector.extract_strided_slice %245 {offsets = [0, 0], sizes = [2, 32], strides = [1, 1]} : vector<2x128xf32> to vector<2x32xf32>
    %247 = arith.negf %246 : vector<2x32xf32>
    %248 = math.exp %247 : vector<2x32xf32>
    %cst_49 = arith.constant 1.000000e+00 : f32
    %249 = vector.broadcast %cst_49 : f32 to vector<2x32xf32>
    %250 = arith.addf %249, %248 : vector<2x32xf32>
    %251 = arith.divf %249, %250 : vector<2x32xf32>
    %252 = vector.extract_strided_slice %245 {offsets = [0, 32], sizes = [2, 32], strides = [1, 1]} : vector<2x128xf32> to vector<2x32xf32>
    %253 = arith.negf %252 : vector<2x32xf32>
    %254 = math.exp %253 : vector<2x32xf32>
    %cst_50 = arith.constant 1.000000e+00 : f32
    %255 = vector.broadcast %cst_50 : f32 to vector<2x32xf32>
    %256 = arith.addf %255, %254 : vector<2x32xf32>
    %257 = arith.divf %255, %256 : vector<2x32xf32>
    %258 = vector.extract_strided_slice %245 {offsets = [0, 64], sizes = [2, 32], strides = [1, 1]} : vector<2x128xf32> to vector<2x32xf32>
    %259 = math.tanh %258 : vector<2x32xf32>
    %260 = vector.extract_strided_slice %245 {offsets = [0, 96], sizes = [2, 32], strides = [1, 1]} : vector<2x128xf32> to vector<2x32xf32>
    %261 = arith.negf %260 : vector<2x32xf32>
    %262 = math.exp %261 : vector<2x32xf32>
    %cst_51 = arith.constant 1.000000e+00 : f32
    %263 = vector.broadcast %cst_51 : f32 to vector<2x32xf32>
    %264 = arith.addf %263, %262 : vector<2x32xf32>
    %265 = arith.divf %263, %264 : vector<2x32xf32>
    %266 = arith.mulf %257, %212 : vector<2x32xf32>
    %267 = arith.mulf %251, %259 : vector<2x32xf32>
    %268 = arith.addf %266, %267 : vector<2x32xf32>
    %269 = math.tanh %268 : vector<2x32xf32>
    %270 = arith.mulf %265, %269 : vector<2x32xf32>
    %271 = vector.extract_strided_slice %12 {offsets = [6, 128], sizes = [2, 128], strides = [1, 1]} : vector<16x256xf32> to vector<2x128xf32>
    %cst_52 = arith.constant dense<0.000000e+00> : vector<2x128xf32>
    %272 = tpu.matmul %242, %16, %cst_52 {dimension_numbers = #tpu.dot_dimension_numbers<[1], [0], [0], [1], [0, 0, 1, 1], [], []>} : vector<2x32xf32>, vector<32x128xf32>, vector<2x128xf32> -> vector<2x128xf32>
    %273 = arith.addf %271, %272 : vector<2x128xf32>
    %274 = vector.extract_strided_slice %273 {offsets = [0, 0], sizes = [2, 32], strides = [1, 1]} : vector<2x128xf32> to vector<2x32xf32>
    %275 = arith.negf %274 : vector<2x32xf32>
    %276 = math.exp %275 : vector<2x32xf32>
    %cst_53 = arith.constant 1.000000e+00 : f32
    %277 = vector.broadcast %cst_53 : f32 to vector<2x32xf32>
    %278 = arith.addf %277, %276 : vector<2x32xf32>
    %279 = arith.divf %277, %278 : vector<2x32xf32>
    %280 = vector.extract_strided_slice %273 {offsets = [0, 32], sizes = [2, 32], strides = [1, 1]} : vector<2x128xf32> to vector<2x32xf32>
    %281 = arith.negf %280 : vector<2x32xf32>
    %282 = math.exp %281 : vector<2x32xf32>
    %cst_54 = arith.constant 1.000000e+00 : f32
    %283 = vector.broadcast %cst_54 : f32 to vector<2x32xf32>
    %284 = arith.addf %283, %282 : vector<2x32xf32>
    %285 = arith.divf %283, %284 : vector<2x32xf32>
    %286 = vector.extract_strided_slice %273 {offsets = [0, 64], sizes = [2, 32], strides = [1, 1]} : vector<2x128xf32> to vector<2x32xf32>
    %287 = math.tanh %286 : vector<2x32xf32>
    %288 = vector.extract_strided_slice %273 {offsets = [0, 96], sizes = [2, 32], strides = [1, 1]} : vector<2x128xf32> to vector<2x32xf32>
    %289 = arith.negf %288 : vector<2x32xf32>
    %290 = math.exp %289 : vector<2x32xf32>
    %cst_55 = arith.constant 1.000000e+00 : f32
    %291 = vector.broadcast %cst_55 : f32 to vector<2x32xf32>
    %292 = arith.addf %291, %290 : vector<2x32xf32>
    %293 = arith.divf %291, %292 : vector<2x32xf32>
    %294 = arith.mulf %285, %240 : vector<2x32xf32>
    %295 = arith.mulf %279, %287 : vector<2x32xf32>
    %296 = arith.addf %294, %295 : vector<2x32xf32>
    %297 = math.tanh %296 : vector<2x32xf32>
    %298 = arith.mulf %293, %297 : vector<2x32xf32>
    %299 = vector.extract_strided_slice %12 {offsets = [10, 0], sizes = [2, 128], strides = [1, 1]} : vector<16x256xf32> to vector<2x128xf32>
    %cst_56 = arith.constant dense<0.000000e+00> : vector<2x128xf32>
    %300 = tpu.matmul %270, %13, %cst_56 {dimension_numbers = #tpu.dot_dimension_numbers<[1], [0], [0], [1], [0, 0, 1, 1], [], []>} : vector<2x32xf32>, vector<32x128xf32>, vector<2x128xf32> -> vector<2x128xf32>
    %301 = arith.addf %299, %300 : vector<2x128xf32>
    %302 = vector.extract_strided_slice %301 {offsets = [0, 0], sizes = [2, 32], strides = [1, 1]} : vector<2x128xf32> to vector<2x32xf32>
    %303 = arith.negf %302 : vector<2x32xf32>
    %304 = math.exp %303 : vector<2x32xf32>
    %cst_57 = arith.constant 1.000000e+00 : f32
    %305 = vector.broadcast %cst_57 : f32 to vector<2x32xf32>
    %306 = arith.addf %305, %304 : vector<2x32xf32>
    %307 = arith.divf %305, %306 : vector<2x32xf32>
    %308 = vector.extract_strided_slice %301 {offsets = [0, 32], sizes = [2, 32], strides = [1, 1]} : vector<2x128xf32> to vector<2x32xf32>
    %309 = arith.negf %308 : vector<2x32xf32>
    %310 = math.exp %309 : vector<2x32xf32>
    %cst_58 = arith.constant 1.000000e+00 : f32
    %311 = vector.broadcast %cst_58 : f32 to vector<2x32xf32>
    %312 = arith.addf %311, %310 : vector<2x32xf32>
    %313 = arith.divf %311, %312 : vector<2x32xf32>
    %314 = vector.extract_strided_slice %301 {offsets = [0, 64], sizes = [2, 32], strides = [1, 1]} : vector<2x128xf32> to vector<2x32xf32>
    %315 = math.tanh %314 : vector<2x32xf32>
    %316 = vector.extract_strided_slice %301 {offsets = [0, 96], sizes = [2, 32], strides = [1, 1]} : vector<2x128xf32> to vector<2x32xf32>
    %317 = arith.negf %316 : vector<2x32xf32>
    %318 = math.exp %317 : vector<2x32xf32>
    %cst_59 = arith.constant 1.000000e+00 : f32
    %319 = vector.broadcast %cst_59 : f32 to vector<2x32xf32>
    %320 = arith.addf %319, %318 : vector<2x32xf32>
    %321 = arith.divf %319, %320 : vector<2x32xf32>
    %322 = arith.mulf %313, %268 : vector<2x32xf32>
    %323 = arith.mulf %307, %315 : vector<2x32xf32>
    %324 = arith.addf %322, %323 : vector<2x32xf32>
    %325 = math.tanh %324 : vector<2x32xf32>
    %326 = arith.mulf %321, %325 : vector<2x32xf32>
    %327 = vector.extract_strided_slice %12 {offsets = [4, 128], sizes = [2, 128], strides = [1, 1]} : vector<16x256xf32> to vector<2x128xf32>
    %cst_60 = arith.constant dense<0.000000e+00> : vector<2x128xf32>
    %328 = tpu.matmul %298, %16, %cst_60 {dimension_numbers = #tpu.dot_dimension_numbers<[1], [0], [0], [1], [0, 0, 1, 1], [], []>} : vector<2x32xf32>, vector<32x128xf32>, vector<2x128xf32> -> vector<2x128xf32>
    %329 = arith.addf %327, %328 : vector<2x128xf32>
    %330 = vector.extract_strided_slice %329 {offsets = [0, 0], sizes = [2, 32], strides = [1, 1]} : vector<2x128xf32> to vector<2x32xf32>
    %331 = arith.negf %330 : vector<2x32xf32>
    %332 = math.exp %331 : vector<2x32xf32>
    %cst_61 = arith.constant 1.000000e+00 : f32
    %333 = vector.broadcast %cst_61 : f32 to vector<2x32xf32>
    %334 = arith.addf %333, %332 : vector<2x32xf32>
    %335 = arith.divf %333, %334 : vector<2x32xf32>
    %336 = vector.extract_strided_slice %329 {offsets = [0, 32], sizes = [2, 32], strides = [1, 1]} : vector<2x128xf32> to vector<2x32xf32>
    %337 = arith.negf %336 : vector<2x32xf32>
    %338 = math.exp %337 : vector<2x32xf32>
    %cst_62 = arith.constant 1.000000e+00 : f32
    %339 = vector.broadcast %cst_62 : f32 to vector<2x32xf32>
    %340 = arith.addf %339, %338 : vector<2x32xf32>
    %341 = arith.divf %339, %340 : vector<2x32xf32>
    %342 = vector.extract_strided_slice %329 {offsets = [0, 64], sizes = [2, 32], strides = [1, 1]} : vector<2x128xf32> to vector<2x32xf32>
    %343 = math.tanh %342 : vector<2x32xf32>
    %344 = vector.extract_strided_slice %329 {offsets = [0, 96], sizes = [2, 32], strides = [1, 1]} : vector<2x128xf32> to vector<2x32xf32>
    %345 = arith.negf %344 : vector<2x32xf32>
    %346 = math.exp %345 : vector<2x32xf32>
    %cst_63 = arith.constant 1.000000e+00 : f32
    %347 = vector.broadcast %cst_63 : f32 to vector<2x32xf32>
    %348 = arith.addf %347, %346 : vector<2x32xf32>
    %349 = arith.divf %347, %348 : vector<2x32xf32>
    %350 = arith.mulf %341, %296 : vector<2x32xf32>
    %351 = arith.mulf %335, %343 : vector<2x32xf32>
    %352 = arith.addf %350, %351 : vector<2x32xf32>
    %353 = math.tanh %352 : vector<2x32xf32>
    %354 = arith.mulf %349, %353 : vector<2x32xf32>
    %355 = vector.extract_strided_slice %12 {offsets = [12, 0], sizes = [2, 128], strides = [1, 1]} : vector<16x256xf32> to vector<2x128xf32>
    %cst_64 = arith.constant dense<0.000000e+00> : vector<2x128xf32>
    %356 = tpu.matmul %326, %13, %cst_64 {dimension_numbers = #tpu.dot_dimension_numbers<[1], [0], [0], [1], [0, 0, 1, 1], [], []>} : vector<2x32xf32>, vector<32x128xf32>, vector<2x128xf32> -> vector<2x128xf32>
    %357 = arith.addf %355, %356 : vector<2x128xf32>
    %358 = vector.extract_strided_slice %357 {offsets = [0, 0], sizes = [2, 32], strides = [1, 1]} : vector<2x128xf32> to vector<2x32xf32>
    %359 = arith.negf %358 : vector<2x32xf32>
    %360 = math.exp %359 : vector<2x32xf32>
    %cst_65 = arith.constant 1.000000e+00 : f32
    %361 = vector.broadcast %cst_65 : f32 to vector<2x32xf32>
    %362 = arith.addf %361, %360 : vector<2x32xf32>
    %363 = arith.divf %361, %362 : vector<2x32xf32>
    %364 = vector.extract_strided_slice %357 {offsets = [0, 32], sizes = [2, 32], strides = [1, 1]} : vector<2x128xf32> to vector<2x32xf32>
    %365 = arith.negf %364 : vector<2x32xf32>
    %366 = math.exp %365 : vector<2x32xf32>
    %cst_66 = arith.constant 1.000000e+00 : f32
    %367 = vector.broadcast %cst_66 : f32 to vector<2x32xf32>
    %368 = arith.addf %367, %366 : vector<2x32xf32>
    %369 = arith.divf %367, %368 : vector<2x32xf32>
    %370 = vector.extract_strided_slice %357 {offsets = [0, 64], sizes = [2, 32], strides = [1, 1]} : vector<2x128xf32> to vector<2x32xf32>
    %371 = math.tanh %370 : vector<2x32xf32>
    %372 = vector.extract_strided_slice %357 {offsets = [0, 96], sizes = [2, 32], strides = [1, 1]} : vector<2x128xf32> to vector<2x32xf32>
    %373 = arith.negf %372 : vector<2x32xf32>
    %374 = math.exp %373 : vector<2x32xf32>
    %cst_67 = arith.constant 1.000000e+00 : f32
    %375 = vector.broadcast %cst_67 : f32 to vector<2x32xf32>
    %376 = arith.addf %375, %374 : vector<2x32xf32>
    %377 = arith.divf %375, %376 : vector<2x32xf32>
    %378 = arith.mulf %369, %324 : vector<2x32xf32>
    %379 = arith.mulf %363, %371 : vector<2x32xf32>
    %380 = arith.addf %378, %379 : vector<2x32xf32>
    %381 = math.tanh %380 : vector<2x32xf32>
    %382 = arith.mulf %377, %381 : vector<2x32xf32>
    %383 = vector.extract_strided_slice %12 {offsets = [2, 128], sizes = [2, 128], strides = [1, 1]} : vector<16x256xf32> to vector<2x128xf32>
    %cst_68 = arith.constant dense<0.000000e+00> : vector<2x128xf32>
    %384 = tpu.matmul %354, %16, %cst_68 {dimension_numbers = #tpu.dot_dimension_numbers<[1], [0], [0], [1], [0, 0, 1, 1], [], []>} : vector<2x32xf32>, vector<32x128xf32>, vector<2x128xf32> -> vector<2x128xf32>
    %385 = arith.addf %383, %384 : vector<2x128xf32>
    %386 = vector.extract_strided_slice %385 {offsets = [0, 0], sizes = [2, 32], strides = [1, 1]} : vector<2x128xf32> to vector<2x32xf32>
    %387 = arith.negf %386 : vector<2x32xf32>
    %388 = math.exp %387 : vector<2x32xf32>
    %cst_69 = arith.constant 1.000000e+00 : f32
    %389 = vector.broadcast %cst_69 : f32 to vector<2x32xf32>
    %390 = arith.addf %389, %388 : vector<2x32xf32>
    %391 = arith.divf %389, %390 : vector<2x32xf32>
    %392 = vector.extract_strided_slice %385 {offsets = [0, 32], sizes = [2, 32], strides = [1, 1]} : vector<2x128xf32> to vector<2x32xf32>
    %393 = arith.negf %392 : vector<2x32xf32>
    %394 = math.exp %393 : vector<2x32xf32>
    %cst_70 = arith.constant 1.000000e+00 : f32
    %395 = vector.broadcast %cst_70 : f32 to vector<2x32xf32>
    %396 = arith.addf %395, %394 : vector<2x32xf32>
    %397 = arith.divf %395, %396 : vector<2x32xf32>
    %398 = vector.extract_strided_slice %385 {offsets = [0, 64], sizes = [2, 32], strides = [1, 1]} : vector<2x128xf32> to vector<2x32xf32>
    %399 = math.tanh %398 : vector<2x32xf32>
    %400 = vector.extract_strided_slice %385 {offsets = [0, 96], sizes = [2, 32], strides = [1, 1]} : vector<2x128xf32> to vector<2x32xf32>
    %401 = arith.negf %400 : vector<2x32xf32>
    %402 = math.exp %401 : vector<2x32xf32>
    %cst_71 = arith.constant 1.000000e+00 : f32
    %403 = vector.broadcast %cst_71 : f32 to vector<2x32xf32>
    %404 = arith.addf %403, %402 : vector<2x32xf32>
    %405 = arith.divf %403, %404 : vector<2x32xf32>
    %406 = arith.mulf %397, %352 : vector<2x32xf32>
    %407 = arith.mulf %391, %399 : vector<2x32xf32>
    %408 = arith.addf %406, %407 : vector<2x32xf32>
    %409 = math.tanh %408 : vector<2x32xf32>
    %410 = arith.mulf %405, %409 : vector<2x32xf32>
    %411 = vector.extract_strided_slice %12 {offsets = [14, 0], sizes = [2, 128], strides = [1, 1]} : vector<16x256xf32> to vector<2x128xf32>
    %cst_72 = arith.constant dense<0.000000e+00> : vector<2x128xf32>
    %412 = tpu.matmul %382, %13, %cst_72 {dimension_numbers = #tpu.dot_dimension_numbers<[1], [0], [0], [1], [0, 0, 1, 1], [], []>} : vector<2x32xf32>, vector<32x128xf32>, vector<2x128xf32> -> vector<2x128xf32>
    %413 = arith.addf %411, %412 : vector<2x128xf32>
    %414 = vector.extract_strided_slice %413 {offsets = [0, 0], sizes = [2, 32], strides = [1, 1]} : vector<2x128xf32> to vector<2x32xf32>
    %415 = arith.negf %414 : vector<2x32xf32>
    %416 = math.exp %415 : vector<2x32xf32>
    %cst_73 = arith.constant 1.000000e+00 : f32
    %417 = vector.broadcast %cst_73 : f32 to vector<2x32xf32>
    %418 = arith.addf %417, %416 : vector<2x32xf32>
    %419 = arith.divf %417, %418 : vector<2x32xf32>
    %420 = vector.extract_strided_slice %413 {offsets = [0, 32], sizes = [2, 32], strides = [1, 1]} : vector<2x128xf32> to vector<2x32xf32>
    %421 = arith.negf %420 : vector<2x32xf32>
    %422 = math.exp %421 : vector<2x32xf32>
    %cst_74 = arith.constant 1.000000e+00 : f32
    %423 = vector.broadcast %cst_74 : f32 to vector<2x32xf32>
    %424 = arith.addf %423, %422 : vector<2x32xf32>
    %425 = arith.divf %423, %424 : vector<2x32xf32>
    %426 = vector.extract_strided_slice %413 {offsets = [0, 64], sizes = [2, 32], strides = [1, 1]} : vector<2x128xf32> to vector<2x32xf32>
    %427 = math.tanh %426 : vector<2x32xf32>
    %428 = vector.extract_strided_slice %413 {offsets = [0, 96], sizes = [2, 32], strides = [1, 1]} : vector<2x128xf32> to vector<2x32xf32>
    %429 = arith.negf %428 : vector<2x32xf32>
    %430 = math.exp %429 : vector<2x32xf32>
    %cst_75 = arith.constant 1.000000e+00 : f32
    %431 = vector.broadcast %cst_75 : f32 to vector<2x32xf32>
    %432 = arith.addf %431, %430 : vector<2x32xf32>
    %433 = arith.divf %431, %432 : vector<2x32xf32>
    %434 = arith.mulf %425, %380 : vector<2x32xf32>
    %435 = arith.mulf %419, %427 : vector<2x32xf32>
    %436 = arith.addf %434, %435 : vector<2x32xf32>
    %437 = math.tanh %436 : vector<2x32xf32>
    %438 = arith.mulf %433, %437 : vector<2x32xf32>
    %439 = vector.extract_strided_slice %12 {offsets = [0, 128], sizes = [2, 128], strides = [1, 1]} : vector<16x256xf32> to vector<2x128xf32>
    %cst_76 = arith.constant dense<0.000000e+00> : vector<2x128xf32>
    %440 = tpu.matmul %410, %16, %cst_76 {dimension_numbers = #tpu.dot_dimension_numbers<[1], [0], [0], [1], [0, 0, 1, 1], [], []>} : vector<2x32xf32>, vector<32x128xf32>, vector<2x128xf32> -> vector<2x128xf32>
    %441 = arith.addf %439, %440 : vector<2x128xf32>
    %442 = vector.extract_strided_slice %441 {offsets = [0, 0], sizes = [2, 32], strides = [1, 1]} : vector<2x128xf32> to vector<2x32xf32>
    %443 = arith.negf %442 : vector<2x32xf32>
    %444 = math.exp %443 : vector<2x32xf32>
    %cst_77 = arith.constant 1.000000e+00 : f32
    %445 = vector.broadcast %cst_77 : f32 to vector<2x32xf32>
    %446 = arith.addf %445, %444 : vector<2x32xf32>
    %447 = arith.divf %445, %446 : vector<2x32xf32>
    %448 = vector.extract_strided_slice %441 {offsets = [0, 32], sizes = [2, 32], strides = [1, 1]} : vector<2x128xf32> to vector<2x32xf32>
    %449 = arith.negf %448 : vector<2x32xf32>
    %450 = math.exp %449 : vector<2x32xf32>
    %cst_78 = arith.constant 1.000000e+00 : f32
    %451 = vector.broadcast %cst_78 : f32 to vector<2x32xf32>
    %452 = arith.addf %451, %450 : vector<2x32xf32>
    %453 = arith.divf %451, %452 : vector<2x32xf32>
    %454 = vector.extract_strided_slice %441 {offsets = [0, 64], sizes = [2, 32], strides = [1, 1]} : vector<2x128xf32> to vector<2x32xf32>
    %455 = math.tanh %454 : vector<2x32xf32>
    %456 = vector.extract_strided_slice %441 {offsets = [0, 96], sizes = [2, 32], strides = [1, 1]} : vector<2x128xf32> to vector<2x32xf32>
    %457 = arith.negf %456 : vector<2x32xf32>
    %458 = math.exp %457 : vector<2x32xf32>
    %cst_79 = arith.constant 1.000000e+00 : f32
    %459 = vector.broadcast %cst_79 : f32 to vector<2x32xf32>
    %460 = arith.addf %459, %458 : vector<2x32xf32>
    %461 = arith.divf %459, %460 : vector<2x32xf32>
    %462 = arith.mulf %453, %408 : vector<2x32xf32>
    %463 = arith.mulf %447, %455 : vector<2x32xf32>
    %464 = arith.addf %462, %463 : vector<2x32xf32>
    %465 = math.tanh %464 : vector<2x32xf32>
    %466 = arith.mulf %461, %465 : vector<2x32xf32>
    %467 = tpu.concatenate %46, %102, %158, %214, %270, %326, %382, %438 in 0 : vector<2x32xf32>, vector<2x32xf32>, vector<2x32xf32>, vector<2x32xf32>, vector<2x32xf32>, vector<2x32xf32>, vector<2x32xf32>, vector<2x32xf32> -> vector<16x32xf32>
    %468 = tpu.concatenate %466, %410, %354, %298, %242, %186, %130, %74 in 0 : vector<2x32xf32>, vector<2x32xf32>, vector<2x32xf32>, vector<2x32xf32>, vector<2x32xf32>, vector<2x32xf32>, vector<2x32xf32>, vector<2x32xf32> -> vector<16x32xf32>
    %469 = tpu.concatenate %467, %468 in 1 : vector<16x32xf32>, vector<16x32xf32> -> vector<16x64xf32>
    %c0_80 = arith.constant 0 : index
    %c0_81 = arith.constant 0 : index
    %470 = vector.load %arg6[%c0_80, %c0_81] : memref<64x256xf32, #tpu.memory_space<vmem>>, vector<64x256xf32>
    %cst_82 = arith.constant dense<0.000000e+00> : vector<16x256xf32>
    %471 = tpu.matmul %469, %470, %cst_82 {dimension_numbers = #tpu.dot_dimension_numbers<[1], [0], [0], [1], [0, 0, 1, 1], [], []>} : vector<16x64xf32>, vector<64x256xf32>, vector<16x256xf32> -> vector<16x256xf32>
    %c0_83 = arith.constant 0 : index
    %c0_84 = arith.constant 0 : index
    %472 = vector.load %arg7[%c0_83, %c0_84] : memref<1x256xf32, #tpu.memory_space<vmem>>, vector<1x256xf32>
    %473 = vector.broadcast %472 : vector<1x256xf32> to vector<16x256xf32>
    %474 = arith.addf %471, %473 : vector<16x256xf32>
    %c0_85 = arith.constant 0 : index
    %c0_86 = arith.constant 0 : index
    %475 = vector.load %arg8[%c0_85, %c0_86] : memref<32x128xf32, #tpu.memory_space<vmem>>, vector<32x128xf32>
    %cst_87 = arith.constant 0.000000e+00 : f32
    %476 = vector.broadcast %cst_87 : f32 to vector<2x32xf32>
    %cst_88 = arith.constant 0.000000e+00 : f32
    %477 = vector.broadcast %cst_88 : f32 to vector<2x32xf32>
    %c0_89 = arith.constant 0 : index
    %c0_90 = arith.constant 0 : index
    %478 = vector.load %arg9[%c0_89, %c0_90] : memref<32x128xf32, #tpu.memory_space<vmem>>, vector<32x128xf32>
    %cst_91 = arith.constant 0.000000e+00 : f32
    %479 = vector.broadcast %cst_91 : f32 to vector<2x32xf32>
    %cst_92 = arith.constant 0.000000e+00 : f32
    %480 = vector.broadcast %cst_92 : f32 to vector<2x32xf32>
    %481 = vector.extract_strided_slice %474 {offsets = [0, 0], sizes = [2, 128], strides = [1, 1]} : vector<16x256xf32> to vector<2x128xf32>
    %cst_93 = arith.constant dense<0.000000e+00> : vector<2x128xf32>
    %482 = tpu.matmul %476, %475, %cst_93 {dimension_numbers = #tpu.dot_dimension_numbers<[1], [0], [0], [1], [0, 0, 1, 1], [], []>} : vector<2x32xf32>, vector<32x128xf32>, vector<2x128xf32> -> vector<2x128xf32>
    %483 = arith.addf %481, %482 : vector<2x128xf32>
    %484 = vector.extract_strided_slice %483 {offsets = [0, 0], sizes = [2, 32], strides = [1, 1]} : vector<2x128xf32> to vector<2x32xf32>
    %485 = arith.negf %484 : vector<2x32xf32>
    %486 = math.exp %485 : vector<2x32xf32>
    %cst_94 = arith.constant 1.000000e+00 : f32
    %487 = vector.broadcast %cst_94 : f32 to vector<2x32xf32>
    %488 = arith.addf %487, %486 : vector<2x32xf32>
    %489 = arith.divf %487, %488 : vector<2x32xf32>
    %490 = vector.extract_strided_slice %483 {offsets = [0, 32], sizes = [2, 32], strides = [1, 1]} : vector<2x128xf32> to vector<2x32xf32>
    %491 = arith.negf %490 : vector<2x32xf32>
    %492 = math.exp %491 : vector<2x32xf32>
    %cst_95 = arith.constant 1.000000e+00 : f32
    %493 = vector.broadcast %cst_95 : f32 to vector<2x32xf32>
    %494 = arith.addf %493, %492 : vector<2x32xf32>
    %495 = arith.divf %493, %494 : vector<2x32xf32>
    %496 = vector.extract_strided_slice %483 {offsets = [0, 64], sizes = [2, 32], strides = [1, 1]} : vector<2x128xf32> to vector<2x32xf32>
    %497 = math.tanh %496 : vector<2x32xf32>
    %498 = vector.extract_strided_slice %483 {offsets = [0, 96], sizes = [2, 32], strides = [1, 1]} : vector<2x128xf32> to vector<2x32xf32>
    %499 = arith.negf %498 : vector<2x32xf32>
    %500 = math.exp %499 : vector<2x32xf32>
    %cst_96 = arith.constant 1.000000e+00 : f32
    %501 = vector.broadcast %cst_96 : f32 to vector<2x32xf32>
    %502 = arith.addf %501, %500 : vector<2x32xf32>
    %503 = arith.divf %501, %502 : vector<2x32xf32>
    %504 = arith.mulf %495, %477 : vector<2x32xf32>
    %505 = arith.mulf %489, %497 : vector<2x32xf32>
    %506 = arith.addf %504, %505 : vector<2x32xf32>
    %507 = math.tanh %506 : vector<2x32xf32>
    %508 = arith.mulf %503, %507 : vector<2x32xf32>
    %509 = vector.extract_strided_slice %474 {offsets = [14, 128], sizes = [2, 128], strides = [1, 1]} : vector<16x256xf32> to vector<2x128xf32>
    %cst_97 = arith.constant dense<0.000000e+00> : vector<2x128xf32>
    %510 = tpu.matmul %479, %478, %cst_97 {dimension_numbers = #tpu.dot_dimension_numbers<[1], [0], [0], [1], [0, 0, 1, 1], [], []>} : vector<2x32xf32>, vector<32x128xf32>, vector<2x128xf32> -> vector<2x128xf32>
    %511 = arith.addf %509, %510 : vector<2x128xf32>
    %512 = vector.extract_strided_slice %511 {offsets = [0, 0], sizes = [2, 32], strides = [1, 1]} : vector<2x128xf32> to vector<2x32xf32>
    %513 = arith.negf %512 : vector<2x32xf32>
    %514 = math.exp %513 : vector<2x32xf32>
    %cst_98 = arith.constant 1.000000e+00 : f32
    %515 = vector.broadcast %cst_98 : f32 to vector<2x32xf32>
    %516 = arith.addf %515, %514 : vector<2x32xf32>
    %517 = arith.divf %515, %516 : vector<2x32xf32>
    %518 = vector.extract_strided_slice %511 {offsets = [0, 32], sizes = [2, 32], strides = [1, 1]} : vector<2x128xf32> to vector<2x32xf32>
    %519 = arith.negf %518 : vector<2x32xf32>
    %520 = math.exp %519 : vector<2x32xf32>
    %cst_99 = arith.constant 1.000000e+00 : f32
    %521 = vector.broadcast %cst_99 : f32 to vector<2x32xf32>
    %522 = arith.addf %521, %520 : vector<2x32xf32>
    %523 = arith.divf %521, %522 : vector<2x32xf32>
    %524 = vector.extract_strided_slice %511 {offsets = [0, 64], sizes = [2, 32], strides = [1, 1]} : vector<2x128xf32> to vector<2x32xf32>
    %525 = math.tanh %524 : vector<2x32xf32>
    %526 = vector.extract_strided_slice %511 {offsets = [0, 96], sizes = [2, 32], strides = [1, 1]} : vector<2x128xf32> to vector<2x32xf32>
    %527 = arith.negf %526 : vector<2x32xf32>
    %528 = math.exp %527 : vector<2x32xf32>
    %cst_100 = arith.constant 1.000000e+00 : f32
    %529 = vector.broadcast %cst_100 : f32 to vector<2x32xf32>
    %530 = arith.addf %529, %528 : vector<2x32xf32>
    %531 = arith.divf %529, %530 : vector<2x32xf32>
    %532 = arith.mulf %523, %480 : vector<2x32xf32>
    %533 = arith.mulf %517, %525 : vector<2x32xf32>
    %534 = arith.addf %532, %533 : vector<2x32xf32>
    %535 = math.tanh %534 : vector<2x32xf32>
    %536 = arith.mulf %531, %535 : vector<2x32xf32>
    %537 = vector.extract_strided_slice %474 {offsets = [2, 0], sizes = [2, 128], strides = [1, 1]} : vector<16x256xf32> to vector<2x128xf32>
    %cst_101 = arith.constant dense<0.000000e+00> : vector<2x128xf32>
    %538 = tpu.matmul %508, %475, %cst_101 {dimension_numbers = #tpu.dot_dimension_numbers<[1], [0], [0], [1], [0, 0, 1, 1], [], []>} : vector<2x32xf32>, vector<32x128xf32>, vector<2x128xf32> -> vector<2x128xf32>
    %539 = arith.addf %537, %538 : vector<2x128xf32>
    %540 = vector.extract_strided_slice %539 {offsets = [0, 0], sizes = [2, 32], strides = [1, 1]} : vector<2x128xf32> to vector<2x32xf32>
    %541 = arith.negf %540 : vector<2x32xf32>
    %542 = math.exp %541 : vector<2x32xf32>
    %cst_102 = arith.constant 1.000000e+00 : f32
    %543 = vector.broadcast %cst_102 : f32 to vector<2x32xf32>
    %544 = arith.addf %543, %542 : vector<2x32xf32>
    %545 = arith.divf %543, %544 : vector<2x32xf32>
    %546 = vector.extract_strided_slice %539 {offsets = [0, 32], sizes = [2, 32], strides = [1, 1]} : vector<2x128xf32> to vector<2x32xf32>
    %547 = arith.negf %546 : vector<2x32xf32>
    %548 = math.exp %547 : vector<2x32xf32>
    %cst_103 = arith.constant 1.000000e+00 : f32
    %549 = vector.broadcast %cst_103 : f32 to vector<2x32xf32>
    %550 = arith.addf %549, %548 : vector<2x32xf32>
    %551 = arith.divf %549, %550 : vector<2x32xf32>
    %552 = vector.extract_strided_slice %539 {offsets = [0, 64], sizes = [2, 32], strides = [1, 1]} : vector<2x128xf32> to vector<2x32xf32>
    %553 = math.tanh %552 : vector<2x32xf32>
    %554 = vector.extract_strided_slice %539 {offsets = [0, 96], sizes = [2, 32], strides = [1, 1]} : vector<2x128xf32> to vector<2x32xf32>
    %555 = arith.negf %554 : vector<2x32xf32>
    %556 = math.exp %555 : vector<2x32xf32>
    %cst_104 = arith.constant 1.000000e+00 : f32
    %557 = vector.broadcast %cst_104 : f32 to vector<2x32xf32>
    %558 = arith.addf %557, %556 : vector<2x32xf32>
    %559 = arith.divf %557, %558 : vector<2x32xf32>
    %560 = arith.mulf %551, %506 : vector<2x32xf32>
    %561 = arith.mulf %545, %553 : vector<2x32xf32>
    %562 = arith.addf %560, %561 : vector<2x32xf32>
    %563 = math.tanh %562 : vector<2x32xf32>
    %564 = arith.mulf %559, %563 : vector<2x32xf32>
    %565 = vector.extract_strided_slice %474 {offsets = [12, 128], sizes = [2, 128], strides = [1, 1]} : vector<16x256xf32> to vector<2x128xf32>
    %cst_105 = arith.constant dense<0.000000e+00> : vector<2x128xf32>
    %566 = tpu.matmul %536, %478, %cst_105 {dimension_numbers = #tpu.dot_dimension_numbers<[1], [0], [0], [1], [0, 0, 1, 1], [], []>} : vector<2x32xf32>, vector<32x128xf32>, vector<2x128xf32> -> vector<2x128xf32>
    %567 = arith.addf %565, %566 : vector<2x128xf32>
    %568 = vector.extract_strided_slice %567 {offsets = [0, 0], sizes = [2, 32], strides = [1, 1]} : vector<2x128xf32> to vector<2x32xf32>
    %569 = arith.negf %568 : vector<2x32xf32>
    %570 = math.exp %569 : vector<2x32xf32>
    %cst_106 = arith.constant 1.000000e+00 : f32
    %571 = vector.broadcast %cst_106 : f32 to vector<2x32xf32>
    %572 = arith.addf %571, %570 : vector<2x32xf32>
    %573 = arith.divf %571, %572 : vector<2x32xf32>
    %574 = vector.extract_strided_slice %567 {offsets = [0, 32], sizes = [2, 32], strides = [1, 1]} : vector<2x128xf32> to vector<2x32xf32>
    %575 = arith.negf %574 : vector<2x32xf32>
    %576 = math.exp %575 : vector<2x32xf32>
    %cst_107 = arith.constant 1.000000e+00 : f32
    %577 = vector.broadcast %cst_107 : f32 to vector<2x32xf32>
    %578 = arith.addf %577, %576 : vector<2x32xf32>
    %579 = arith.divf %577, %578 : vector<2x32xf32>
    %580 = vector.extract_strided_slice %567 {offsets = [0, 64], sizes = [2, 32], strides = [1, 1]} : vector<2x128xf32> to vector<2x32xf32>
    %581 = math.tanh %580 : vector<2x32xf32>
    %582 = vector.extract_strided_slice %567 {offsets = [0, 96], sizes = [2, 32], strides = [1, 1]} : vector<2x128xf32> to vector<2x32xf32>
    %583 = arith.negf %582 : vector<2x32xf32>
    %584 = math.exp %583 : vector<2x32xf32>
    %cst_108 = arith.constant 1.000000e+00 : f32
    %585 = vector.broadcast %cst_108 : f32 to vector<2x32xf32>
    %586 = arith.addf %585, %584 : vector<2x32xf32>
    %587 = arith.divf %585, %586 : vector<2x32xf32>
    %588 = arith.mulf %579, %534 : vector<2x32xf32>
    %589 = arith.mulf %573, %581 : vector<2x32xf32>
    %590 = arith.addf %588, %589 : vector<2x32xf32>
    %591 = math.tanh %590 : vector<2x32xf32>
    %592 = arith.mulf %587, %591 : vector<2x32xf32>
    %593 = vector.extract_strided_slice %474 {offsets = [4, 0], sizes = [2, 128], strides = [1, 1]} : vector<16x256xf32> to vector<2x128xf32>
    %cst_109 = arith.constant dense<0.000000e+00> : vector<2x128xf32>
    %594 = tpu.matmul %564, %475, %cst_109 {dimension_numbers = #tpu.dot_dimension_numbers<[1], [0], [0], [1], [0, 0, 1, 1], [], []>} : vector<2x32xf32>, vector<32x128xf32>, vector<2x128xf32> -> vector<2x128xf32>
    %595 = arith.addf %593, %594 : vector<2x128xf32>
    %596 = vector.extract_strided_slice %595 {offsets = [0, 0], sizes = [2, 32], strides = [1, 1]} : vector<2x128xf32> to vector<2x32xf32>
    %597 = arith.negf %596 : vector<2x32xf32>
    %598 = math.exp %597 : vector<2x32xf32>
    %cst_110 = arith.constant 1.000000e+00 : f32
    %599 = vector.broadcast %cst_110 : f32 to vector<2x32xf32>
    %600 = arith.addf %599, %598 : vector<2x32xf32>
    %601 = arith.divf %599, %600 : vector<2x32xf32>
    %602 = vector.extract_strided_slice %595 {offsets = [0, 32], sizes = [2, 32], strides = [1, 1]} : vector<2x128xf32> to vector<2x32xf32>
    %603 = arith.negf %602 : vector<2x32xf32>
    %604 = math.exp %603 : vector<2x32xf32>
    %cst_111 = arith.constant 1.000000e+00 : f32
    %605 = vector.broadcast %cst_111 : f32 to vector<2x32xf32>
    %606 = arith.addf %605, %604 : vector<2x32xf32>
    %607 = arith.divf %605, %606 : vector<2x32xf32>
    %608 = vector.extract_strided_slice %595 {offsets = [0, 64], sizes = [2, 32], strides = [1, 1]} : vector<2x128xf32> to vector<2x32xf32>
    %609 = math.tanh %608 : vector<2x32xf32>
    %610 = vector.extract_strided_slice %595 {offsets = [0, 96], sizes = [2, 32], strides = [1, 1]} : vector<2x128xf32> to vector<2x32xf32>
    %611 = arith.negf %610 : vector<2x32xf32>
    %612 = math.exp %611 : vector<2x32xf32>
    %cst_112 = arith.constant 1.000000e+00 : f32
    %613 = vector.broadcast %cst_112 : f32 to vector<2x32xf32>
    %614 = arith.addf %613, %612 : vector<2x32xf32>
    %615 = arith.divf %613, %614 : vector<2x32xf32>
    %616 = arith.mulf %607, %562 : vector<2x32xf32>
    %617 = arith.mulf %601, %609 : vector<2x32xf32>
    %618 = arith.addf %616, %617 : vector<2x32xf32>
    %619 = math.tanh %618 : vector<2x32xf32>
    %620 = arith.mulf %615, %619 : vector<2x32xf32>
    %621 = vector.extract_strided_slice %474 {offsets = [10, 128], sizes = [2, 128], strides = [1, 1]} : vector<16x256xf32> to vector<2x128xf32>
    %cst_113 = arith.constant dense<0.000000e+00> : vector<2x128xf32>
    %622 = tpu.matmul %592, %478, %cst_113 {dimension_numbers = #tpu.dot_dimension_numbers<[1], [0], [0], [1], [0, 0, 1, 1], [], []>} : vector<2x32xf32>, vector<32x128xf32>, vector<2x128xf32> -> vector<2x128xf32>
    %623 = arith.addf %621, %622 : vector<2x128xf32>
    %624 = vector.extract_strided_slice %623 {offsets = [0, 0], sizes = [2, 32], strides = [1, 1]} : vector<2x128xf32> to vector<2x32xf32>
    %625 = arith.negf %624 : vector<2x32xf32>
    %626 = math.exp %625 : vector<2x32xf32>
    %cst_114 = arith.constant 1.000000e+00 : f32
    %627 = vector.broadcast %cst_114 : f32 to vector<2x32xf32>
    %628 = arith.addf %627, %626 : vector<2x32xf32>
    %629 = arith.divf %627, %628 : vector<2x32xf32>
    %630 = vector.extract_strided_slice %623 {offsets = [0, 32], sizes = [2, 32], strides = [1, 1]} : vector<2x128xf32> to vector<2x32xf32>
    %631 = arith.negf %630 : vector<2x32xf32>
    %632 = math.exp %631 : vector<2x32xf32>
    %cst_115 = arith.constant 1.000000e+00 : f32
    %633 = vector.broadcast %cst_115 : f32 to vector<2x32xf32>
    %634 = arith.addf %633, %632 : vector<2x32xf32>
    %635 = arith.divf %633, %634 : vector<2x32xf32>
    %636 = vector.extract_strided_slice %623 {offsets = [0, 64], sizes = [2, 32], strides = [1, 1]} : vector<2x128xf32> to vector<2x32xf32>
    %637 = math.tanh %636 : vector<2x32xf32>
    %638 = vector.extract_strided_slice %623 {offsets = [0, 96], sizes = [2, 32], strides = [1, 1]} : vector<2x128xf32> to vector<2x32xf32>
    %639 = arith.negf %638 : vector<2x32xf32>
    %640 = math.exp %639 : vector<2x32xf32>
    %cst_116 = arith.constant 1.000000e+00 : f32
    %641 = vector.broadcast %cst_116 : f32 to vector<2x32xf32>
    %642 = arith.addf %641, %640 : vector<2x32xf32>
    %643 = arith.divf %641, %642 : vector<2x32xf32>
    %644 = arith.mulf %635, %590 : vector<2x32xf32>
    %645 = arith.mulf %629, %637 : vector<2x32xf32>
    %646 = arith.addf %644, %645 : vector<2x32xf32>
    %647 = math.tanh %646 : vector<2x32xf32>
    %648 = arith.mulf %643, %647 : vector<2x32xf32>
    %649 = vector.extract_strided_slice %474 {offsets = [6, 0], sizes = [2, 128], strides = [1, 1]} : vector<16x256xf32> to vector<2x128xf32>
    %cst_117 = arith.constant dense<0.000000e+00> : vector<2x128xf32>
    %650 = tpu.matmul %620, %475, %cst_117 {dimension_numbers = #tpu.dot_dimension_numbers<[1], [0], [0], [1], [0, 0, 1, 1], [], []>} : vector<2x32xf32>, vector<32x128xf32>, vector<2x128xf32> -> vector<2x128xf32>
    %651 = arith.addf %649, %650 : vector<2x128xf32>
    %652 = vector.extract_strided_slice %651 {offsets = [0, 0], sizes = [2, 32], strides = [1, 1]} : vector<2x128xf32> to vector<2x32xf32>
    %653 = arith.negf %652 : vector<2x32xf32>
    %654 = math.exp %653 : vector<2x32xf32>
    %cst_118 = arith.constant 1.000000e+00 : f32
    %655 = vector.broadcast %cst_118 : f32 to vector<2x32xf32>
    %656 = arith.addf %655, %654 : vector<2x32xf32>
    %657 = arith.divf %655, %656 : vector<2x32xf32>
    %658 = vector.extract_strided_slice %651 {offsets = [0, 32], sizes = [2, 32], strides = [1, 1]} : vector<2x128xf32> to vector<2x32xf32>
    %659 = arith.negf %658 : vector<2x32xf32>
    %660 = math.exp %659 : vector<2x32xf32>
    %cst_119 = arith.constant 1.000000e+00 : f32
    %661 = vector.broadcast %cst_119 : f32 to vector<2x32xf32>
    %662 = arith.addf %661, %660 : vector<2x32xf32>
    %663 = arith.divf %661, %662 : vector<2x32xf32>
    %664 = vector.extract_strided_slice %651 {offsets = [0, 64], sizes = [2, 32], strides = [1, 1]} : vector<2x128xf32> to vector<2x32xf32>
    %665 = math.tanh %664 : vector<2x32xf32>
    %666 = vector.extract_strided_slice %651 {offsets = [0, 96], sizes = [2, 32], strides = [1, 1]} : vector<2x128xf32> to vector<2x32xf32>
    %667 = arith.negf %666 : vector<2x32xf32>
    %668 = math.exp %667 : vector<2x32xf32>
    %cst_120 = arith.constant 1.000000e+00 : f32
    %669 = vector.broadcast %cst_120 : f32 to vector<2x32xf32>
    %670 = arith.addf %669, %668 : vector<2x32xf32>
    %671 = arith.divf %669, %670 : vector<2x32xf32>
    %672 = arith.mulf %663, %618 : vector<2x32xf32>
    %673 = arith.mulf %657, %665 : vector<2x32xf32>
    %674 = arith.addf %672, %673 : vector<2x32xf32>
    %675 = math.tanh %674 : vector<2x32xf32>
    %676 = arith.mulf %671, %675 : vector<2x32xf32>
    %677 = vector.extract_strided_slice %474 {offsets = [8, 128], sizes = [2, 128], strides = [1, 1]} : vector<16x256xf32> to vector<2x128xf32>
    %cst_121 = arith.constant dense<0.000000e+00> : vector<2x128xf32>
    %678 = tpu.matmul %648, %478, %cst_121 {dimension_numbers = #tpu.dot_dimension_numbers<[1], [0], [0], [1], [0, 0, 1, 1], [], []>} : vector<2x32xf32>, vector<32x128xf32>, vector<2x128xf32> -> vector<2x128xf32>
    %679 = arith.addf %677, %678 : vector<2x128xf32>
    %680 = vector.extract_strided_slice %679 {offsets = [0, 0], sizes = [2, 32], strides = [1, 1]} : vector<2x128xf32> to vector<2x32xf32>
    %681 = arith.negf %680 : vector<2x32xf32>
    %682 = math.exp %681 : vector<2x32xf32>
    %cst_122 = arith.constant 1.000000e+00 : f32
    %683 = vector.broadcast %cst_122 : f32 to vector<2x32xf32>
    %684 = arith.addf %683, %682 : vector<2x32xf32>
    %685 = arith.divf %683, %684 : vector<2x32xf32>
    %686 = vector.extract_strided_slice %679 {offsets = [0, 32], sizes = [2, 32], strides = [1, 1]} : vector<2x128xf32> to vector<2x32xf32>
    %687 = arith.negf %686 : vector<2x32xf32>
    %688 = math.exp %687 : vector<2x32xf32>
    %cst_123 = arith.constant 1.000000e+00 : f32
    %689 = vector.broadcast %cst_123 : f32 to vector<2x32xf32>
    %690 = arith.addf %689, %688 : vector<2x32xf32>
    %691 = arith.divf %689, %690 : vector<2x32xf32>
    %692 = vector.extract_strided_slice %679 {offsets = [0, 64], sizes = [2, 32], strides = [1, 1]} : vector<2x128xf32> to vector<2x32xf32>
    %693 = math.tanh %692 : vector<2x32xf32>
    %694 = vector.extract_strided_slice %679 {offsets = [0, 96], sizes = [2, 32], strides = [1, 1]} : vector<2x128xf32> to vector<2x32xf32>
    %695 = arith.negf %694 : vector<2x32xf32>
    %696 = math.exp %695 : vector<2x32xf32>
    %cst_124 = arith.constant 1.000000e+00 : f32
    %697 = vector.broadcast %cst_124 : f32 to vector<2x32xf32>
    %698 = arith.addf %697, %696 : vector<2x32xf32>
    %699 = arith.divf %697, %698 : vector<2x32xf32>
    %700 = arith.mulf %691, %646 : vector<2x32xf32>
    %701 = arith.mulf %685, %693 : vector<2x32xf32>
    %702 = arith.addf %700, %701 : vector<2x32xf32>
    %703 = math.tanh %702 : vector<2x32xf32>
    %704 = arith.mulf %699, %703 : vector<2x32xf32>
    %705 = vector.extract_strided_slice %474 {offsets = [8, 0], sizes = [2, 128], strides = [1, 1]} : vector<16x256xf32> to vector<2x128xf32>
    %cst_125 = arith.constant dense<0.000000e+00> : vector<2x128xf32>
    %706 = tpu.matmul %676, %475, %cst_125 {dimension_numbers = #tpu.dot_dimension_numbers<[1], [0], [0], [1], [0, 0, 1, 1], [], []>} : vector<2x32xf32>, vector<32x128xf32>, vector<2x128xf32> -> vector<2x128xf32>
    %707 = arith.addf %705, %706 : vector<2x128xf32>
    %708 = vector.extract_strided_slice %707 {offsets = [0, 0], sizes = [2, 32], strides = [1, 1]} : vector<2x128xf32> to vector<2x32xf32>
    %709 = arith.negf %708 : vector<2x32xf32>
    %710 = math.exp %709 : vector<2x32xf32>
    %cst_126 = arith.constant 1.000000e+00 : f32
    %711 = vector.broadcast %cst_126 : f32 to vector<2x32xf32>
    %712 = arith.addf %711, %710 : vector<2x32xf32>
    %713 = arith.divf %711, %712 : vector<2x32xf32>
    %714 = vector.extract_strided_slice %707 {offsets = [0, 32], sizes = [2, 32], strides = [1, 1]} : vector<2x128xf32> to vector<2x32xf32>
    %715 = arith.negf %714 : vector<2x32xf32>
    %716 = math.exp %715 : vector<2x32xf32>
    %cst_127 = arith.constant 1.000000e+00 : f32
    %717 = vector.broadcast %cst_127 : f32 to vector<2x32xf32>
    %718 = arith.addf %717, %716 : vector<2x32xf32>
    %719 = arith.divf %717, %718 : vector<2x32xf32>
    %720 = vector.extract_strided_slice %707 {offsets = [0, 64], sizes = [2, 32], strides = [1, 1]} : vector<2x128xf32> to vector<2x32xf32>
    %721 = math.tanh %720 : vector<2x32xf32>
    %722 = vector.extract_strided_slice %707 {offsets = [0, 96], sizes = [2, 32], strides = [1, 1]} : vector<2x128xf32> to vector<2x32xf32>
    %723 = arith.negf %722 : vector<2x32xf32>
    %724 = math.exp %723 : vector<2x32xf32>
    %cst_128 = arith.constant 1.000000e+00 : f32
    %725 = vector.broadcast %cst_128 : f32 to vector<2x32xf32>
    %726 = arith.addf %725, %724 : vector<2x32xf32>
    %727 = arith.divf %725, %726 : vector<2x32xf32>
    %728 = arith.mulf %719, %674 : vector<2x32xf32>
    %729 = arith.mulf %713, %721 : vector<2x32xf32>
    %730 = arith.addf %728, %729 : vector<2x32xf32>
    %731 = math.tanh %730 : vector<2x32xf32>
    %732 = arith.mulf %727, %731 : vector<2x32xf32>
    %733 = vector.extract_strided_slice %474 {offsets = [6, 128], sizes = [2, 128], strides = [1, 1]} : vector<16x256xf32> to vector<2x128xf32>
    %cst_129 = arith.constant dense<0.000000e+00> : vector<2x128xf32>
    %734 = tpu.matmul %704, %478, %cst_129 {dimension_numbers = #tpu.dot_dimension_numbers<[1], [0], [0], [1], [0, 0, 1, 1], [], []>} : vector<2x32xf32>, vector<32x128xf32>, vector<2x128xf32> -> vector<2x128xf32>
    %735 = arith.addf %733, %734 : vector<2x128xf32>
    %736 = vector.extract_strided_slice %735 {offsets = [0, 0], sizes = [2, 32], strides = [1, 1]} : vector<2x128xf32> to vector<2x32xf32>
    %737 = arith.negf %736 : vector<2x32xf32>
    %738 = math.exp %737 : vector<2x32xf32>
    %cst_130 = arith.constant 1.000000e+00 : f32
    %739 = vector.broadcast %cst_130 : f32 to vector<2x32xf32>
    %740 = arith.addf %739, %738 : vector<2x32xf32>
    %741 = arith.divf %739, %740 : vector<2x32xf32>
    %742 = vector.extract_strided_slice %735 {offsets = [0, 32], sizes = [2, 32], strides = [1, 1]} : vector<2x128xf32> to vector<2x32xf32>
    %743 = arith.negf %742 : vector<2x32xf32>
    %744 = math.exp %743 : vector<2x32xf32>
    %cst_131 = arith.constant 1.000000e+00 : f32
    %745 = vector.broadcast %cst_131 : f32 to vector<2x32xf32>
    %746 = arith.addf %745, %744 : vector<2x32xf32>
    %747 = arith.divf %745, %746 : vector<2x32xf32>
    %748 = vector.extract_strided_slice %735 {offsets = [0, 64], sizes = [2, 32], strides = [1, 1]} : vector<2x128xf32> to vector<2x32xf32>
    %749 = math.tanh %748 : vector<2x32xf32>
    %750 = vector.extract_strided_slice %735 {offsets = [0, 96], sizes = [2, 32], strides = [1, 1]} : vector<2x128xf32> to vector<2x32xf32>
    %751 = arith.negf %750 : vector<2x32xf32>
    %752 = math.exp %751 : vector<2x32xf32>
    %cst_132 = arith.constant 1.000000e+00 : f32
    %753 = vector.broadcast %cst_132 : f32 to vector<2x32xf32>
    %754 = arith.addf %753, %752 : vector<2x32xf32>
    %755 = arith.divf %753, %754 : vector<2x32xf32>
    %756 = arith.mulf %747, %702 : vector<2x32xf32>
    %757 = arith.mulf %741, %749 : vector<2x32xf32>
    %758 = arith.addf %756, %757 : vector<2x32xf32>
    %759 = math.tanh %758 : vector<2x32xf32>
    %760 = arith.mulf %755, %759 : vector<2x32xf32>
    %761 = vector.extract_strided_slice %474 {offsets = [10, 0], sizes = [2, 128], strides = [1, 1]} : vector<16x256xf32> to vector<2x128xf32>
    %cst_133 = arith.constant dense<0.000000e+00> : vector<2x128xf32>
    %762 = tpu.matmul %732, %475, %cst_133 {dimension_numbers = #tpu.dot_dimension_numbers<[1], [0], [0], [1], [0, 0, 1, 1], [], []>} : vector<2x32xf32>, vector<32x128xf32>, vector<2x128xf32> -> vector<2x128xf32>
    %763 = arith.addf %761, %762 : vector<2x128xf32>
    %764 = vector.extract_strided_slice %763 {offsets = [0, 0], sizes = [2, 32], strides = [1, 1]} : vector<2x128xf32> to vector<2x32xf32>
    %765 = arith.negf %764 : vector<2x32xf32>
    %766 = math.exp %765 : vector<2x32xf32>
    %cst_134 = arith.constant 1.000000e+00 : f32
    %767 = vector.broadcast %cst_134 : f32 to vector<2x32xf32>
    %768 = arith.addf %767, %766 : vector<2x32xf32>
    %769 = arith.divf %767, %768 : vector<2x32xf32>
    %770 = vector.extract_strided_slice %763 {offsets = [0, 32], sizes = [2, 32], strides = [1, 1]} : vector<2x128xf32> to vector<2x32xf32>
    %771 = arith.negf %770 : vector<2x32xf32>
    %772 = math.exp %771 : vector<2x32xf32>
    %cst_135 = arith.constant 1.000000e+00 : f32
    %773 = vector.broadcast %cst_135 : f32 to vector<2x32xf32>
    %774 = arith.addf %773, %772 : vector<2x32xf32>
    %775 = arith.divf %773, %774 : vector<2x32xf32>
    %776 = vector.extract_strided_slice %763 {offsets = [0, 64], sizes = [2, 32], strides = [1, 1]} : vector<2x128xf32> to vector<2x32xf32>
    %777 = math.tanh %776 : vector<2x32xf32>
    %778 = vector.extract_strided_slice %763 {offsets = [0, 96], sizes = [2, 32], strides = [1, 1]} : vector<2x128xf32> to vector<2x32xf32>
    %779 = arith.negf %778 : vector<2x32xf32>
    %780 = math.exp %779 : vector<2x32xf32>
    %cst_136 = arith.constant 1.000000e+00 : f32
    %781 = vector.broadcast %cst_136 : f32 to vector<2x32xf32>
    %782 = arith.addf %781, %780 : vector<2x32xf32>
    %783 = arith.divf %781, %782 : vector<2x32xf32>
    %784 = arith.mulf %775, %730 : vector<2x32xf32>
    %785 = arith.mulf %769, %777 : vector<2x32xf32>
    %786 = arith.addf %784, %785 : vector<2x32xf32>
    %787 = math.tanh %786 : vector<2x32xf32>
    %788 = arith.mulf %783, %787 : vector<2x32xf32>
    %789 = vector.extract_strided_slice %474 {offsets = [4, 128], sizes = [2, 128], strides = [1, 1]} : vector<16x256xf32> to vector<2x128xf32>
    %cst_137 = arith.constant dense<0.000000e+00> : vector<2x128xf32>
    %790 = tpu.matmul %760, %478, %cst_137 {dimension_numbers = #tpu.dot_dimension_numbers<[1], [0], [0], [1], [0, 0, 1, 1], [], []>} : vector<2x32xf32>, vector<32x128xf32>, vector<2x128xf32> -> vector<2x128xf32>
    %791 = arith.addf %789, %790 : vector<2x128xf32>
    %792 = vector.extract_strided_slice %791 {offsets = [0, 0], sizes = [2, 32], strides = [1, 1]} : vector<2x128xf32> to vector<2x32xf32>
    %793 = arith.negf %792 : vector<2x32xf32>
    %794 = math.exp %793 : vector<2x32xf32>
    %cst_138 = arith.constant 1.000000e+00 : f32
    %795 = vector.broadcast %cst_138 : f32 to vector<2x32xf32>
    %796 = arith.addf %795, %794 : vector<2x32xf32>
    %797 = arith.divf %795, %796 : vector<2x32xf32>
    %798 = vector.extract_strided_slice %791 {offsets = [0, 32], sizes = [2, 32], strides = [1, 1]} : vector<2x128xf32> to vector<2x32xf32>
    %799 = arith.negf %798 : vector<2x32xf32>
    %800 = math.exp %799 : vector<2x32xf32>
    %cst_139 = arith.constant 1.000000e+00 : f32
    %801 = vector.broadcast %cst_139 : f32 to vector<2x32xf32>
    %802 = arith.addf %801, %800 : vector<2x32xf32>
    %803 = arith.divf %801, %802 : vector<2x32xf32>
    %804 = vector.extract_strided_slice %791 {offsets = [0, 64], sizes = [2, 32], strides = [1, 1]} : vector<2x128xf32> to vector<2x32xf32>
    %805 = math.tanh %804 : vector<2x32xf32>
    %806 = vector.extract_strided_slice %791 {offsets = [0, 96], sizes = [2, 32], strides = [1, 1]} : vector<2x128xf32> to vector<2x32xf32>
    %807 = arith.negf %806 : vector<2x32xf32>
    %808 = math.exp %807 : vector<2x32xf32>
    %cst_140 = arith.constant 1.000000e+00 : f32
    %809 = vector.broadcast %cst_140 : f32 to vector<2x32xf32>
    %810 = arith.addf %809, %808 : vector<2x32xf32>
    %811 = arith.divf %809, %810 : vector<2x32xf32>
    %812 = arith.mulf %803, %758 : vector<2x32xf32>
    %813 = arith.mulf %797, %805 : vector<2x32xf32>
    %814 = arith.addf %812, %813 : vector<2x32xf32>
    %815 = math.tanh %814 : vector<2x32xf32>
    %816 = arith.mulf %811, %815 : vector<2x32xf32>
    %817 = vector.extract_strided_slice %474 {offsets = [12, 0], sizes = [2, 128], strides = [1, 1]} : vector<16x256xf32> to vector<2x128xf32>
    %cst_141 = arith.constant dense<0.000000e+00> : vector<2x128xf32>
    %818 = tpu.matmul %788, %475, %cst_141 {dimension_numbers = #tpu.dot_dimension_numbers<[1], [0], [0], [1], [0, 0, 1, 1], [], []>} : vector<2x32xf32>, vector<32x128xf32>, vector<2x128xf32> -> vector<2x128xf32>
    %819 = arith.addf %817, %818 : vector<2x128xf32>
    %820 = vector.extract_strided_slice %819 {offsets = [0, 0], sizes = [2, 32], strides = [1, 1]} : vector<2x128xf32> to vector<2x32xf32>
    %821 = arith.negf %820 : vector<2x32xf32>
    %822 = math.exp %821 : vector<2x32xf32>
    %cst_142 = arith.constant 1.000000e+00 : f32
    %823 = vector.broadcast %cst_142 : f32 to vector<2x32xf32>
    %824 = arith.addf %823, %822 : vector<2x32xf32>
    %825 = arith.divf %823, %824 : vector<2x32xf32>
    %826 = vector.extract_strided_slice %819 {offsets = [0, 32], sizes = [2, 32], strides = [1, 1]} : vector<2x128xf32> to vector<2x32xf32>
    %827 = arith.negf %826 : vector<2x32xf32>
    %828 = math.exp %827 : vector<2x32xf32>
    %cst_143 = arith.constant 1.000000e+00 : f32
    %829 = vector.broadcast %cst_143 : f32 to vector<2x32xf32>
    %830 = arith.addf %829, %828 : vector<2x32xf32>
    %831 = arith.divf %829, %830 : vector<2x32xf32>
    %832 = vector.extract_strided_slice %819 {offsets = [0, 64], sizes = [2, 32], strides = [1, 1]} : vector<2x128xf32> to vector<2x32xf32>
    %833 = math.tanh %832 : vector<2x32xf32>
    %834 = vector.extract_strided_slice %819 {offsets = [0, 96], sizes = [2, 32], strides = [1, 1]} : vector<2x128xf32> to vector<2x32xf32>
    %835 = arith.negf %834 : vector<2x32xf32>
    %836 = math.exp %835 : vector<2x32xf32>
    %cst_144 = arith.constant 1.000000e+00 : f32
    %837 = vector.broadcast %cst_144 : f32 to vector<2x32xf32>
    %838 = arith.addf %837, %836 : vector<2x32xf32>
    %839 = arith.divf %837, %838 : vector<2x32xf32>
    %840 = arith.mulf %831, %786 : vector<2x32xf32>
    %841 = arith.mulf %825, %833 : vector<2x32xf32>
    %842 = arith.addf %840, %841 : vector<2x32xf32>
    %843 = math.tanh %842 : vector<2x32xf32>
    %844 = arith.mulf %839, %843 : vector<2x32xf32>
    %845 = vector.extract_strided_slice %474 {offsets = [2, 128], sizes = [2, 128], strides = [1, 1]} : vector<16x256xf32> to vector<2x128xf32>
    %cst_145 = arith.constant dense<0.000000e+00> : vector<2x128xf32>
    %846 = tpu.matmul %816, %478, %cst_145 {dimension_numbers = #tpu.dot_dimension_numbers<[1], [0], [0], [1], [0, 0, 1, 1], [], []>} : vector<2x32xf32>, vector<32x128xf32>, vector<2x128xf32> -> vector<2x128xf32>
    %847 = arith.addf %845, %846 : vector<2x128xf32>
    %848 = vector.extract_strided_slice %847 {offsets = [0, 0], sizes = [2, 32], strides = [1, 1]} : vector<2x128xf32> to vector<2x32xf32>
    %849 = arith.negf %848 : vector<2x32xf32>
    %850 = math.exp %849 : vector<2x32xf32>
    %cst_146 = arith.constant 1.000000e+00 : f32
    %851 = vector.broadcast %cst_146 : f32 to vector<2x32xf32>
    %852 = arith.addf %851, %850 : vector<2x32xf32>
    %853 = arith.divf %851, %852 : vector<2x32xf32>
    %854 = vector.extract_strided_slice %847 {offsets = [0, 32], sizes = [2, 32], strides = [1, 1]} : vector<2x128xf32> to vector<2x32xf32>
    %855 = arith.negf %854 : vector<2x32xf32>
    %856 = math.exp %855 : vector<2x32xf32>
    %cst_147 = arith.constant 1.000000e+00 : f32
    %857 = vector.broadcast %cst_147 : f32 to vector<2x32xf32>
    %858 = arith.addf %857, %856 : vector<2x32xf32>
    %859 = arith.divf %857, %858 : vector<2x32xf32>
    %860 = vector.extract_strided_slice %847 {offsets = [0, 64], sizes = [2, 32], strides = [1, 1]} : vector<2x128xf32> to vector<2x32xf32>
    %861 = math.tanh %860 : vector<2x32xf32>
    %862 = vector.extract_strided_slice %847 {offsets = [0, 96], sizes = [2, 32], strides = [1, 1]} : vector<2x128xf32> to vector<2x32xf32>
    %863 = arith.negf %862 : vector<2x32xf32>
    %864 = math.exp %863 : vector<2x32xf32>
    %cst_148 = arith.constant 1.000000e+00 : f32
    %865 = vector.broadcast %cst_148 : f32 to vector<2x32xf32>
    %866 = arith.addf %865, %864 : vector<2x32xf32>
    %867 = arith.divf %865, %866 : vector<2x32xf32>
    %868 = arith.mulf %859, %814 : vector<2x32xf32>
    %869 = arith.mulf %853, %861 : vector<2x32xf32>
    %870 = arith.addf %868, %869 : vector<2x32xf32>
    %871 = math.tanh %870 : vector<2x32xf32>
    %872 = arith.mulf %867, %871 : vector<2x32xf32>
    %873 = vector.extract_strided_slice %474 {offsets = [14, 0], sizes = [2, 128], strides = [1, 1]} : vector<16x256xf32> to vector<2x128xf32>
    %cst_149 = arith.constant dense<0.000000e+00> : vector<2x128xf32>
    %874 = tpu.matmul %844, %475, %cst_149 {dimension_numbers = #tpu.dot_dimension_numbers<[1], [0], [0], [1], [0, 0, 1, 1], [], []>} : vector<2x32xf32>, vector<32x128xf32>, vector<2x128xf32> -> vector<2x128xf32>
    %875 = arith.addf %873, %874 : vector<2x128xf32>
    %876 = vector.extract_strided_slice %875 {offsets = [0, 0], sizes = [2, 32], strides = [1, 1]} : vector<2x128xf32> to vector<2x32xf32>
    %877 = arith.negf %876 : vector<2x32xf32>
    %878 = math.exp %877 : vector<2x32xf32>
    %cst_150 = arith.constant 1.000000e+00 : f32
    %879 = vector.broadcast %cst_150 : f32 to vector<2x32xf32>
    %880 = arith.addf %879, %878 : vector<2x32xf32>
    %881 = arith.divf %879, %880 : vector<2x32xf32>
    %882 = vector.extract_strided_slice %875 {offsets = [0, 32], sizes = [2, 32], strides = [1, 1]} : vector<2x128xf32> to vector<2x32xf32>
    %883 = arith.negf %882 : vector<2x32xf32>
    %884 = math.exp %883 : vector<2x32xf32>
    %cst_151 = arith.constant 1.000000e+00 : f32
    %885 = vector.broadcast %cst_151 : f32 to vector<2x32xf32>
    %886 = arith.addf %885, %884 : vector<2x32xf32>
    %887 = arith.divf %885, %886 : vector<2x32xf32>
    %888 = vector.extract_strided_slice %875 {offsets = [0, 64], sizes = [2, 32], strides = [1, 1]} : vector<2x128xf32> to vector<2x32xf32>
    %889 = math.tanh %888 : vector<2x32xf32>
    %890 = vector.extract_strided_slice %875 {offsets = [0, 96], sizes = [2, 32], strides = [1, 1]} : vector<2x128xf32> to vector<2x32xf32>
    %891 = arith.negf %890 : vector<2x32xf32>
    %892 = math.exp %891 : vector<2x32xf32>
    %cst_152 = arith.constant 1.000000e+00 : f32
    %893 = vector.broadcast %cst_152 : f32 to vector<2x32xf32>
    %894 = arith.addf %893, %892 : vector<2x32xf32>
    %895 = arith.divf %893, %894 : vector<2x32xf32>
    %896 = arith.mulf %887, %842 : vector<2x32xf32>
    %897 = arith.mulf %881, %889 : vector<2x32xf32>
    %898 = arith.addf %896, %897 : vector<2x32xf32>
    %899 = math.tanh %898 : vector<2x32xf32>
    %900 = arith.mulf %895, %899 : vector<2x32xf32>
    %901 = vector.extract_strided_slice %474 {offsets = [0, 128], sizes = [2, 128], strides = [1, 1]} : vector<16x256xf32> to vector<2x128xf32>
    %cst_153 = arith.constant dense<0.000000e+00> : vector<2x128xf32>
    %902 = tpu.matmul %872, %478, %cst_153 {dimension_numbers = #tpu.dot_dimension_numbers<[1], [0], [0], [1], [0, 0, 1, 1], [], []>} : vector<2x32xf32>, vector<32x128xf32>, vector<2x128xf32> -> vector<2x128xf32>
    %903 = arith.addf %901, %902 : vector<2x128xf32>
    %904 = vector.extract_strided_slice %903 {offsets = [0, 0], sizes = [2, 32], strides = [1, 1]} : vector<2x128xf32> to vector<2x32xf32>
    %905 = arith.negf %904 : vector<2x32xf32>
    %906 = math.exp %905 : vector<2x32xf32>
    %cst_154 = arith.constant 1.000000e+00 : f32
    %907 = vector.broadcast %cst_154 : f32 to vector<2x32xf32>
    %908 = arith.addf %907, %906 : vector<2x32xf32>
    %909 = arith.divf %907, %908 : vector<2x32xf32>
    %910 = vector.extract_strided_slice %903 {offsets = [0, 32], sizes = [2, 32], strides = [1, 1]} : vector<2x128xf32> to vector<2x32xf32>
    %911 = arith.negf %910 : vector<2x32xf32>
    %912 = math.exp %911 : vector<2x32xf32>
    %cst_155 = arith.constant 1.000000e+00 : f32
    %913 = vector.broadcast %cst_155 : f32 to vector<2x32xf32>
    %914 = arith.addf %913, %912 : vector<2x32xf32>
    %915 = arith.divf %913, %914 : vector<2x32xf32>
    %916 = vector.extract_strided_slice %903 {offsets = [0, 64], sizes = [2, 32], strides = [1, 1]} : vector<2x128xf32> to vector<2x32xf32>
    %917 = math.tanh %916 : vector<2x32xf32>
    %918 = vector.extract_strided_slice %903 {offsets = [0, 96], sizes = [2, 32], strides = [1, 1]} : vector<2x128xf32> to vector<2x32xf32>
    %919 = arith.negf %918 : vector<2x32xf32>
    %920 = math.exp %919 : vector<2x32xf32>
    %cst_156 = arith.constant 1.000000e+00 : f32
    %921 = vector.broadcast %cst_156 : f32 to vector<2x32xf32>
    %922 = arith.addf %921, %920 : vector<2x32xf32>
    %923 = arith.divf %921, %922 : vector<2x32xf32>
    %924 = arith.mulf %915, %870 : vector<2x32xf32>
    %925 = arith.mulf %909, %917 : vector<2x32xf32>
    %926 = arith.addf %924, %925 : vector<2x32xf32>
    %927 = math.tanh %926 : vector<2x32xf32>
    %928 = arith.mulf %923, %927 : vector<2x32xf32>
    %929 = tpu.concatenate %508, %564, %620, %676, %732, %788, %844, %900 in 0 : vector<2x32xf32>, vector<2x32xf32>, vector<2x32xf32>, vector<2x32xf32>, vector<2x32xf32>, vector<2x32xf32>, vector<2x32xf32>, vector<2x32xf32> -> vector<16x32xf32>
    %930 = tpu.concatenate %928, %872, %816, %760, %704, %648, %592, %536 in 0 : vector<2x32xf32>, vector<2x32xf32>, vector<2x32xf32>, vector<2x32xf32>, vector<2x32xf32>, vector<2x32xf32>, vector<2x32xf32>, vector<2x32xf32> -> vector<16x32xf32>
    %931 = tpu.concatenate %929, %930 in 1 : vector<16x32xf32>, vector<16x32xf32> -> vector<16x64xf32>
    %932 = vector.extract_strided_slice %931 {offsets = [0, 0], sizes = [2, 64], strides = [1, 1]} : vector<16x64xf32> to vector<2x64xf32>
    %933 = vector.extract_strided_slice %931 {offsets = [14, 0], sizes = [2, 64], strides = [1, 1]} : vector<16x64xf32> to vector<2x64xf32>
    %934 = tpu.concatenate %932, %933 in 1 : vector<2x64xf32>, vector<2x64xf32> -> vector<2x128xf32>
    %c0_157 = arith.constant 0 : index
    %c0_158 = arith.constant 0 : index
    %935 = vector.load %arg10[%c0_157, %c0_158] : memref<128x32xf32, #tpu.memory_space<vmem>>, vector<128x32xf32>
    %cst_159 = arith.constant dense<0.000000e+00> : vector<2x32xf32>
    %936 = tpu.matmul %934, %935, %cst_159 {dimension_numbers = #tpu.dot_dimension_numbers<[1], [0], [0], [1], [0, 0, 1, 1], [], []>} : vector<2x128xf32>, vector<128x32xf32>, vector<2x32xf32> -> vector<2x32xf32>
    %c0_160 = arith.constant 0 : index
    %c0_161 = arith.constant 0 : index
    %937 = vector.load %arg11[%c0_160, %c0_161] : memref<1x32xf32, #tpu.memory_space<vmem>>, vector<1x32xf32>
    %938 = vector.broadcast %937 : vector<1x32xf32> to vector<2x32xf32>
    %939 = arith.addf %936, %938 : vector<2x32xf32>
    %c0_162 = arith.constant 0 : index
    %c0_163 = arith.constant 0 : index
    %940 = vector.load %arg12[%c0_162, %c0_163] : memref<32x2xf32, #tpu.memory_space<vmem>>, vector<32x2xf32>
    %cst_164 = arith.constant dense<0.000000e+00> : vector<2x2xf32>
    %941 = tpu.matmul %939, %940, %cst_164 {dimension_numbers = #tpu.dot_dimension_numbers<[1], [0], [0], [1], [0, 0, 1, 1], [], []>} : vector<2x32xf32>, vector<32x2xf32>, vector<2x2xf32> -> vector<2x2xf32>
    %c0_165 = arith.constant 0 : index
    %c0_166 = arith.constant 0 : index
    %942 = vector.load %arg13[%c0_165, %c0_166] : memref<1x2xf32, #tpu.memory_space<vmem>>, vector<1x2xf32>
    %943 = vector.broadcast %942 : vector<1x2xf32> to vector<2x2xf32>
    %944 = arith.addf %941, %943 : vector<2x2xf32>
    %c0_167 = arith.constant 0 : index
    %c0_168 = arith.constant 0 : index
    %945 = vector.load %arg14[%c0_167, %c0_168] : memref<2x2xf32, #tpu.memory_space<vmem>>, vector<2x2xf32>
    tpu.vector_store %arg14[%c0_167, %c0_168], %944 {strides = array<i32>} : memref<2x2xf32, #tpu.memory_space<vmem>>, vector<2x2xf32>,
    return
  }
}

</mosaic_0001>

<llo_original>
// kernel: _lambda_.1
$region0: #{_lambda_.1}
  #allocation0 [shape = 'u32[]', space=smem, size = 0x4, offset = 0x4, fixed_abs, tag = 'smem constant byte address 0x4 - core index']
  #allocation1 [shape = 'u32[144,128]{1,0:T(1,128)}', space=vmem, size = 0x12000, scoped, tag = 'internal scratch']
  %s0 = inlined_call_operand.vmem [shape: s32[16,1], index: 0, kind: input, shape index: {}]
  %s1 = inlined_call_operand.vmem [shape: f32[128,32], index: 1, kind: input, shape index: {}]
  %s2 = inlined_call_operand.vmem [shape: f32[32,256], index: 2, kind: input, shape index: {}]
  %s3 = inlined_call_operand.vmem [shape: f32[1,256], index: 3, kind: input, shape index: {}]
  %s4 = inlined_call_operand.vmem [shape: f32[32,128], index: 4, kind: input, shape index: {}]
  %s5 = inlined_call_operand.vmem [shape: f32[32,128], index: 5, kind: input, shape index: {}]
  %s6 = inlined_call_operand.vmem [shape: f32[64,256], index: 6, kind: input, shape index: {}]
  %s7 = inlined_call_operand.vmem [shape: f32[1,256], index: 7, kind: input, shape index: {}]
  %s8 = inlined_call_operand.vmem [shape: f32[32,128], index: 8, kind: input, shape index: {}]
  %s9 = inlined_call_operand.vmem [shape: f32[32,128], index: 9, kind: input, shape index: {}]
  %s10 = inlined_call_operand.vmem [shape: f32[128,32], index: 10, kind: input, shape index: {}]
  %s11 = inlined_call_operand.vmem [shape: f32[1,32], index: 11, kind: input, shape index: {}]
  %s12 = inlined_call_operand.vmem [shape: f32[32,2], index: 12, kind: input, shape index: {}]
  %s13 = inlined_call_operand.vmem [shape: f32[1,2], index: 13, kind: input, shape index: {}]
  %s14 = inlined_call_operand.hbm [shape: f32[2,2], index: 14, kind: output, shape index: {}]
  %s15 = sld [smem:[#allocation0]]
  $region66: #{_lambda_.1} parent=0
    _
  %s17 = ssub.s32 1, %s15
  %s18 = scalar_select 0, %s17, %s15
  $region1: #{_lambda_.1} parent=0
    #allocation2 [shape = 'u8[1024]{0}', space=vmem, size = 0x400, scoped, tag = 'output window, operand 0, single buffered']
    #allocation3 [shape = 's32[1]{0}', space=sflag, size = 0x4, scoped, tag = 'scoped memory for _lambda_.1']
    %19 = vsyncpa [#allocation3], 0
    // Predicated region
    $region2: #{_lambda_.1} parent=1 // pred_check
      _
    $region3: #{_lambda_.1} parent=1 // pred_check_branch
      %21 = sbr.rel (0) target = $region5
    $region4: #{_lambda_.1} parent=1 // pred_region
      _
    $region5: #{_lambda_.1} parent=1 // pred_fallthru
      _
    // Predicated region
    $region6: #{_lambda_.1} parent=1 // pred_check
      _
    $region7: #{_lambda_.1} parent=1 // pred_check_branch
      %23 = sbr.rel (0) target = $region9
    $region8: #{_lambda_.1} parent=1 // pred_region
      _
    $region9: #{_lambda_.1} parent=1 // pred_fallthru
      _
    // Predicated region
    $region10: #{_lambda_.1} parent=1 // pred_check
      _
    $region11: #{_lambda_.1} parent=1 // pred_check_branch
      %25 = sbr.rel (0) target = $region13
    $region12: #{_lambda_.1} parent=1 // pred_region
      _
    $region13: #{_lambda_.1} parent=1 // pred_fallthru
      _
    // Predicated region
    $region14: #{_lambda_.1} parent=1 // pred_check
      _
    $region15: #{_lambda_.1} parent=1 // pred_check_branch
      %27 = sbr.rel (0) target = $region17
    $region16: #{_lambda_.1} parent=1 // pred_region
      _
    $region17: #{_lambda_.1} parent=1 // pred_fallthru
      _
    // Predicated region
    $region18: #{_lambda_.1} parent=1 // pred_check
      _
    $region19: #{_lambda_.1} parent=1 // pred_check_branch
      %29 = sbr.rel (0) target = $region21
    $region20: #{_lambda_.1} parent=1 // pred_region
      _
    $region21: #{_lambda_.1} parent=1 // pred_fallthru
      _
    // Predicated region
    $region22: #{_lambda_.1} parent=1 // pred_check
      _
    $region23: #{_lambda_.1} parent=1 // pred_check_branch
      %31 = sbr.rel (0) target = $region25
    $region24: #{_lambda_.1} parent=1 // pred_region
      _
    $region25: #{_lambda_.1} parent=1 // pred_fallthru
      _
    // Predicated region
    $region26: #{_lambda_.1} parent=1 // pred_check
      _
    $region27: #{_lambda_.1} parent=1 // pred_check_branch
      %33 = sbr.rel (0) target = $region29
    $region28: #{_lambda_.1} parent=1 // pred_region
      _
    $region29: #{_lambda_.1} parent=1 // pred_fallthru
      _
    // Predicated region
    $region30: #{_lambda_.1} parent=1 // pred_check
      _
    $region31: #{_lambda_.1} parent=1 // pred_check_branch
      %35 = sbr.rel (0) target = $region33
    $region32: #{_lambda_.1} parent=1 // pred_region
      _
    $region33: #{_lambda_.1} parent=1 // pred_fallthru
      _
    // Predicated region
    $region34: #{_lambda_.1} parent=1 // pred_check
      _
    $region35: #{_lambda_.1} parent=1 // pred_check_branch
      %37 = sbr.rel (0) target = $region37
    $region36: #{_lambda_.1} parent=1 // pred_region
      _
    $region37: #{_lambda_.1} parent=1 // pred_fallthru
      _
    // Predicated region
    $region38: #{_lambda_.1} parent=1 // pred_check
      _
    $region39: #{_lambda_.1} parent=1 // pred_check_branch
      %39 = sbr.rel (0) target = $region41
    $region40: #{_lambda_.1} parent=1 // pred_region
      _
    $region41: #{_lambda_.1} parent=1 // pred_fallthru
      _
    // Predicated region
    $region42: #{_lambda_.1} parent=1 // pred_check
      _
    $region43: #{_lambda_.1} parent=1 // pred_check_branch
      %41 = sbr.rel (0) target = $region45
    $region44: #{_lambda_.1} parent=1 // pred_region
      _
    $region45: #{_lambda_.1} parent=1 // pred_fallthru
      _
    // Predicated region
    $region46: #{_lambda_.1} parent=1 // pred_check
      _
    $region47: #{_lambda_.1} parent=1 // pred_check_branch
      %43 = sbr.rel (0) target = $region49
    $region48: #{_lambda_.1} parent=1 // pred_region
      _
    $region49: #{_lambda_.1} parent=1 // pred_fallthru
      _
    // Predicated region
    $region50: #{_lambda_.1} parent=1 // pred_check
      _
    $region51: #{_lambda_.1} parent=1 // pred_check_branch
      %45 = sbr.rel (0) target = $region53
    $region52: #{_lambda_.1} parent=1 // pred_region
      _
    $region53: #{_lambda_.1} parent=1 // pred_fallthru
      _
    // Predicated region
    $region54: #{_lambda_.1} parent=1 // pred_check
      _
    $region55: #{_lambda_.1} parent=1 // pred_check_branch
      %47 = sbr.rel (0) target = $region57
    $region56: #{_lambda_.1} parent=1 // pred_region
      _
    $region57: #{_lambda_.1} parent=1 // pred_fallthru
      _
    %v48 = vld [vmem:[%s0] sm:$0xff]
    %v49 = vld [vmem:[%s0 + $0x8] sm:$0xff]
    %v50 = vlaneseq
    %v51 = vand.u32 %v50, 127
    %52 = vset.pattern.permute.xlu0 0
    %53 = vperm.xlu0 %52, %v48
    %v54 = vpop.permute.xlu0 %53
    %55 = vset.pattern.permute.xlu0 0
    %56 = vperm.xlu0 %55, %v49
    %v57 = vpop.permute.xlu0 %56
    %vm58 = vcmp.eq.s32.totalorder %v51, %v54
    %vm59 = vcmp.eq.s32.totalorder %v51, %v57
    %v60 = vsel %vm58, 1, 0
    %v61 = vsel %vm59, 1, 0
    %v62 = vcvt.s32.f32 %v60
    %v63 = vcvt.s32.f32 %v61
    %v64 = vld [vmem:[%s1] sm:$0xff]
    %v65 = vld [vmem:[%s1 + $0x8] sm:$0xff]
    %v66 = vld [vmem:[%s1 + $0x10] sm:$0xff]
    %v67 = vld [vmem:[%s1 + $0x18] sm:$0xff]
    %v68 = vld [vmem:[%s1 + $0x20] sm:$0xff]
    %v69 = vld [vmem:[%s1 + $0x28] sm:$0xff]
    %v70 = vld [vmem:[%s1 + $0x30] sm:$0xff]
    %v71 = vld [vmem:[%s1 + $0x38] sm:$0xff]
    %v72 = vld [vmem:[%s1 + $0x40] sm:$0xff]
    %v73 = vld [vmem:[%s1 + $0x48] sm:$0xff]
    %v74 = vld [vmem:[%s1 + $0x50] sm:$0xff]
    %v75 = vld [vmem:[%s1 + $0x58] sm:$0xff]
    %v76 = vld [vmem:[%s1 + $0x60] sm:$0xff]
    %v77 = vld [vmem:[%s1 + $0x68] sm:$0xff]
    %v78 = vld [vmem:[%s1 + $0x70] sm:$0xff]
    %v79 = vld [vmem:[%s1 + $0x78] sm:$0xff]
    %80 = vmatprep.subr.mxu0 0.0
    %81 = vmatpush1.msra.mxu0 %v64
    %82 = vmatprep.subr.mxu0 0.0
    %83 = vmatpush1.msra.mxu0 %v65
    %84 = vmatprep.subr.mxu0 0.0
    %85 = vmatpush1.msra.mxu0 %v66
    %86 = vmatprep.subr.mxu0 0.0
    %87 = vmatpush1.msra.mxu0 %v67
    %88 = vmatprep.subr.mxu0 0.0
    %89 = vmatpush1.msra.mxu0 %v68
    %90 = vmatprep.subr.mxu0 0.0
    %91 = vmatpush1.msra.mxu0 %v69
    %92 = vmatprep.subr.mxu0 0.0
    %93 = vmatpush1.msra.mxu0 %v70
    %94 = vmatprep.subr.mxu0 0.0
    %95 = vmatpush1.msra.mxu0 %v71
    %96 = vmatprep.subr.mxu0 0.0
    %97 = vmatpush1.msra.mxu0 %v72
    %98 = vmatprep.subr.mxu0 0.0
    %99 = vmatpush1.msra.mxu0 %v73
    %100 = vmatprep.subr.mxu0 0.0
    %101 = vmatpush1.msra.mxu0 %v74
    %102 = vmatprep.subr.mxu0 0.0
    %103 = vmatpush1.msra.mxu0 %v75
    %104 = vmatprep.subr.mxu0 0.0
    %105 = vmatpush1.msra.mxu0 %v76
    %106 = vmatprep.subr.mxu0 0.0
    %107 = vmatpush1.msra.mxu0 %v77
    %108 = vmatprep.subr.mxu0 0.0
    %109 = vmatpush1.msra.mxu0 %v78
    %110 = vmatprep.subr.mxu0 0.0
    %111 = vmatpush1.msra.mxu0 %v79
    %112 = vmatprep.subr.mxu0 0.0
    %113 = vmatpush1.msra.mxu0 0.0
    %114 = vmatprep.subr.mxu0 0.0
    %115 = vmatpush1.msra.mxu0 0.0
    %116 = vmatprep.subr.mxu0 0.0
    %117 = vmatpush1.msra.mxu0 0.0
    %118 = vmatprep.subr.mxu0 0.0
    %119 = vmatpush1.msra.mxu0 0.0
    %120 = vmatprep.subr.mxu0 0.0
    %121 = vmatpush1.msra.mxu0 0.0
    %122 = vmatprep.subr.mxu0 0.0
    %123 = vmatpush1.msra.mxu0 0.0
    %124 = vmatprep.subr.mxu0 0.0
    %125 = vmatpush1.msra.mxu0 0.0
    %126 = vmatprep.subr.mxu0 0.0
    %127 = vmatpush1.msra.mxu0 0.0
    %128 = vmatprep.subr.mxu0 0.0
    %129 = vmatpush1.msra.mxu0 0.0
    %130 = vmatprep.subr.mxu0 0.0
    %131 = vmatpush1.msra.mxu0 0.0
    %132 = vmatprep.subr.mxu0 0.0
    %133 = vmatpush1.msra.mxu0 0.0
    %134 = vmatprep.subr.mxu0 0.0
    %135 = vmatpush1.msra.mxu0 0.0
    %136 = vmatprep.subr.mxu0 0.0
    %137 = vmatpush1.msra.mxu0 0.0
    %138 = vmatprep.subr.mxu0 0.0
    %139 = vmatpush1.msra.mxu0 0.0
    %140 = vmatprep.subr.mxu0 0.0
    %141 = vmatpush1.msra.mxu0 0.0
    %142 = vmatprep.subr.mxu0 0.0
    %143 = vmatpush1.msra.mxu0 0.0
    %144 = vmatprep.mubr.f32.mxu0 0.0
    %145 = vmatmul.mubr.f32.gmra.mrb[0].mxu0 %v62
    %v146 = vpop.f32.mrb[0].mxu0
    %v147 = vadd.f32 0.0, %v146
    %v148 = vpop.f32.mrb[0].mxu0
    %149 = vmatprep.mubr.f32.mxu0 0.0
    %150 = vmatmul.mubr.f32.gmra.mrb[0].mxu0 %v63
    %v151 = vpop.f32.mrb[0].mxu0
    %v152 = vadd.f32 0.0, %v151
    %v153 = vpop.f32.mrb[0].mxu0
    %154 = vdwg.mxu0
    %v155 = vld [vmem:[%s2] sm:$0xff]
    %v156 = vld [vmem:[%s2 + $0x8] sm:$0xff]
    %v157 = vld [vmem:[%s2 + $0x10] sm:$0xff]
    %v158 = vld [vmem:[%s2 + $0x18] sm:$0xff]
    %v159 = vld [vmem:[%s2 + $0x20] sm:$0xff]
    %v160 = vld [vmem:[%s2 + $0x28] sm:$0xff]
    %v161 = vld [vmem:[%s2 + $0x30] sm:$0xff]
    %v162 = vld [vmem:[%s2 + $0x38] sm:$0xff]
    %v163 = vld [vmem:[%s3] sm:$0x3]
    %v165 = vlaneseq
    %v166 = vshrl.u32 %v165, 7
    %v167 = vsub.s32 0, %v166
    %v168 = vrot.slane %v163, %v167
    %v169 = vlaneseq
    %v170 = vshrl.u32 %v169, 7
    %v171 = vsub.s32 1, %v170
    %v172 = vrot.slane %v163, %v171
    %vm175 = vcmask 261120
    %v177 = vsel %vm175, %v147, 0
    %v180 = vsel %vm175, %v152, 0
    %182 = vmatprep.subr.mxu0 %v156
    %183 = vmatpush1.msra.mxu0 %v155
    %184 = vmatprep.subr.mxu0 %v158
    %185 = vmatpush1.msra.mxu0 %v157
    %186 = vmatprep.subr.mxu0 %v160
    %187 = vmatpush1.msra.mxu0 %v159
    %188 = vmatprep.subr.mxu0 %v162
    %189 = vmatpush1.msra.mxu0 %v161
    %190 = vmatprep.subr.mxu0 0.0
    %191 = vmatpush1.msra.mxu0 0.0
    %192 = vmatprep.subr.mxu0 0.0
    %193 = vmatpush1.msra.mxu0 0.0
    %194 = vmatprep.subr.mxu0 0.0
    %195 = vmatpush1.msra.mxu0 0.0
    %196 = vmatprep.subr.mxu0 0.0
    %197 = vmatpush1.msra.mxu0 0.0
    %198 = vmatprep.subr.mxu0 0.0
    %199 = vmatpush1.msra.mxu0 0.0
    %200 = vmatprep.subr.mxu0 0.0
    %201 = vmatpush1.msra.mxu0 0.0
    %202 = vmatprep.subr.mxu0 0.0
    %203 = vmatpush1.msra.mxu0 0.0
    %204 = vmatprep.subr.mxu0 0.0
    %205 = vmatpush1.msra.mxu0 0.0
    %206 = vmatprep.subr.mxu0 0.0
    %207 = vmatpush1.msra.mxu0 0.0
    %208 = vmatprep.subr.mxu0 0.0
    %209 = vmatpush1.msra.mxu0 0.0
    %210 = vmatprep.subr.mxu0 0.0
    %211 = vmatpush1.msra.mxu0 0.0
    %212 = vmatprep.subr.mxu0 0.0
    %213 = vmatpush1.msra.mxu0 0.0
    %214 = vmatprep.subr.mxu0 0.0
    %215 = vmatpush1.msra.mxu0 0.0
    %216 = vmatprep.subr.mxu0 0.0
    %217 = vmatpush1.msra.mxu0 0.0
    %218 = vmatprep.subr.mxu0 0.0
    %219 = vmatpush1.msra.mxu0 0.0
    %220 = vmatprep.subr.mxu0 0.0
    %221 = vmatpush1.msra.mxu0 0.0
    %222 = vmatprep.subr.mxu0 0.0
    %223 = vmatpush1.msra.mxu0 0.0
    %224 = vmatprep.subr.mxu0 0.0
    %225 = vmatpush1.msra.mxu0 0.0
    %226 = vmatprep.subr.mxu0 0.0
    %227 = vmatpush1.msra.mxu0 0.0
    %228 = vmatprep.subr.mxu0 0.0
    %229 = vmatpush1.msra.mxu0 0.0
    %230 = vmatprep.subr.mxu0 0.0
    %231 = vmatpush1.msra.mxu0 0.0
    %232 = vmatprep.subr.mxu0 0.0
    %233 = vmatpush1.msra.mxu0 0.0
    %234 = vmatprep.subr.mxu0 0.0
    %235 = vmatpush1.msra.mxu0 0.0
    %236 = vmatprep.subr.mxu0 0.0
    %237 = vmatpush1.msra.mxu0 0.0
    %238 = vmatprep.subr.mxu0 0.0
    %239 = vmatpush1.msra.mxu0 0.0
    %240 = vmatprep.subr.mxu0 0.0
    %241 = vmatpush1.msra.mxu0 0.0
    %242 = vmatprep.subr.mxu0 0.0
    %243 = vmatpush1.msra.mxu0 0.0
    %244 = vmatprep.subr.mxu0 0.0
    %245 = vmatpush1.msra.mxu0 0.0
    %246 = vmatprep.mubr.f32.mxu0 0.0
    %247 = vmatmul.mubr.f32.gmra.mrb[0].mxu0 %v177
    %v248 = vpop.f32.mrb[0].mxu0
    %v249 = vadd.f32 %v168, %v248
    %v250 = vpop.f32.mrb[0].mxu0
    %v251 = vadd.f32 %v172, %v250
    %252 = vmatprep.mubr.f32.mxu0 0.0
    %253 = vmatmul.mubr.f32.gmra.mrb[0].mxu0 %v180
    %v254 = vpop.f32.mrb[0].mxu0
    %v255 = vadd.f32 %v168, %v254
    %v256 = vpop.f32.mrb[0].mxu0
    %v257 = vadd.f32 %v172, %v256
    %258 = vdwg.mxu0
    %v259 = vld [vmem:[%s4] sm:$0xff]
    %v260 = vld [vmem:[%s4 + $0x8] sm:$0xff]
    %v261 = vld [vmem:[%s4 + $0x10] sm:$0xff]
    %v262 = vld [vmem:[%s4 + $0x18] sm:$0xff]
    %v263 = vld [vmem:[%s5] sm:$0xff]
    %v264 = vld [vmem:[%s5 + $0x8] sm:$0xff]
    %v265 = vld [vmem:[%s5 + $0x10] sm:$0xff]
    %v266 = vld [vmem:[%s5 + $0x18] sm:$0xff]
    %v268 = vsel %vm175, 0.0, 0
    %270 = vmatprep.subr.mxu0 0.0
    %271 = vmatpush1.msra.mxu0 %v259
    %272 = vmatprep.subr.mxu0 0.0
    %273 = vmatpush1.msra.mxu0 %v260
    %274 = vmatprep.subr.mxu0 0.0
    %275 = vmatpush1.msra.mxu0 %v261
    %276 = vmatprep.subr.mxu0 0.0
    %277 = vmatpush1.msra.mxu0 %v262
    %278 = vmatprep.subr.mxu0 0.0
    %279 = vmatpush1.msra.mxu0 0.0
    %280 = vmatprep.subr.mxu0 0.0
    %281 = vmatpush1.msra.mxu0 0.0
    %282 = vmatprep.subr.mxu0 0.0
    %283 = vmatpush1.msra.mxu0 0.0
    %284 = vmatprep.subr.mxu0 0.0
    %285 = vmatpush1.msra.mxu0 0.0
    %286 = vmatprep.subr.mxu0 0.0
    %287 = vmatpush1.msra.mxu0 0.0
    %288 = vmatprep.subr.mxu0 0.0
    %289 = vmatpush1.msra.mxu0 0.0
    %290 = vmatprep.subr.mxu0 0.0
    %291 = vmatpush1.msra.mxu0 0.0
    %292 = vmatprep.subr.mxu0 0.0
    %293 = vmatpush1.msra.mxu0 0.0
    %294 = vmatprep.subr.mxu0 0.0
    %295 = vmatpush1.msra.mxu0 0.0
    %296 = vmatprep.subr.mxu0 0.0
    %297 = vmatpush1.msra.mxu0 0.0
    %298 = vmatprep.subr.mxu0 0.0
    %299 = vmatpush1.msra.mxu0 0.0
    %300 = vmatprep.subr.mxu0 0.0
    %301 = vmatpush1.msra.mxu0 0.0
    %302 = vmatprep.subr.mxu0 0.0
    %303 = vmatpush1.msra.mxu0 0.0
    %304 = vmatprep.subr.mxu0 0.0
    %305 = vmatpush1.msra.mxu0 0.0
    %306 = vmatprep.subr.mxu0 0.0
    %307 = vmatpush1.msra.mxu0 0.0
    %308 = vmatprep.subr.mxu0 0.0
    %309 = vmatpush1.msra.mxu0 0.0
    %310 = vmatprep.subr.mxu0 0.0
    %311 = vmatpush1.msra.mxu0 0.0
    %312 = vmatprep.subr.mxu0 0.0
    %313 = vmatpush1.msra.mxu0 0.0
    %314 = vmatprep.subr.mxu0 0.0
    %315 = vmatpush1.msra.mxu0 0.0
    %316 = vmatprep.subr.mxu0 0.0
    %317 = vmatpush1.msra.mxu0 0.0
    %318 = vmatprep.subr.mxu0 0.0
    %319 = vmatpush1.msra.mxu0 0.0
    %320 = vmatprep.subr.mxu0 0.0
    %321 = vmatpush1.msra.mxu0 0.0
    %322 = vmatprep.subr.mxu0 0.0
    %323 = vmatpush1.msra.mxu0 0.0
    %324 = vmatprep.subr.mxu0 0.0
    %325 = vmatpush1.msra.mxu0 0.0
    %326 = vmatprep.subr.mxu0 0.0
    %327 = vmatpush1.msra.mxu0 0.0
    %328 = vmatprep.subr.mxu0 0.0
    %329 = vmatpush1.msra.mxu0 0.0
    %330 = vmatprep.subr.mxu0 0.0
    %331 = vmatpush1.msra.mxu0 0.0
    %332 = vmatprep.subr.mxu0 0.0
    %333 = vmatpush1.msra.mxu0 0.0
    %334 = vmatprep.mubr.f32.mxu0 0.0
    %335 = vmatmul.mubr.f32.gmra.mrb[0].mxu0 %v268
    %v336 = vpop.f32.mrb[0].mxu0
    %v337 = vadd.f32 0.0, %v336
    %v338 = vpop.f32.mrb[0].mxu0
    %339 = vdwg.mxu0
    %v340 = vadd.f32 %v249, %v337
    %v341 = vxor.u32 %v340, 2147483648
    %v342 = vmul.f32 %v341, 1.442695
    %v343 = vpow.pop %v342
    %v344 = vadd.f32 %v343, 1.0
    %v345 = vrcp.pop %v344
    %v346 = vmul.f32 1.0, %v345
    %v347 = vtanh.pop %v340
    %v348 = vmul.f32 %v346, 0.0
    %350 = vrot.lane.b32.xlu0 %v347, 64
    %v351 = vpop.permute.xlu0 %350
    %v353 = vmul.f32 %v346, %v351
    %355 = vrot.lane.b32.xlu0 %v353, 32
    %v356 = vpop.permute.xlu0 %355
    %v358 = vadd.f32 %v348, %v356
    %v359 = vtanh.pop %v358
    %361 = vrot.lane.b32.xlu0 %v359, 64
    %v362 = vpop.permute.xlu0 %361
    %v364 = vmul.f32 %v346, %v362
    %365 = vmatprep.subr.mxu0 0.0
    %366 = vmatpush1.msra.mxu0 %v263
    %367 = vmatprep.subr.mxu0 0.0
    %368 = vmatpush1.msra.mxu0 %v264
    %369 = vmatprep.subr.mxu0 0.0
    %370 = vmatpush1.msra.mxu0 %v265
    %371 = vmatprep.subr.mxu0 0.0
    %372 = vmatpush1.msra.mxu0 %v266
    %373 = vmatprep.subr.mxu0 0.0
    %374 = vmatpush1.msra.mxu0 0.0
    %375 = vmatprep.subr.mxu0 0.0
    %376 = vmatpush1.msra.mxu0 0.0
    %377 = vmatprep.subr.mxu0 0.0
    %378 = vmatpush1.msra.mxu0 0.0
    %379 = vmatprep.subr.mxu0 0.0
    %380 = vmatpush1.msra.mxu0 0.0
    %381 = vmatprep.subr.mxu0 0.0
    %382 = vmatpush1.msra.mxu0 0.0
    %383 = vmatprep.subr.mxu0 0.0
    %384 = vmatpush1.msra.mxu0 0.0
    %385 = vmatprep.subr.mxu0 0.0
    %386 = vmatpush1.msra.mxu0 0.0
    %387 = vmatprep.subr.mxu0 0.0
    %388 = vmatpush1.msra.mxu0 0.0
    %389 = vmatprep.subr.mxu0 0.0
    %390 = vmatpush1.msra.mxu0 0.0
    %391 = vmatprep.subr.mxu0 0.0
    %392 = vmatpush1.msra.mxu0 0.0
    %393 = vmatprep.subr.mxu0 0.0
    %394 = vmatpush1.msra.mxu0 0.0
    %395 = vmatprep.subr.mxu0 0.0
    %396 = vmatpush1.msra.mxu0 0.0
    %397 = vmatprep.subr.mxu0 0.0
    %398 = vmatpush1.msra.mxu0 0.0
    %399 = vmatprep.subr.mxu0 0.0
    %400 = vmatpush1.msra.mxu0 0.0
    %401 = vmatprep.subr.mxu0 0.0
    %402 = vmatpush1.msra.mxu0 0.0
    %403 = vmatprep.subr.mxu0 0.0
    %404 = vmatpush1.msra.mxu0 0.0
    %405 = vmatprep.subr.mxu0 0.0
    %406 = vmatpush1.msra.mxu0 0.0
    %407 = vmatprep.subr.mxu0 0.0
    %408 = vmatpush1.msra.mxu0 0.0
    %409 = vmatprep.subr.mxu0 0.0
    %410 = vmatpush1.msra.mxu0 0.0
    %411 = vmatprep.subr.mxu0 0.0
    %412 = vmatpush1.msra.mxu0 0.0
    %413 = vmatprep.subr.mxu0 0.0
    %414 = vmatpush1.msra.mxu0 0.0
    %415 = vmatprep.subr.mxu0 0.0
    %416 = vmatpush1.msra.mxu0 0.0
    %417 = vmatprep.subr.mxu0 0.0
    %418 = vmatpush1.msra.mxu0 0.0
    %419 = vmatprep.subr.mxu0 0.0
    %420 = vmatpush1.msra.mxu0 0.0
    %421 = vmatprep.subr.mxu0 0.0
    %422 = vmatpush1.msra.mxu0 0.0
    %423 = vmatprep.subr.mxu0 0.0
    %424 = vmatpush1.msra.mxu0 0.0
    %425 = vmatprep.subr.mxu0 0.0
    %426 = vmatpush1.msra.mxu0 0.0
    %427 = vmatprep.subr.mxu0 0.0
    %428 = vmatpush1.msra.mxu0 0.0
    %429 = vmatprep.mubr.f32.mxu0 0.0
    %430 = vmatmul.mubr.f32.gmra.mrb[0].mxu0 %v268
    %v431 = vpop.f32.mrb[0].mxu0
    %v432 = vadd.f32 0.0, %v431
    %v433 = vpop.f32.mrb[0].mxu0
    %434 = vdwg.mxu0
    %v436 = vrot.slane %v432, 2
    %v438 = vadd.f32 %v257, %v436
    %v439 = vxor.u32 %v438, 2147483648
    %v440 = vmul.f32 %v439, 1.442695
    %v441 = vpow.pop %v440
    %v442 = vadd.f32 %v441, 1.0
    %v443 = vrcp.pop %v442
    %v444 = vmul.f32 1.0, %v443
    %v445 = vtanh.pop %v438
    %v446 = vmul.f32 %v444, 0.0
    %448 = vrot.lane.b32.xlu0 %v445, 64
    %v449 = vpop.permute.xlu0 %448
    %v451 = vmul.f32 %v444, %v449
    %453 = vrot.lane.b32.xlu0 %v451, 32
    %v454 = vpop.permute.xlu0 %453
    %v456 = vadd.f32 %v446, %v454
    %v457 = vtanh.pop %v456
    %459 = vrot.lane.b32.xlu0 %v457, 64
    %v460 = vpop.permute.xlu0 %459
    %v462 = vmul.f32 %v444, %v460
    %464 = vrot.lane.b32.xlu0 %v364, 32
    %v465 = vpop.permute.xlu0 %464
    %v466 = vsel %vm175, %v465, 0
    %468 = vmatprep.subr.mxu0 0.0
    %469 = vmatpush1.msra.mxu0 %v259
    %470 = vmatprep.subr.mxu0 0.0
    %471 = vmatpush1.msra.mxu0 %v260
    %472 = vmatprep.subr.mxu0 0.0
    %473 = vmatpush1.msra.mxu0 %v261
    %474 = vmatprep.subr.mxu0 0.0
    %475 = vmatpush1.msra.mxu0 %v262
    %476 = vmatprep.subr.mxu0 0.0
    %477 = vmatpush1.msra.mxu0 0.0
    %478 = vmatprep.subr.mxu0 0.0
    %479 = vmatpush1.msra.mxu0 0.0
    %480 = vmatprep.subr.mxu0 0.0
    %481 = vmatpush1.msra.mxu0 0.0
    %482 = vmatprep.subr.mxu0 0.0
    %483 = vmatpush1.msra.mxu0 0.0
    %484 = vmatprep.subr.mxu0 0.0
    %485 = vmatpush1.msra.mxu0 0.0
    %486 = vmatprep.subr.mxu0 0.0
    %487 = vmatpush1.msra.mxu0 0.0
    %488 = vmatprep.subr.mxu0 0.0
    %489 = vmatpush1.msra.mxu0 0.0
    %490 = vmatprep.subr.mxu0 0.0
    %491 = vmatpush1.msra.mxu0 0.0
    %492 = vmatprep.subr.mxu0 0.0
    %493 = vmatpush1.msra.mxu0 0.0
    %494 = vmatprep.subr.mxu0 0.0
    %495 = vmatpush1.msra.mxu0 0.0
    %496 = vmatprep.subr.mxu0 0.0
    %497 = vmatpush1.msra.mxu0 0.0
    %498 = vmatprep.subr.mxu0 0.0
    %499 = vmatpush1.msra.mxu0 0.0
    %500 = vmatprep.subr.mxu0 0.0
    %501 = vmatpush1.msra.mxu0 0.0
    %502 = vmatprep.subr.mxu0 0.0
    %503 = vmatpush1.msra.mxu0 0.0
    %504 = vmatprep.subr.mxu0 0.0
    %505 = vmatpush1.msra.mxu0 0.0
    %506 = vmatprep.subr.mxu0 0.0
    %507 = vmatpush1.msra.mxu0 0.0
    %508 = vmatprep.subr.mxu0 0.0
    %509 = vmatpush1.msra.mxu0 0.0
    %510 = vmatprep.subr.mxu0 0.0
    %511 = vmatpush1.msra.mxu0 0.0
    %512 = vmatprep.subr.mxu0 0.0
    %513 = vmatpush1.msra.mxu0 0.0
    %514 = vmatprep.subr.mxu0 0.0
    %515 = vmatpush1.msra.mxu0 0.0
    %516 = vmatprep.subr.mxu0 0.0
    %517 = vmatpush1.msra.mxu0 0.0
    %518 = vmatprep.subr.mxu0 0.0
    %519 = vmatpush1.msra.mxu0 0.0
    %520 = vmatprep.subr.mxu0 0.0
    %521 = vmatpush1.msra.mxu0 0.0
    %522 = vmatprep.subr.mxu0 0.0
    %523 = vmatpush1.msra.mxu0 0.0
    %524 = vmatprep.subr.mxu0 0.0
    %525 = vmatpush1.msra.mxu0 0.0
    %526 = vmatprep.subr.mxu0 0.0
    %527 = vmatpush1.msra.mxu0 0.0
    %528 = vmatprep.subr.mxu0 0.0
    %529 = vmatpush1.msra.mxu0 0.0
    %530 = vmatprep.subr.mxu0 0.0
    %531 = vmatpush1.msra.mxu0 0.0
    %532 = vmatprep.mubr.f32.mxu0 0.0
    %533 = vmatmul.mubr.f32.gmra.mrb[0].mxu0 %v466
    %v534 = vpop.f32.mrb[0].mxu0
    %v535 = vadd.f32 0.0, %v534
    %v536 = vpop.f32.mrb[0].mxu0
    %537 = vdwg.mxu0
    %v539 = vrot.slane %v535, 6
    %v541 = vadd.f32 %v249, %v539
    %v542 = vxor.u32 %v541, 2147483648
    %v543 = vmul.f32 %v542, 1.442695
    %v544 = vpow.pop %v543
    %v545 = vadd.f32 %v544, 1.0
    %v546 = vrcp.pop %v545
    %v547 = vmul.f32 1.0, %v546
    %v548 = vtanh.pop %v541
    %v550 = vrot.slane %v358, 6
    %v552 = vmul.f32 %v547, %v550
    %554 = vrot.lane.b32.xlu0 %v548, 64
    %v555 = vpop.permute.xlu0 %554
    %v557 = vmul.f32 %v547, %v555
    %559 = vrot.lane.b32.xlu0 %v557, 32
    %v560 = vpop.permute.xlu0 %559
    %v562 = vadd.f32 %v552, %v560
    %v563 = vtanh.pop %v562
    %565 = vrot.lane.b32.xlu0 %v563, 64
    %v566 = vpop.permute.xlu0 %565
    %v568 = vmul.f32 %v547, %v566
    %v570 = vrot.slane %v462, 6
    %571 = vrot.lane.b32.xlu0 %v570, 32
    %v572 = vpop.permute.xlu0 %571
    %v573 = vsel %vm175, %v572, 0
    %575 = vmatprep.subr.mxu0 0.0
    %576 = vmatpush1.msra.mxu0 %v263
    %577 = vmatprep.subr.mxu0 0.0
    %578 = vmatpush1.msra.mxu0 %v264
    %579 = vmatprep.subr.mxu0 0.0
    %580 = vmatpush1.msra.mxu0 %v265
    %581 = vmatprep.subr.mxu0 0.0
    %582 = vmatpush1.msra.mxu0 %v266
    %583 = vmatprep.subr.mxu0 0.0
    %584 = vmatpush1.msra.mxu0 0.0
    %585 = vmatprep.subr.mxu0 0.0
    %586 = vmatpush1.msra.mxu0 0.0
    %587 = vmatprep.subr.mxu0 0.0
    %588 = vmatpush1.msra.mxu0 0.0
    %589 = vmatprep.subr.mxu0 0.0
    %590 = vmatpush1.msra.mxu0 0.0
    %591 = vmatprep.subr.mxu0 0.0
    %592 = vmatpush1.msra.mxu0 0.0
    %593 = vmatprep.subr.mxu0 0.0
    %594 = vmatpush1.msra.mxu0 0.0
    %595 = vmatprep.subr.mxu0 0.0
    %596 = vmatpush1.msra.mxu0 0.0
    %597 = vmatprep.subr.mxu0 0.0
    %598 = vmatpush1.msra.mxu0 0.0
    %599 = vmatprep.subr.mxu0 0.0
    %600 = vmatpush1.msra.mxu0 0.0
    %601 = vmatprep.subr.mxu0 0.0
    %602 = vmatpush1.msra.mxu0 0.0
    %603 = vmatprep.subr.mxu0 0.0
    %604 = vmatpush1.msra.mxu0 0.0
    %605 = vmatprep.subr.mxu0 0.0
    %606 = vmatpush1.msra.mxu0 0.0
    %607 = vmatprep.subr.mxu0 0.0
    %608 = vmatpush1.msra.mxu0 0.0
    %609 = vmatprep.subr.mxu0 0.0
    %610 = vmatpush1.msra.mxu0 0.0
    %611 = vmatprep.subr.mxu0 0.0
    %612 = vmatpush1.msra.mxu0 0.0
    %613 = vmatprep.subr.mxu0 0.0
    %614 = vmatpush1.msra.mxu0 0.0
    %615 = vmatprep.subr.mxu0 0.0
    %616 = vmatpush1.msra.mxu0 0.0
    %617 = vmatprep.subr.mxu0 0.0
    %618 = vmatpush1.msra.mxu0 0.0
    %619 = vmatprep.subr.mxu0 0.0
    %620 = vmatpush1.msra.mxu0 0.0
    %621 = vmatprep.subr.mxu0 0.0
    %622 = vmatpush1.msra.mxu0 0.0
    %623 = vmatprep.subr.mxu0 0.0
    %624 = vmatpush1.msra.mxu0 0.0
    %625 = vmatprep.subr.mxu0 0.0
    %626 = vmatpush1.msra.mxu0 0.0
    %627 = vmatprep.subr.mxu0 0.0
    %628 = vmatpush1.msra.mxu0 0.0
    %629 = vmatprep.subr.mxu0 0.0
    %630 = vmatpush1.msra.mxu0 0.0
    %631 = vmatprep.subr.mxu0 0.0
    %632 = vmatpush1.msra.mxu0 0.0
    %633 = vmatprep.subr.mxu0 0.0
    %634 = vmatpush1.msra.mxu0 0.0
    %635 = vmatprep.subr.mxu0 0.0
    %636 = vmatpush1.msra.mxu0 0.0
    %637 = vmatprep.subr.mxu0 0.0
    %638 = vmatpush1.msra.mxu0 0.0
    %639 = vmatprep.mubr.f32.mxu0 0.0
    %640 = vmatmul.mubr.f32.gmra.mrb[0].mxu0 %v573
    %v641 = vpop.f32.mrb[0].mxu0
    %v642 = vadd.f32 0.0, %v641
    %v643 = vpop.f32.mrb[0].mxu0
    %644 = vdwg.mxu0
    %v646 = vrot.slane %v642, 4
    %v648 = vadd.f32 %v257, %v646
    %v649 = vxor.u32 %v648, 2147483648
    %v650 = vmul.f32 %v649, 1.442695
    %v651 = vpow.pop %v650
    %v652 = vadd.f32 %v651, 1.0
    %v653 = vrcp.pop %v652
    %v654 = vmul.f32 1.0, %v653
    %v655 = vtanh.pop %v648
    %v657 = vrot.slane %v456, 2
    %v659 = vmul.f32 %v654, %v657
    %661 = vrot.lane.b32.xlu0 %v655, 64
    %v662 = vpop.permute.xlu0 %661
    %v664 = vmul.f32 %v654, %v662
    %666 = vrot.lane.b32.xlu0 %v664, 32
    %v667 = vpop.permute.xlu0 %666
    %v669 = vadd.f32 %v659, %v667
    %v670 = vtanh.pop %v669
    %672 = vrot.lane.b32.xlu0 %v670, 64
    %v673 = vpop.permute.xlu0 %672
    %v675 = vmul.f32 %v654, %v673
    %v677 = vrot.slane %v568, 2
    %678 = vrot.lane.b32.xlu0 %v677, 32
    %v679 = vpop.permute.xlu0 %678
    %v680 = vsel %vm175, %v679, 0
    %682 = vmatprep.subr.mxu0 0.0
    %683 = vmatpush1.msra.mxu0 %v259
    %684 = vmatprep.subr.mxu0 0.0
    %685 = vmatpush1.msra.mxu0 %v260
    %686 = vmatprep.subr.mxu0 0.0
    %687 = vmatpush1.msra.mxu0 %v261
    %688 = vmatprep.subr.mxu0 0.0
    %689 = vmatpush1.msra.mxu0 %v262
    %690 = vmatprep.subr.mxu0 0.0
    %691 = vmatpush1.msra.mxu0 0.0
    %692 = vmatprep.subr.mxu0 0.0
    %693 = vmatpush1.msra.mxu0 0.0
    %694 = vmatprep.subr.mxu0 0.0
    %695 = vmatpush1.msra.mxu0 0.0
    %696 = vmatprep.subr.mxu0 0.0
    %697 = vmatpush1.msra.mxu0 0.0
    %698 = vmatprep.subr.mxu0 0.0
    %699 = vmatpush1.msra.mxu0 0.0
    %700 = vmatprep.subr.mxu0 0.0
    %701 = vmatpush1.msra.mxu0 0.0
    %702 = vmatprep.subr.mxu0 0.0
    %703 = vmatpush1.msra.mxu0 0.0
    %704 = vmatprep.subr.mxu0 0.0
    %705 = vmatpush1.msra.mxu0 0.0
    %706 = vmatprep.subr.mxu0 0.0
    %707 = vmatpush1.msra.mxu0 0.0
    %708 = vmatprep.subr.mxu0 0.0
    %709 = vmatpush1.msra.mxu0 0.0
    %710 = vmatprep.subr.mxu0 0.0
    %711 = vmatpush1.msra.mxu0 0.0
    %712 = vmatprep.subr.mxu0 0.0
    %713 = vmatpush1.msra.mxu0 0.0
    %714 = vmatprep.subr.mxu0 0.0
    %715 = vmatpush1.msra.mxu0 0.0
    %716 = vmatprep.subr.mxu0 0.0
    %717 = vmatpush1.msra.mxu0 0.0
    %718 = vmatprep.subr.mxu0 0.0
    %719 = vmatpush1.msra.mxu0 0.0
    %720 = vmatprep.subr.mxu0 0.0
    %721 = vmatpush1.msra.mxu0 0.0
    %722 = vmatprep.subr.mxu0 0.0
    %723 = vmatpush1.msra.mxu0 0.0
    %724 = vmatprep.subr.mxu0 0.0
    %725 = vmatpush1.msra.mxu0 0.0
    %726 = vmatprep.subr.mxu0 0.0
    %727 = vmatpush1.msra.mxu0 0.0
    %728 = vmatprep.subr.mxu0 0.0
    %729 = vmatpush1.msra.mxu0 0.0
    %730 = vmatprep.subr.mxu0 0.0
    %731 = vmatpush1.msra.mxu0 0.0
    %732 = vmatprep.subr.mxu0 0.0
    %733 = vmatpush1.msra.mxu0 0.0
    %734 = vmatprep.subr.mxu0 0.0
    %735 = vmatpush1.msra.mxu0 0.0
    %736 = vmatprep.subr.mxu0 0.0
    %737 = vmatpush1.msra.mxu0 0.0
    %738 = vmatprep.subr.mxu0 0.0
    %739 = vmatpush1.msra.mxu0 0.0
    %740 = vmatprep.subr.mxu0 0.0
    %741 = vmatpush1.msra.mxu0 0.0
    %742 = vmatprep.subr.mxu0 0.0
    %743 = vmatpush1.msra.mxu0 0.0
    %744 = vmatprep.subr.mxu0 0.0
    %745 = vmatpush1.msra.mxu0 0.0
    %746 = vmatprep.mubr.f32.mxu0 0.0
    %747 = vmatmul.mubr.f32.gmra.mrb[0].mxu0 %v680
    %v748 = vpop.f32.mrb[0].mxu0
    %v749 = vadd.f32 0.0, %v748
    %v750 = vpop.f32.mrb[0].mxu0
    %751 = vdwg.mxu0
    %v753 = vrot.slane %v749, 4
    %v755 = vadd.f32 %v249, %v753
    %v756 = vxor.u32 %v755, 2147483648
    %v757 = vmul.f32 %v756, 1.442695
    %v758 = vpow.pop %v757
    %v759 = vadd.f32 %v758, 1.0
    %v760 = vrcp.pop %v759
    %v761 = vmul.f32 1.0, %v760
    %v762 = vtanh.pop %v755
    %v764 = vrot.slane %v562, 6
    %v766 = vmul.f32 %v761, %v764
    %768 = vrot.lane.b32.xlu0 %v762, 64
    %v769 = vpop.permute.xlu0 %768
    %v771 = vmul.f32 %v761, %v769
    %773 = vrot.lane.b32.xlu0 %v771, 32
    %v774 = vpop.permute.xlu0 %773
    %v776 = vadd.f32 %v766, %v774
    %v777 = vtanh.pop %v776
    %779 = vrot.lane.b32.xlu0 %v777, 64
    %v780 = vpop.permute.xlu0 %779
    %v782 = vmul.f32 %v761, %v780
    %v784 = vrot.slane %v675, 4
    %785 = vrot.lane.b32.xlu0 %v784, 32
    %v786 = vpop.permute.xlu0 %785
    %v787 = vsel %vm175, %v786, 0
    %789 = vmatprep.subr.mxu0 0.0
    %790 = vmatpush1.msra.mxu0 %v263
    %791 = vmatprep.subr.mxu0 0.0
    %792 = vmatpush1.msra.mxu0 %v264
    %793 = vmatprep.subr.mxu0 0.0
    %794 = vmatpush1.msra.mxu0 %v265
    %795 = vmatprep.subr.mxu0 0.0
    %796 = vmatpush1.msra.mxu0 %v266
    %797 = vmatprep.subr.mxu0 0.0
    %798 = vmatpush1.msra.mxu0 0.0
    %799 = vmatprep.subr.mxu0 0.0
    %800 = vmatpush1.msra.mxu0 0.0
    %801 = vmatprep.subr.mxu0 0.0
    %802 = vmatpush1.msra.mxu0 0.0
    %803 = vmatprep.subr.mxu0 0.0
    %804 = vmatpush1.msra.mxu0 0.0
    %805 = vmatprep.subr.mxu0 0.0
    %806 = vmatpush1.msra.mxu0 0.0
    %807 = vmatprep.subr.mxu0 0.0
    %808 = vmatpush1.msra.mxu0 0.0
    %809 = vmatprep.subr.mxu0 0.0
    %810 = vmatpush1.msra.mxu0 0.0
    %811 = vmatprep.subr.mxu0 0.0
    %812 = vmatpush1.msra.mxu0 0.0
    %813 = vmatprep.subr.mxu0 0.0
    %814 = vmatpush1.msra.mxu0 0.0
    %815 = vmatprep.subr.mxu0 0.0
    %816 = vmatpush1.msra.mxu0 0.0
    %817 = vmatprep.subr.mxu0 0.0
    %818 = vmatpush1.msra.mxu0 0.0
    %819 = vmatprep.subr.mxu0 0.0
    %820 = vmatpush1.msra.mxu0 0.0
    %821 = vmatprep.subr.mxu0 0.0
    %822 = vmatpush1.msra.mxu0 0.0
    %823 = vmatprep.subr.mxu0 0.0
    %824 = vmatpush1.msra.mxu0 0.0
    %825 = vmatprep.subr.mxu0 0.0
    %826 = vmatpush1.msra.mxu0 0.0
    %827 = vmatprep.subr.mxu0 0.0
    %828 = vmatpush1.msra.mxu0 0.0
    %829 = vmatprep.subr.mxu0 0.0
    %830 = vmatpush1.msra.mxu0 0.0
    %831 = vmatprep.subr.mxu0 0.0
    %832 = vmatpush1.msra.mxu0 0.0
    %833 = vmatprep.subr.mxu0 0.0
    %834 = vmatpush1.msra.mxu0 0.0
    %835 = vmatprep.subr.mxu0 0.0
    %836 = vmatpush1.msra.mxu0 0.0
    %837 = vmatprep.subr.mxu0 0.0
    %838 = vmatpush1.msra.mxu0 0.0
    %839 = vmatprep.subr.mxu0 0.0
    %840 = vmatpush1.msra.mxu0 0.0
    %841 = vmatprep.subr.mxu0 0.0
    %842 = vmatpush1.msra.mxu0 0.0
    %843 = vmatprep.subr.mxu0 0.0
    %844 = vmatpush1.msra.mxu0 0.0
    %845 = vmatprep.subr.mxu0 0.0
    %846 = vmatpush1.msra.mxu0 0.0
    %847 = vmatprep.subr.mxu0 0.0
    %848 = vmatpush1.msra.mxu0 0.0
    %849 = vmatprep.subr.mxu0 0.0
    %850 = vmatpush1.msra.mxu0 0.0
    %851 = vmatprep.subr.mxu0 0.0
    %852 = vmatpush1.msra.mxu0 0.0
    %853 = vmatprep.mubr.f32.mxu0 0.0
    %854 = vmatmul.mubr.f32.gmra.mrb[0].mxu0 %v787
    %v855 = vpop.f32.mrb[0].mxu0
    %v856 = vadd.f32 0.0, %v855
    %v857 = vpop.f32.mrb[0].mxu0
    %858 = vdwg.mxu0
    %v860 = vrot.slane %v856, 6
    %v862 = vadd.f32 %v257, %v860
    %v863 = vxor.u32 %v862, 2147483648
    %v864 = vmul.f32 %v863, 1.442695
    %v865 = vpow.pop %v864
    %v866 = vadd.f32 %v865, 1.0
    %v867 = vrcp.pop %v866
    %v868 = vmul.f32 1.0, %v867
    %v869 = vtanh.pop %v862
    %v871 = vrot.slane %v669, 2
    %v873 = vmul.f32 %v868, %v871
    %875 = vrot.lane.b32.xlu0 %v869, 64
    %v876 = vpop.permute.xlu0 %875
    %v878 = vmul.f32 %v868, %v876
    %880 = vrot.lane.b32.xlu0 %v878, 32
    %v881 = vpop.permute.xlu0 %880
    %v883 = vadd.f32 %v873, %v881
    %v884 = vtanh.pop %v883
    %886 = vrot.lane.b32.xlu0 %v884, 64
    %v887 = vpop.permute.xlu0 %886
    %v889 = vmul.f32 %v868, %v887
    %v891 = vrot.slane %v782, 4
    %892 = vrot.lane.b32.xlu0 %v891, 32
    %v893 = vpop.permute.xlu0 %892
    %v894 = vsel %vm175, %v893, 0
    %896 = vmatprep.subr.mxu0 0.0
    %897 = vmatpush1.msra.mxu0 %v259
    %898 = vmatprep.subr.mxu0 0.0
    %899 = vmatpush1.msra.mxu0 %v260
    %900 = vmatprep.subr.mxu0 0.0
    %901 = vmatpush1.msra.mxu0 %v261
    %902 = vmatprep.subr.mxu0 0.0
    %903 = vmatpush1.msra.mxu0 %v262
    %904 = vmatprep.subr.mxu0 0.0
    %905 = vmatpush1.msra.mxu0 0.0
    %906 = vmatprep.subr.mxu0 0.0
    %907 = vmatpush1.msra.mxu0 0.0
    %908 = vmatprep.subr.mxu0 0.0
    %909 = vmatpush1.msra.mxu0 0.0
    %910 = vmatprep.subr.mxu0 0.0
    %911 = vmatpush1.msra.mxu0 0.0
    %912 = vmatprep.subr.mxu0 0.0
    %913 = vmatpush1.msra.mxu0 0.0
    %914 = vmatprep.subr.mxu0 0.0
    %915 = vmatpush1.msra.mxu0 0.0
    %916 = vmatprep.subr.mxu0 0.0
    %917 = vmatpush1.msra.mxu0 0.0
    %918 = vmatprep.subr.mxu0 0.0
    %919 = vmatpush1.msra.mxu0 0.0
    %920 = vmatprep.subr.mxu0 0.0
    %921 = vmatpush1.msra.mxu0 0.0
    %922 = vmatprep.subr.mxu0 0.0
    %923 = vmatpush1.msra.mxu0 0.0
    %924 = vmatprep.subr.mxu0 0.0
    %925 = vmatpush1.msra.mxu0 0.0
    %926 = vmatprep.subr.mxu0 0.0
    %927 = vmatpush1.msra.mxu0 0.0
    %928 = vmatprep.subr.mxu0 0.0
    %929 = vmatpush1.msra.mxu0 0.0
    %930 = vmatprep.subr.mxu0 0.0
    %931 = vmatpush1.msra.mxu0 0.0
    %932 = vmatprep.subr.mxu0 0.0
    %933 = vmatpush1.msra.mxu0 0.0
    %934 = vmatprep.subr.mxu0 0.0
    %935 = vmatpush1.msra.mxu0 0.0
    %936 = vmatprep.subr.mxu0 0.0
    %937 = vmatpush1.msra.mxu0 0.0
    %938 = vmatprep.subr.mxu0 0.0
    %939 = vmatpush1.msra.mxu0 0.0
    %940 = vmatprep.subr.mxu0 0.0
    %941 = vmatpush1.msra.mxu0 0.0
    %942 = vmatprep.subr.mxu0 0.0
    %943 = vmatpush1.msra.mxu0 0.0
    %944 = vmatprep.subr.mxu0 0.0
    %945 = vmatpush1.msra.mxu0 0.0
    %946 = vmatprep.subr.mxu0 0.0
    %947 = vmatpush1.msra.mxu0 0.0
    %948 = vmatprep.subr.mxu0 0.0
    %949 = vmatpush1.msra.mxu0 0.0
    %950 = vmatprep.subr.mxu0 0.0
    %951 = vmatpush1.msra.mxu0 0.0
    %952 = vmatprep.subr.mxu0 0.0
    %953 = vmatpush1.msra.mxu0 0.0
    %954 = vmatprep.subr.mxu0 0.0
    %955 = vmatpush1.msra.mxu0 0.0
    %956 = vmatprep.subr.mxu0 0.0
    %957 = vmatpush1.msra.mxu0 0.0
    %958 = vmatprep.subr.mxu0 0.0
    %959 = vmatpush1.msra.mxu0 0.0
    %960 = vmatprep.mubr.f32.mxu0 0.0
    %961 = vmatmul.mubr.f32.gmra.mrb[0].mxu0 %v894
    %v962 = vpop.f32.mrb[0].mxu0
    %v963 = vadd.f32 0.0, %v962
    %v964 = vpop.f32.mrb[0].mxu0
    %965 = vdwg.mxu0
    %v967 = vrot.slane %v963, 2
    %v969 = vadd.f32 %v249, %v967
    %v970 = vxor.u32 %v969, 2147483648
    %v971 = vmul.f32 %v970, 1.442695
    %v972 = vpow.pop %v971
    %v973 = vadd.f32 %v972, 1.0
    %v974 = vrcp.pop %v973
    %v975 = vmul.f32 1.0, %v974
    %v976 = vtanh.pop %v969
    %v978 = vrot.slane %v776, 6
    %v980 = vmul.f32 %v975, %v978
    %982 = vrot.lane.b32.xlu0 %v976, 64
    %v983 = vpop.permute.xlu0 %982
    %v985 = vmul.f32 %v975, %v983
    %987 = vrot.lane.b32.xlu0 %v985, 32
    %v988 = vpop.permute.xlu0 %987
    %v990 = vadd.f32 %v980, %v988
    %v991 = vtanh.pop %v990
    %993 = vrot.lane.b32.xlu0 %v991, 64
    %v994 = vpop.permute.xlu0 %993
    %v996 = vmul.f32 %v975, %v994
    %v998 = vrot.slane %v889, 2
    %999 = vrot.lane.b32.xlu0 %v998, 32
    %v1000 = vpop.permute.xlu0 %999
    %v1001 = vsel %vm175, %v1000, 0
    %1003 = vmatprep.subr.mxu0 0.0
    %1004 = vmatpush1.msra.mxu0 %v263
    %1005 = vmatprep.subr.mxu0 0.0
    %1006 = vmatpush1.msra.mxu0 %v264
    %1007 = vmatprep.subr.mxu0 0.0
    %1008 = vmatpush1.msra.mxu0 %v265
    %1009 = vmatprep.subr.mxu0 0.0
    %1010 = vmatpush1.msra.mxu0 %v266
    %1011 = vmatprep.subr.mxu0 0.0
    %1012 = vmatpush1.msra.mxu0 0.0
    %1013 = vmatprep.subr.mxu0 0.0
    %1014 = vmatpush1.msra.mxu0 0.0
    %1015 = vmatprep.subr.mxu0 0.0
    %1016 = vmatpush1.msra.mxu0 0.0
    %1017 = vmatprep.subr.mxu0 0.0
    %1018 = vmatpush1.msra.mxu0 0.0
    %1019 = vmatprep.subr.mxu0 0.0
    %1020 = vmatpush1.msra.mxu0 0.0
    %1021 = vmatprep.subr.mxu0 0.0
    %1022 = vmatpush1.msra.mxu0 0.0
    %1023 = vmatprep.subr.mxu0 0.0
    %1024 = vmatpush1.msra.mxu0 0.0
    %1025 = vmatprep.subr.mxu0 0.0
    %1026 = vmatpush1.msra.mxu0 0.0
    %1027 = vmatprep.subr.mxu0 0.0
    %1028 = vmatpush1.msra.mxu0 0.0
    %1029 = vmatprep.subr.mxu0 0.0
    %1030 = vmatpush1.msra.mxu0 0.0
    %1031 = vmatprep.subr.mxu0 0.0
    %1032 = vmatpush1.msra.mxu0 0.0
    %1033 = vmatprep.subr.mxu0 0.0
    %1034 = vmatpush1.msra.mxu0 0.0
    %1035 = vmatprep.subr.mxu0 0.0
    %1036 = vmatpush1.msra.mxu0 0.0
    %1037 = vmatprep.subr.mxu0 0.0
    %1038 = vmatpush1.msra.mxu0 0.0
    %1039 = vmatprep.subr.mxu0 0.0
    %1040 = vmatpush1.msra.mxu0 0.0
    %1041 = vmatprep.subr.mxu0 0.0
    %1042 = vmatpush1.msra.mxu0 0.0
    %1043 = vmatprep.subr.mxu0 0.0
    %1044 = vmatpush1.msra.mxu0 0.0
    %1045 = vmatprep.subr.mxu0 0.0
    %1046 = vmatpush1.msra.mxu0 0.0
    %1047 = vmatprep.subr.mxu0 0.0
    %1048 = vmatpush1.msra.mxu0 0.0
    %1049 = vmatprep.subr.mxu0 0.0
    %1050 = vmatpush1.msra.mxu0 0.0
    %1051 = vmatprep.subr.mxu0 0.0
    %1052 = vmatpush1.msra.mxu0 0.0
    %1053 = vmatprep.subr.mxu0 0.0
    %1054 = vmatpush1.msra.mxu0 0.0
    %1055 = vmatprep.subr.mxu0 0.0
    %1056 = vmatpush1.msra.mxu0 0.0
    %1057 = vmatprep.subr.mxu0 0.0
    %1058 = vmatpush1.msra.mxu0 0.0
    %1059 = vmatprep.subr.mxu0 0.0
    %1060 = vmatpush1.msra.mxu0 0.0
    %1061 = vmatprep.subr.mxu0 0.0
    %1062 = vmatpush1.msra.mxu0 0.0
    %1063 = vmatprep.subr.mxu0 0.0
    %1064 = vmatpush1.msra.mxu0 0.0
    %1065 = vmatprep.subr.mxu0 0.0
    %1066 = vmatpush1.msra.mxu0 0.0
    %1067 = vmatprep.mubr.f32.mxu0 0.0
    %1068 = vmatmul.mubr.f32.gmra.mrb[0].mxu0 %v1001
    %v1069 = vpop.f32.mrb[0].mxu0
    %v1070 = vadd.f32 0.0, %v1069
    %v1071 = vpop.f32.mrb[0].mxu0
    %1072 = vdwg.mxu0
    %v1073 = vadd.f32 %v257, %v1070
    %v1074 = vxor.u32 %v1073, 2147483648
    %v1075 = vmul.f32 %v1074, 1.442695
    %v1076 = vpow.pop %v1075
    %v1077 = vadd.f32 %v1076, 1.0
    %v1078 = vrcp.pop %v1077
    %v1079 = vmul.f32 1.0, %v1078
    %v1080 = vtanh.pop %v1073
    %v1082 = vrot.slane %v883, 2
    %v1084 = vmul.f32 %v1079, %v1082
    %1086 = vrot.lane.b32.xlu0 %v1080, 64
    %v1087 = vpop.permute.xlu0 %1086
    %v1089 = vmul.f32 %v1079, %v1087
    %1091 = vrot.lane.b32.xlu0 %v1089, 32
    %v1092 = vpop.permute.xlu0 %1091
    %v1094 = vadd.f32 %v1084, %v1092
    %v1095 = vtanh.pop %v1094
    %1097 = vrot.lane.b32.xlu0 %v1095, 64
    %v1098 = vpop.permute.xlu0 %1097
    %v1100 = vmul.f32 %v1079, %v1098
    %v1102 = vrot.slane %v996, 6
    %1103 = vrot.lane.b32.xlu0 %v1102, 32
    %v1104 = vpop.permute.xlu0 %1103
    %v1105 = vsel %vm175, %v1104, 0
    %1107 = vmatprep.subr.mxu0 0.0
    %1108 = vmatpush1.msra.mxu0 %v259
    %1109 = vmatprep.subr.mxu0 0.0
    %1110 = vmatpush1.msra.mxu0 %v260
    %1111 = vmatprep.subr.mxu0 0.0
    %1112 = vmatpush1.msra.mxu0 %v261
    %1113 = vmatprep.subr.mxu0 0.0
    %1114 = vmatpush1.msra.mxu0 %v262
    %1115 = vmatprep.subr.mxu0 0.0
    %1116 = vmatpush1.msra.mxu0 0.0
    %1117 = vmatprep.subr.mxu0 0.0
    %1118 = vmatpush1.msra.mxu0 0.0
    %1119 = vmatprep.subr.mxu0 0.0
    %1120 = vmatpush1.msra.mxu0 0.0
    %1121 = vmatprep.subr.mxu0 0.0
    %1122 = vmatpush1.msra.mxu0 0.0
    %1123 = vmatprep.subr.mxu0 0.0
    %1124 = vmatpush1.msra.mxu0 0.0
    %1125 = vmatprep.subr.mxu0 0.0
    %1126 = vmatpush1.msra.mxu0 0.0
    %1127 = vmatprep.subr.mxu0 0.0
    %1128 = vmatpush1.msra.mxu0 0.0
    %1129 = vmatprep.subr.mxu0 0.0
    %1130 = vmatpush1.msra.mxu0 0.0
    %1131 = vmatprep.subr.mxu0 0.0
    %1132 = vmatpush1.msra.mxu0 0.0
    %1133 = vmatprep.subr.mxu0 0.0
    %1134 = vmatpush1.msra.mxu0 0.0
    %1135 = vmatprep.subr.mxu0 0.0
    %1136 = vmatpush1.msra.mxu0 0.0
    %1137 = vmatprep.subr.mxu0 0.0
    %1138 = vmatpush1.msra.mxu0 0.0
    %1139 = vmatprep.subr.mxu0 0.0
    %1140 = vmatpush1.msra.mxu0 0.0
    %1141 = vmatprep.subr.mxu0 0.0
    %1142 = vmatpush1.msra.mxu0 0.0
    %1143 = vmatprep.subr.mxu0 0.0
    %1144 = vmatpush1.msra.mxu0 0.0
    %1145 = vmatprep.subr.mxu0 0.0
    %1146 = vmatpush1.msra.mxu0 0.0
    %1147 = vmatprep.subr.mxu0 0.0
    %1148 = vmatpush1.msra.mxu0 0.0
    %1149 = vmatprep.subr.mxu0 0.0
    %1150 = vmatpush1.msra.mxu0 0.0
    %1151 = vmatprep.subr.mxu0 0.0
    %1152 = vmatpush1.msra.mxu0 0.0
    %1153 = vmatprep.subr.mxu0 0.0
    %1154 = vmatpush1.msra.mxu0 0.0
    %1155 = vmatprep.subr.mxu0 0.0
    %1156 = vmatpush1.msra.mxu0 0.0
    %1157 = vmatprep.subr.mxu0 0.0
    %1158 = vmatpush1.msra.mxu0 0.0
    %1159 = vmatprep.subr.mxu0 0.0
    %1160 = vmatpush1.msra.mxu0 0.0
    %1161 = vmatprep.subr.mxu0 0.0
    %1162 = vmatpush1.msra.mxu0 0.0
    %1163 = vmatprep.subr.mxu0 0.0
    %1164 = vmatpush1.msra.mxu0 0.0
    %1165 = vmatprep.subr.mxu0 0.0
    %1166 = vmatpush1.msra.mxu0 0.0
    %1167 = vmatprep.subr.mxu0 0.0
    %1168 = vmatpush1.msra.mxu0 0.0
    %1169 = vmatprep.subr.mxu0 0.0
    %1170 = vmatpush1.msra.mxu0 0.0
    %1171 = vmatprep.mubr.f32.mxu0 0.0
    %1172 = vmatmul.mubr.f32.gmra.mrb[0].mxu0 %v1105
    %v1173 = vpop.f32.mrb[0].mxu0
    %v1174 = vadd.f32 0.0, %v1173
    %v1175 = vpop.f32.mrb[0].mxu0
    %1176 = vdwg.mxu0
    %v1177 = vadd.f32 %v255, %v1174
    %v1178 = vxor.u32 %v1177, 2147483648
    %v1179 = vmul.f32 %v1178, 1.442695
    %v1180 = vpow.pop %v1179
    %v1181 = vadd.f32 %v1180, 1.0
    %v1182 = vrcp.pop %v1181
    %v1183 = vmul.f32 1.0, %v1182
    %v1184 = vtanh.pop %v1177
    %v1186 = vrot.slane %v990, 6
    %v1188 = vmul.f32 %v1183, %v1186
    %1190 = vrot.lane.b32.xlu0 %v1184, 64
    %v1191 = vpop.permute.xlu0 %1190
    %v1193 = vmul.f32 %v1183, %v1191
    %1195 = vrot.lane.b32.xlu0 %v1193, 32
    %v1196 = vpop.permute.xlu0 %1195
    %v1198 = vadd.f32 %v1188, %v1196
    %v1199 = vtanh.pop %v1198
    %1201 = vrot.lane.b32.xlu0 %v1199, 64
    %v1202 = vpop.permute.xlu0 %1201
    %v1204 = vmul.f32 %v1183, %v1202
    %1206 = vrot.lane.b32.xlu0 %v1100, 32
    %v1207 = vpop.permute.xlu0 %1206
    %v1208 = vsel %vm175, %v1207, 0
    %1210 = vmatprep.subr.mxu0 0.0
    %1211 = vmatpush1.msra.mxu0 %v263
    %1212 = vmatprep.subr.mxu0 0.0
    %1213 = vmatpush1.msra.mxu0 %v264
    %1214 = vmatprep.subr.mxu0 0.0
    %1215 = vmatpush1.msra.mxu0 %v265
    %1216 = vmatprep.subr.mxu0 0.0
    %1217 = vmatpush1.msra.mxu0 %v266
    %1218 = vmatprep.subr.mxu0 0.0
    %1219 = vmatpush1.msra.mxu0 0.0
    %1220 = vmatprep.subr.mxu0 0.0
    %1221 = vmatpush1.msra.mxu0 0.0
    %1222 = vmatprep.subr.mxu0 0.0
    %1223 = vmatpush1.msra.mxu0 0.0
    %1224 = vmatprep.subr.mxu0 0.0
    %1225 = vmatpush1.msra.mxu0 0.0
    %1226 = vmatprep.subr.mxu0 0.0
    %1227 = vmatpush1.msra.mxu0 0.0
    %1228 = vmatprep.subr.mxu0 0.0
    %1229 = vmatpush1.msra.mxu0 0.0
    %1230 = vmatprep.subr.mxu0 0.0
    %1231 = vmatpush1.msra.mxu0 0.0
    %1232 = vmatprep.subr.mxu0 0.0
    %1233 = vmatpush1.msra.mxu0 0.0
    %1234 = vmatprep.subr.mxu0 0.0
    %1235 = vmatpush1.msra.mxu0 0.0
    %1236 = vmatprep.subr.mxu0 0.0
    %1237 = vmatpush1.msra.mxu0 0.0
    %1238 = vmatprep.subr.mxu0 0.0
    %1239 = vmatpush1.msra.mxu0 0.0
    %1240 = vmatprep.subr.mxu0 0.0
    %1241 = vmatpush1.msra.mxu0 0.0
    %1242 = vmatprep.subr.mxu0 0.0
    %1243 = vmatpush1.msra.mxu0 0.0
    %1244 = vmatprep.subr.mxu0 0.0
    %1245 = vmatpush1.msra.mxu0 0.0
    %1246 = vmatprep.subr.mxu0 0.0
    %1247 = vmatpush1.msra.mxu0 0.0
    %1248 = vmatprep.subr.mxu0 0.0
    %1249 = vmatpush1.msra.mxu0 0.0
    %1250 = vmatprep.subr.mxu0 0.0
    %1251 = vmatpush1.msra.mxu0 0.0
    %1252 = vmatprep.subr.mxu0 0.0
    %1253 = vmatpush1.msra.mxu0 0.0
    %1254 = vmatprep.subr.mxu0 0.0
    %1255 = vmatpush1.msra.mxu0 0.0
    %1256 = vmatprep.subr.mxu0 0.0
    %1257 = vmatpush1.msra.mxu0 0.0
    %1258 = vmatprep.subr.mxu0 0.0
    %1259 = vmatpush1.msra.mxu0 0.0
    %1260 = vmatprep.subr.mxu0 0.0
    %1261 = vmatpush1.msra.mxu0 0.0
    %1262 = vmatprep.subr.mxu0 0.0
    %1263 = vmatpush1.msra.mxu0 0.0
    %1264 = vmatprep.subr.mxu0 0.0
    %1265 = vmatpush1.msra.mxu0 0.0
    %1266 = vmatprep.subr.mxu0 0.0
    %1267 = vmatpush1.msra.mxu0 0.0
    %1268 = vmatprep.subr.mxu0 0.0
    %1269 = vmatpush1.msra.mxu0 0.0
    %1270 = vmatprep.subr.mxu0 0.0
    %1271 = vmatpush1.msra.mxu0 0.0
    %1272 = vmatprep.subr.mxu0 0.0
    %1273 = vmatpush1.msra.mxu0 0.0
    %1274 = vmatprep.mubr.f32.mxu0 0.0
    %1275 = vmatmul.mubr.f32.gmra.mrb[0].mxu0 %v1208
    %v1276 = vpop.f32.mrb[0].mxu0
    %v1277 = vadd.f32 0.0, %v1276
    %v1278 = vpop.f32.mrb[0].mxu0
    %1279 = vdwg.mxu0
    %v1281 = vrot.slane %v1277, 2
    %v1283 = vadd.f32 %v251, %v1281
    %v1284 = vxor.u32 %v1283, 2147483648
    %v1285 = vmul.f32 %v1284, 1.442695
    %v1286 = vpow.pop %v1285
    %v1287 = vadd.f32 %v1286, 1.0
    %v1288 = vrcp.pop %v1287
    %v1289 = vmul.f32 1.0, %v1288
    %v1290 = vtanh.pop %v1283
    %v1292 = vrot.slane %v1094, 2
    %v1294 = vmul.f32 %v1289, %v1292
    %1296 = vrot.lane.b32.xlu0 %v1290, 64
    %v1297 = vpop.permute.xlu0 %1296
    %v1299 = vmul.f32 %v1289, %v1297
    %1301 = vrot.lane.b32.xlu0 %v1299, 32
    %v1302 = vpop.permute.xlu0 %1301
    %v1304 = vadd.f32 %v1294, %v1302
    %v1305 = vtanh.pop %v1304
    %1307 = vrot.lane.b32.xlu0 %v1305, 64
    %v1308 = vpop.permute.xlu0 %1307
    %v1310 = vmul.f32 %v1289, %v1308
    %1312 = vrot.lane.b32.xlu0 %v1204, 32
    %v1313 = vpop.permute.xlu0 %1312
    %v1314 = vsel %vm175, %v1313, 0
    %1316 = vmatprep.subr.mxu0 0.0
    %1317 = vmatpush1.msra.mxu0 %v259
    %1318 = vmatprep.subr.mxu0 0.0
    %1319 = vmatpush1.msra.mxu0 %v260
    %1320 = vmatprep.subr.mxu0 0.0
    %1321 = vmatpush1.msra.mxu0 %v261
    %1322 = vmatprep.subr.mxu0 0.0
    %1323 = vmatpush1.msra.mxu0 %v262
    %1324 = vmatprep.subr.mxu0 0.0
    %1325 = vmatpush1.msra.mxu0 0.0
    %1326 = vmatprep.subr.mxu0 0.0
    %1327 = vmatpush1.msra.mxu0 0.0
    %1328 = vmatprep.subr.mxu0 0.0
    %1329 = vmatpush1.msra.mxu0 0.0
    %1330 = vmatprep.subr.mxu0 0.0
    %1331 = vmatpush1.msra.mxu0 0.0
    %1332 = vmatprep.subr.mxu0 0.0
    %1333 = vmatpush1.msra.mxu0 0.0
    %1334 = vmatprep.subr.mxu0 0.0
    %1335 = vmatpush1.msra.mxu0 0.0
    %1336 = vmatprep.subr.mxu0 0.0
    %1337 = vmatpush1.msra.mxu0 0.0
    %1338 = vmatprep.subr.mxu0 0.0
    %1339 = vmatpush1.msra.mxu0 0.0
    %1340 = vmatprep.subr.mxu0 0.0
    %1341 = vmatpush1.msra.mxu0 0.0
    %1342 = vmatprep.subr.mxu0 0.0
    %1343 = vmatpush1.msra.mxu0 0.0
    %1344 = vmatprep.subr.mxu0 0.0
    %1345 = vmatpush1.msra.mxu0 0.0
    %1346 = vmatprep.subr.mxu0 0.0
    %1347 = vmatpush1.msra.mxu0 0.0
    %1348 = vmatprep.subr.mxu0 0.0
    %1349 = vmatpush1.msra.mxu0 0.0
    %1350 = vmatprep.subr.mxu0 0.0
    %1351 = vmatpush1.msra.mxu0 0.0
    %1352 = vmatprep.subr.mxu0 0.0
    %1353 = vmatpush1.msra.mxu0 0.0
    %1354 = vmatprep.subr.mxu0 0.0
    %1355 = vmatpush1.msra.mxu0 0.0
    %1356 = vmatprep.subr.mxu0 0.0
    %1357 = vmatpush1.msra.mxu0 0.0
    %1358 = vmatprep.subr.mxu0 0.0
    %1359 = vmatpush1.msra.mxu0 0.0
    %1360 = vmatprep.subr.mxu0 0.0
    %1361 = vmatpush1.msra.mxu0 0.0
    %1362 = vmatprep.subr.mxu0 0.0
    %1363 = vmatpush1.msra.mxu0 0.0
    %1364 = vmatprep.subr.mxu0 0.0
    %1365 = vmatpush1.msra.mxu0 0.0
    %1366 = vmatprep.subr.mxu0 0.0
    %1367 = vmatpush1.msra.mxu0 0.0
    %1368 = vmatprep.subr.mxu0 0.0
    %1369 = vmatpush1.msra.mxu0 0.0
    %1370 = vmatprep.subr.mxu0 0.0
    %1371 = vmatpush1.msra.mxu0 0.0
    %1372 = vmatprep.subr.mxu0 0.0
    %1373 = vmatpush1.msra.mxu0 0.0
    %1374 = vmatprep.subr.mxu0 0.0
    %1375 = vmatpush1.msra.mxu0 0.0
    %1376 = vmatprep.subr.mxu0 0.0
    %1377 = vmatpush1.msra.mxu0 0.0
    %1378 = vmatprep.subr.mxu0 0.0
    %1379 = vmatpush1.msra.mxu0 0.0
    %1380 = vmatprep.mubr.f32.mxu0 0.0
    %1381 = vmatmul.mubr.f32.gmra.mrb[0].mxu0 %v1314
    %v1382 = vpop.f32.mrb[0].mxu0
    %v1383 = vadd.f32 0.0, %v1382
    %v1384 = vpop.f32.mrb[0].mxu0
    %1385 = vdwg.mxu0
    %v1387 = vrot.slane %v1383, 6
    %v1389 = vadd.f32 %v255, %v1387
    %v1390 = vxor.u32 %v1389, 2147483648
    %v1391 = vmul.f32 %v1390, 1.442695
    %v1392 = vpow.pop %v1391
    %v1393 = vadd.f32 %v1392, 1.0
    %v1394 = vrcp.pop %v1393
    %v1395 = vmul.f32 1.0, %v1394
    %v1396 = vtanh.pop %v1389
    %v1398 = vrot.slane %v1198, 6
    %v1400 = vmul.f32 %v1395, %v1398
    %1402 = vrot.lane.b32.xlu0 %v1396, 64
    %v1403 = vpop.permute.xlu0 %1402
    %v1405 = vmul.f32 %v1395, %v1403
    %1407 = vrot.lane.b32.xlu0 %v1405, 32
    %v1408 = vpop.permute.xlu0 %1407
    %v1410 = vadd.f32 %v1400, %v1408
    %v1411 = vtanh.pop %v1410
    %1413 = vrot.lane.b32.xlu0 %v1411, 64
    %v1414 = vpop.permute.xlu0 %1413
    %v1416 = vmul.f32 %v1395, %v1414
    %v1418 = vrot.slane %v1310, 6
    %1419 = vrot.lane.b32.xlu0 %v1418, 32
    %v1420 = vpop.permute.xlu0 %1419
    %v1421 = vsel %vm175, %v1420, 0
    %1423 = vmatprep.subr.mxu0 0.0
    %1424 = vmatpush1.msra.mxu0 %v263
    %1425 = vmatprep.subr.mxu0 0.0
    %1426 = vmatpush1.msra.mxu0 %v264
    %1427 = vmatprep.subr.mxu0 0.0
    %1428 = vmatpush1.msra.mxu0 %v265
    %1429 = vmatprep.subr.mxu0 0.0
    %1430 = vmatpush1.msra.mxu0 %v266
    %1431 = vmatprep.subr.mxu0 0.0
    %1432 = vmatpush1.msra.mxu0 0.0
    %1433 = vmatprep.subr.mxu0 0.0
    %1434 = vmatpush1.msra.mxu0 0.0
    %1435 = vmatprep.subr.mxu0 0.0
    %1436 = vmatpush1.msra.mxu0 0.0
    %1437 = vmatprep.subr.mxu0 0.0
    %1438 = vmatpush1.msra.mxu0 0.0
    %1439 = vmatprep.subr.mxu0 0.0
    %1440 = vmatpush1.msra.mxu0 0.0
    %1441 = vmatprep.subr.mxu0 0.0
    %1442 = vmatpush1.msra.mxu0 0.0
    %1443 = vmatprep.subr.mxu0 0.0
    %1444 = vmatpush1.msra.mxu0 0.0
    %1445 = vmatprep.subr.mxu0 0.0
    %1446 = vmatpush1.msra.mxu0 0.0
    %1447 = vmatprep.subr.mxu0 0.0
    %1448 = vmatpush1.msra.mxu0 0.0
    %1449 = vmatprep.subr.mxu0 0.0
    %1450 = vmatpush1.msra.mxu0 0.0
    %1451 = vmatprep.subr.mxu0 0.0
    %1452 = vmatpush1.msra.mxu0 0.0
    %1453 = vmatprep.subr.mxu0 0.0
    %1454 = vmatpush1.msra.mxu0 0.0
    %1455 = vmatprep.subr.mxu0 0.0
    %1456 = vmatpush1.msra.mxu0 0.0
    %1457 = vmatprep.subr.mxu0 0.0
    %1458 = vmatpush1.msra.mxu0 0.0
    %1459 = vmatprep.subr.mxu0 0.0
    %1460 = vmatpush1.msra.mxu0 0.0
    %1461 = vmatprep.subr.mxu0 0.0
    %1462 = vmatpush1.msra.mxu0 0.0
    %1463 = vmatprep.subr.mxu0 0.0
    %1464 = vmatpush1.msra.mxu0 0.0
    %1465 = vmatprep.subr.mxu0 0.0
    %1466 = vmatpush1.msra.mxu0 0.0
    %1467 = vmatprep.subr.mxu0 0.0
    %1468 = vmatpush1.msra.mxu0 0.0
    %1469 = vmatprep.subr.mxu0 0.0
    %1470 = vmatpush1.msra.mxu0 0.0
    %1471 = vmatprep.subr.mxu0 0.0
    %1472 = vmatpush1.msra.mxu0 0.0
    %1473 = vmatprep.subr.mxu0 0.0
    %1474 = vmatpush1.msra.mxu0 0.0
    %1475 = vmatprep.subr.mxu0 0.0
    %1476 = vmatpush1.msra.mxu0 0.0
    %1477 = vmatprep.subr.mxu0 0.0
    %1478 = vmatpush1.msra.mxu0 0.0
    %1479 = vmatprep.subr.mxu0 0.0
    %1480 = vmatpush1.msra.mxu0 0.0
    %1481 = vmatprep.subr.mxu0 0.0
    %1482 = vmatpush1.msra.mxu0 0.0
    %1483 = vmatprep.subr.mxu0 0.0
    %1484 = vmatpush1.msra.mxu0 0.0
    %1485 = vmatprep.subr.mxu0 0.0
    %1486 = vmatpush1.msra.mxu0 0.0
    %1487 = vmatprep.mubr.f32.mxu0 0.0
    %1488 = vmatmul.mubr.f32.gmra.mrb[0].mxu0 %v1421
    %v1489 = vpop.f32.mrb[0].mxu0
    %v1490 = vadd.f32 0.0, %v1489
    %v1491 = vpop.f32.mrb[0].mxu0
    %1492 = vdwg.mxu0
    %v1494 = vrot.slane %v1490, 4
    %v1496 = vadd.f32 %v251, %v1494
    %v1497 = vxor.u32 %v1496, 2147483648
    %v1498 = vmul.f32 %v1497, 1.442695
    %v1499 = vpow.pop %v1498
    %v1500 = vadd.f32 %v1499, 1.0
    %v1501 = vrcp.pop %v1500
    %v1502 = vmul.f32 1.0, %v1501
    %v1503 = vtanh.pop %v1496
    %v1505 = vrot.slane %v1304, 2
    %v1507 = vmul.f32 %v1502, %v1505
    %1509 = vrot.lane.b32.xlu0 %v1503, 64
    %v1510 = vpop.permute.xlu0 %1509
    %v1512 = vmul.f32 %v1502, %v1510
    %1514 = vrot.lane.b32.xlu0 %v1512, 32
    %v1515 = vpop.permute.xlu0 %1514
    %v1517 = vadd.f32 %v1507, %v1515
    %v1518 = vtanh.pop %v1517
    %1520 = vrot.lane.b32.xlu0 %v1518, 64
    %v1521 = vpop.permute.xlu0 %1520
    %v1523 = vmul.f32 %v1502, %v1521
    %v1525 = vrot.slane %v1416, 2
    %1526 = vrot.lane.b32.xlu0 %v1525, 32
    %v1527 = vpop.permute.xlu0 %1526
    %v1528 = vsel %vm175, %v1527, 0
    %1530 = vmatprep.subr.mxu0 0.0
    %1531 = vmatpush1.msra.mxu0 %v259
    %1532 = vmatprep.subr.mxu0 0.0
    %1533 = vmatpush1.msra.mxu0 %v260
    %1534 = vmatprep.subr.mxu0 0.0
    %1535 = vmatpush1.msra.mxu0 %v261
    %1536 = vmatprep.subr.mxu0 0.0
    %1537 = vmatpush1.msra.mxu0 %v262
    %1538 = vmatprep.subr.mxu0 0.0
    %1539 = vmatpush1.msra.mxu0 0.0
    %1540 = vmatprep.subr.mxu0 0.0
    %1541 = vmatpush1.msra.mxu0 0.0
    %1542 = vmatprep.subr.mxu0 0.0
    %1543 = vmatpush1.msra.mxu0 0.0
    %1544 = vmatprep.subr.mxu0 0.0
    %1545 = vmatpush1.msra.mxu0 0.0
    %1546 = vmatprep.subr.mxu0 0.0
    %1547 = vmatpush1.msra.mxu0 0.0
    %1548 = vmatprep.subr.mxu0 0.0
    %1549 = vmatpush1.msra.mxu0 0.0
    %1550 = vmatprep.subr.mxu0 0.0
    %1551 = vmatpush1.msra.mxu0 0.0
    %1552 = vmatprep.subr.mxu0 0.0
    %1553 = vmatpush1.msra.mxu0 0.0
    %1554 = vmatprep.subr.mxu0 0.0
    %1555 = vmatpush1.msra.mxu0 0.0
    %1556 = vmatprep.subr.mxu0 0.0
    %1557 = vmatpush1.msra.mxu0 0.0
    %1558 = vmatprep.subr.mxu0 0.0
    %1559 = vmatpush1.msra.mxu0 0.0
    %1560 = vmatprep.subr.mxu0 0.0
    %1561 = vmatpush1.msra.mxu0 0.0
    %1562 = vmatprep.subr.mxu0 0.0
    %1563 = vmatpush1.msra.mxu0 0.0
    %1564 = vmatprep.subr.mxu0 0.0
    %1565 = vmatpush1.msra.mxu0 0.0
    %1566 = vmatprep.subr.mxu0 0.0
    %1567 = vmatpush1.msra.mxu0 0.0
    %1568 = vmatprep.subr.mxu0 0.0
    %1569 = vmatpush1.msra.mxu0 0.0
    %1570 = vmatprep.subr.mxu0 0.0
    %1571 = vmatpush1.msra.mxu0 0.0
    %1572 = vmatprep.subr.mxu0 0.0
    %1573 = vmatpush1.msra.mxu0 0.0
    %1574 = vmatprep.subr.mxu0 0.0
    %1575 = vmatpush1.msra.mxu0 0.0
    %1576 = vmatprep.subr.mxu0 0.0
    %1577 = vmatpush1.msra.mxu0 0.0
    %1578 = vmatprep.subr.mxu0 0.0
    %1579 = vmatpush1.msra.mxu0 0.0
    %1580 = vmatprep.subr.mxu0 0.0
    %1581 = vmatpush1.msra.mxu0 0.0
    %1582 = vmatprep.subr.mxu0 0.0
    %1583 = vmatpush1.msra.mxu0 0.0
    %1584 = vmatprep.subr.mxu0 0.0
    %1585 = vmatpush1.msra.mxu0 0.0
    %1586 = vmatprep.subr.mxu0 0.0
    %1587 = vmatpush1.msra.mxu0 0.0
    %1588 = vmatprep.subr.mxu0 0.0
    %1589 = vmatpush1.msra.mxu0 0.0
    %1590 = vmatprep.subr.mxu0 0.0
    %1591 = vmatpush1.msra.mxu0 0.0
    %1592 = vmatprep.subr.mxu0 0.0
    %1593 = vmatpush1.msra.mxu0 0.0
    %1594 = vmatprep.mubr.f32.mxu0 0.0
    %1595 = vmatmul.mubr.f32.gmra.mrb[0].mxu0 %v1528
    %v1596 = vpop.f32.mrb[0].mxu0
    %v1597 = vadd.f32 0.0, %v1596
    %v1598 = vpop.f32.mrb[0].mxu0
    %1599 = vdwg.mxu0
    %v1601 = vrot.slane %v1597, 4
    %v1603 = vadd.f32 %v255, %v1601
    %v1604 = vxor.u32 %v1603, 2147483648
    %v1605 = vmul.f32 %v1604, 1.442695
    %v1606 = vpow.pop %v1605
    %v1607 = vadd.f32 %v1606, 1.0
    %v1608 = vrcp.pop %v1607
    %v1609 = vmul.f32 1.0, %v1608
    %v1610 = vtanh.pop %v1603
    %v1612 = vrot.slane %v1410, 6
    %v1614 = vmul.f32 %v1609, %v1612
    %1616 = vrot.lane.b32.xlu0 %v1610, 64
    %v1617 = vpop.permute.xlu0 %1616
    %v1619 = vmul.f32 %v1609, %v1617
    %1621 = vrot.lane.b32.xlu0 %v1619, 32
    %v1622 = vpop.permute.xlu0 %1621
    %v1624 = vadd.f32 %v1614, %v1622
    %v1625 = vtanh.pop %v1624
    %1627 = vrot.lane.b32.xlu0 %v1625, 64
    %v1628 = vpop.permute.xlu0 %1627
    %v1630 = vmul.f32 %v1609, %v1628
    %v1632 = vrot.slane %v1523, 4
    %1633 = vrot.lane.b32.xlu0 %v1632, 32
    %v1634 = vpop.permute.xlu0 %1633
    %v1635 = vsel %vm175, %v1634, 0
    %1637 = vmatprep.subr.mxu0 0.0
    %1638 = vmatpush1.msra.mxu0 %v263
    %1639 = vmatprep.subr.mxu0 0.0
    %1640 = vmatpush1.msra.mxu0 %v264
    %1641 = vmatprep.subr.mxu0 0.0
    %1642 = vmatpush1.msra.mxu0 %v265
    %1643 = vmatprep.subr.mxu0 0.0
    %1644 = vmatpush1.msra.mxu0 %v266
    %1645 = vmatprep.subr.mxu0 0.0
    %1646 = vmatpush1.msra.mxu0 0.0
    %1647 = vmatprep.subr.mxu0 0.0
    %1648 = vmatpush1.msra.mxu0 0.0
    %1649 = vmatprep.subr.mxu0 0.0
    %1650 = vmatpush1.msra.mxu0 0.0
    %1651 = vmatprep.subr.mxu0 0.0
    %1652 = vmatpush1.msra.mxu0 0.0
    %1653 = vmatprep.subr.mxu0 0.0
    %1654 = vmatpush1.msra.mxu0 0.0
    %1655 = vmatprep.subr.mxu0 0.0
    %1656 = vmatpush1.msra.mxu0 0.0
    %1657 = vmatprep.subr.mxu0 0.0
    %1658 = vmatpush1.msra.mxu0 0.0
    %1659 = vmatprep.subr.mxu0 0.0
    %1660 = vmatpush1.msra.mxu0 0.0
    %1661 = vmatprep.subr.mxu0 0.0
    %1662 = vmatpush1.msra.mxu0 0.0
    %1663 = vmatprep.subr.mxu0 0.0
    %1664 = vmatpush1.msra.mxu0 0.0
    %1665 = vmatprep.subr.mxu0 0.0
    %1666 = vmatpush1.msra.mxu0 0.0
    %1667 = vmatprep.subr.mxu0 0.0
    %1668 = vmatpush1.msra.mxu0 0.0
    %1669 = vmatprep.subr.mxu0 0.0
    %1670 = vmatpush1.msra.mxu0 0.0
    %1671 = vmatprep.subr.mxu0 0.0
    %1672 = vmatpush1.msra.mxu0 0.0
    %1673 = vmatprep.subr.mxu0 0.0
    %1674 = vmatpush1.msra.mxu0 0.0
    %1675 = vmatprep.subr.mxu0 0.0
    %1676 = vmatpush1.msra.mxu0 0.0
    %1677 = vmatprep.subr.mxu0 0.0
    %1678 = vmatpush1.msra.mxu0 0.0
    %1679 = vmatprep.subr.mxu0 0.0
    %1680 = vmatpush1.msra.mxu0 0.0
    %1681 = vmatprep.subr.mxu0 0.0
    %1682 = vmatpush1.msra.mxu0 0.0
    %1683 = vmatprep.subr.mxu0 0.0
    %1684 = vmatpush1.msra.mxu0 0.0
    %1685 = vmatprep.subr.mxu0 0.0
    %1686 = vmatpush1.msra.mxu0 0.0
    %1687 = vmatprep.subr.mxu0 0.0
    %1688 = vmatpush1.msra.mxu0 0.0
    %1689 = vmatprep.subr.mxu0 0.0
    %1690 = vmatpush1.msra.mxu0 0.0
    %1691 = vmatprep.subr.mxu0 0.0
    %1692 = vmatpush1.msra.mxu0 0.0
    %1693 = vmatprep.subr.mxu0 0.0
    %1694 = vmatpush1.msra.mxu0 0.0
    %1695 = vmatprep.subr.mxu0 0.0
    %1696 = vmatpush1.msra.mxu0 0.0
    %1697 = vmatprep.subr.mxu0 0.0
    %1698 = vmatpush1.msra.mxu0 0.0
    %1699 = vmatprep.subr.mxu0 0.0
    %1700 = vmatpush1.msra.mxu0 0.0
    %1701 = vmatprep.mubr.f32.mxu0 0.0
    %1702 = vmatmul.mubr.f32.gmra.mrb[0].mxu0 %v1635
    %v1703 = vpop.f32.mrb[0].mxu0
    %v1704 = vadd.f32 0.0, %v1703
    %v1705 = vpop.f32.mrb[0].mxu0
    %1706 = vdwg.mxu0
    %v1708 = vrot.slane %v1704, 6
    %v1710 = vadd.f32 %v251, %v1708
    %v1711 = vxor.u32 %v1710, 2147483648
    %v1712 = vmul.f32 %v1711, 1.442695
    %v1713 = vpow.pop %v1712
    %v1714 = vadd.f32 %v1713, 1.0
    %v1715 = vrcp.pop %v1714
    %v1716 = vmul.f32 1.0, %v1715
    %v1717 = vtanh.pop %v1710
    %v1719 = vrot.slane %v1517, 2
    %v1721 = vmul.f32 %v1716, %v1719
    %1723 = vrot.lane.b32.xlu0 %v1717, 64
    %v1724 = vpop.permute.xlu0 %1723
    %v1726 = vmul.f32 %v1716, %v1724
    %1728 = vrot.lane.b32.xlu0 %v1726, 32
    %v1729 = vpop.permute.xlu0 %1728
    %v1731 = vadd.f32 %v1721, %v1729
    %v1732 = vtanh.pop %v1731
    %1734 = vrot.lane.b32.xlu0 %v1732, 64
    %v1735 = vpop.permute.xlu0 %1734
    %v1737 = vmul.f32 %v1716, %v1735
    %v1739 = vrot.slane %v1630, 4
    %1740 = vrot.lane.b32.xlu0 %v1739, 32
    %v1741 = vpop.permute.xlu0 %1740
    %v1742 = vsel %vm175, %v1741, 0
    %1744 = vmatprep.subr.mxu0 0.0
    %1745 = vmatpush1.msra.mxu0 %v259
    %1746 = vmatprep.subr.mxu0 0.0
    %1747 = vmatpush1.msra.mxu0 %v260
    %1748 = vmatprep.subr.mxu0 0.0
    %1749 = vmatpush1.msra.mxu0 %v261
    %1750 = vmatprep.subr.mxu0 0.0
    %1751 = vmatpush1.msra.mxu0 %v262
    %1752 = vmatprep.subr.mxu0 0.0
    %1753 = vmatpush1.msra.mxu0 0.0
    %1754 = vmatprep.subr.mxu0 0.0
    %1755 = vmatpush1.msra.mxu0 0.0
    %1756 = vmatprep.subr.mxu0 0.0
    %1757 = vmatpush1.msra.mxu0 0.0
    %1758 = vmatprep.subr.mxu0 0.0
    %1759 = vmatpush1.msra.mxu0 0.0
    %1760 = vmatprep.subr.mxu0 0.0
    %1761 = vmatpush1.msra.mxu0 0.0
    %1762 = vmatprep.subr.mxu0 0.0
    %1763 = vmatpush1.msra.mxu0 0.0
    %1764 = vmatprep.subr.mxu0 0.0
    %1765 = vmatpush1.msra.mxu0 0.0
    %1766 = vmatprep.subr.mxu0 0.0
    %1767 = vmatpush1.msra.mxu0 0.0
    %1768 = vmatprep.subr.mxu0 0.0
    %1769 = vmatpush1.msra.mxu0 0.0
    %1770 = vmatprep.subr.mxu0 0.0
    %1771 = vmatpush1.msra.mxu0 0.0
    %1772 = vmatprep.subr.mxu0 0.0
    %1773 = vmatpush1.msra.mxu0 0.0
    %1774 = vmatprep.subr.mxu0 0.0
    %1775 = vmatpush1.msra.mxu0 0.0
    %1776 = vmatprep.subr.mxu0 0.0
    %1777 = vmatpush1.msra.mxu0 0.0
    %1778 = vmatprep.subr.mxu0 0.0
    %1779 = vmatpush1.msra.mxu0 0.0
    %1780 = vmatprep.subr.mxu0 0.0
    %1781 = vmatpush1.msra.mxu0 0.0
    %1782 = vmatprep.subr.mxu0 0.0
    %1783 = vmatpush1.msra.mxu0 0.0
    %1784 = vmatprep.subr.mxu0 0.0
    %1785 = vmatpush1.msra.mxu0 0.0
    %1786 = vmatprep.subr.mxu0 0.0
    %1787 = vmatpush1.msra.mxu0 0.0
    %1788 = vmatprep.subr.mxu0 0.0
    %1789 = vmatpush1.msra.mxu0 0.0
    %1790 = vmatprep.subr.mxu0 0.0
    %1791 = vmatpush1.msra.mxu0 0.0
    %1792 = vmatprep.subr.mxu0 0.0
    %1793 = vmatpush1.msra.mxu0 0.0
    %1794 = vmatprep.subr.mxu0 0.0
    %1795 = vmatpush1.msra.mxu0 0.0
    %1796 = vmatprep.subr.mxu0 0.0
    %1797 = vmatpush1.msra.mxu0 0.0
    %1798 = vmatprep.subr.mxu0 0.0
    %1799 = vmatpush1.msra.mxu0 0.0
    %1800 = vmatprep.subr.mxu0 0.0
    %1801 = vmatpush1.msra.mxu0 0.0
    %1802 = vmatprep.subr.mxu0 0.0
    %1803 = vmatpush1.msra.mxu0 0.0
    %1804 = vmatprep.subr.mxu0 0.0
    %1805 = vmatpush1.msra.mxu0 0.0
    %1806 = vmatprep.subr.mxu0 0.0
    %1807 = vmatpush1.msra.mxu0 0.0
    %1808 = vmatprep.mubr.f32.mxu0 0.0
    %1809 = vmatmul.mubr.f32.gmra.mrb[0].mxu0 %v1742
    %v1810 = vpop.f32.mrb[0].mxu0
    %v1811 = vadd.f32 0.0, %v1810
    %v1812 = vpop.f32.mrb[0].mxu0
    %1813 = vdwg.mxu0
    %v1815 = vrot.slane %v1811, 2
    %v1817 = vadd.f32 %v255, %v1815
    %v1818 = vxor.u32 %v1817, 2147483648
    %v1819 = vmul.f32 %v1818, 1.442695
    %v1820 = vpow.pop %v1819
    %v1821 = vadd.f32 %v1820, 1.0
    %v1822 = vrcp.pop %v1821
    %v1823 = vmul.f32 1.0, %v1822
    %v1824 = vtanh.pop %v1817
    %v1826 = vrot.slane %v1624, 6
    %v1828 = vmul.f32 %v1823, %v1826
    %1830 = vrot.lane.b32.xlu0 %v1824, 64
    %v1831 = vpop.permute.xlu0 %1830
    %v1833 = vmul.f32 %v1823, %v1831
    %1835 = vrot.lane.b32.xlu0 %v1833, 32
    %v1836 = vpop.permute.xlu0 %1835
    %v1838 = vadd.f32 %v1828, %v1836
    %v1839 = vtanh.pop %v1838
    %1841 = vrot.lane.b32.xlu0 %v1839, 64
    %v1842 = vpop.permute.xlu0 %1841
    %v1844 = vmul.f32 %v1823, %v1842
    %v1846 = vrot.slane %v1737, 2
    %1847 = vrot.lane.b32.xlu0 %v1846, 32
    %v1848 = vpop.permute.xlu0 %1847
    %v1849 = vsel %vm175, %v1848, 0
    %1851 = vmatprep.subr.mxu0 0.0
    %1852 = vmatpush1.msra.mxu0 %v263
    %1853 = vmatprep.subr.mxu0 0.0
    %1854 = vmatpush1.msra.mxu0 %v264
    %1855 = vmatprep.subr.mxu0 0.0
    %1856 = vmatpush1.msra.mxu0 %v265
    %1857 = vmatprep.subr.mxu0 0.0
    %1858 = vmatpush1.msra.mxu0 %v266
    %1859 = vmatprep.subr.mxu0 0.0
    %1860 = vmatpush1.msra.mxu0 0.0
    %1861 = vmatprep.subr.mxu0 0.0
    %1862 = vmatpush1.msra.mxu0 0.0
    %1863 = vmatprep.subr.mxu0 0.0
    %1864 = vmatpush1.msra.mxu0 0.0
    %1865 = vmatprep.subr.mxu0 0.0
    %1866 = vmatpush1.msra.mxu0 0.0
    %1867 = vmatprep.subr.mxu0 0.0
    %1868 = vmatpush1.msra.mxu0 0.0
    %1869 = vmatprep.subr.mxu0 0.0
    %1870 = vmatpush1.msra.mxu0 0.0
    %1871 = vmatprep.subr.mxu0 0.0
    %1872 = vmatpush1.msra.mxu0 0.0
    %1873 = vmatprep.subr.mxu0 0.0
    %1874 = vmatpush1.msra.mxu0 0.0
    %1875 = vmatprep.subr.mxu0 0.0
    %1876 = vmatpush1.msra.mxu0 0.0
    %1877 = vmatprep.subr.mxu0 0.0
    %1878 = vmatpush1.msra.mxu0 0.0
    %1879 = vmatprep.subr.mxu0 0.0
    %1880 = vmatpush1.msra.mxu0 0.0
    %1881 = vmatprep.subr.mxu0 0.0
    %1882 = vmatpush1.msra.mxu0 0.0
    %1883 = vmatprep.subr.mxu0 0.0
    %1884 = vmatpush1.msra.mxu0 0.0
    %1885 = vmatprep.subr.mxu0 0.0
    %1886 = vmatpush1.msra.mxu0 0.0
    %1887 = vmatprep.subr.mxu0 0.0
    %1888 = vmatpush1.msra.mxu0 0.0
    %1889 = vmatprep.subr.mxu0 0.0
    %1890 = vmatpush1.msra.mxu0 0.0
    %1891 = vmatprep.subr.mxu0 0.0
    %1892 = vmatpush1.msra.mxu0 0.0
    %1893 = vmatprep.subr.mxu0 0.0
    %1894 = vmatpush1.msra.mxu0 0.0
    %1895 = vmatprep.subr.mxu0 0.0
    %1896 = vmatpush1.msra.mxu0 0.0
    %1897 = vmatprep.subr.mxu0 0.0
    %1898 = vmatpush1.msra.mxu0 0.0
    %1899 = vmatprep.subr.mxu0 0.0
    %1900 = vmatpush1.msra.mxu0 0.0
    %1901 = vmatprep.subr.mxu0 0.0
    %1902 = vmatpush1.msra.mxu0 0.0
    %1903 = vmatprep.subr.mxu0 0.0
    %1904 = vmatpush1.msra.mxu0 0.0
    %1905 = vmatprep.subr.mxu0 0.0
    %1906 = vmatpush1.msra.mxu0 0.0
    %1907 = vmatprep.subr.mxu0 0.0
    %1908 = vmatpush1.msra.mxu0 0.0
    %1909 = vmatprep.subr.mxu0 0.0
    %1910 = vmatpush1.msra.mxu0 0.0
    %1911 = vmatprep.subr.mxu0 0.0
    %1912 = vmatpush1.msra.mxu0 0.0
    %1913 = vmatprep.subr.mxu0 0.0
    %1914 = vmatpush1.msra.mxu0 0.0
    %1915 = vmatprep.mubr.f32.mxu0 0.0
    %1916 = vmatmul.mubr.f32.gmra.mrb[0].mxu0 %v1849
    %v1917 = vpop.f32.mrb[0].mxu0
    %v1918 = vadd.f32 0.0, %v1917
    %v1919 = vpop.f32.mrb[0].mxu0
    %1920 = vdwg.mxu0
    %v1921 = vadd.f32 %v251, %v1918
    %v1922 = vxor.u32 %v1921, 2147483648
    %v1923 = vmul.f32 %v1922, 1.442695
    %v1924 = vpow.pop %v1923
    %v1925 = vadd.f32 %v1924, 1.0
    %v1926 = vrcp.pop %v1925
    %v1927 = vmul.f32 1.0, %v1926
    %v1928 = vtanh.pop %v1921
    %v1930 = vrot.slane %v1731, 2
    %v1932 = vmul.f32 %v1927, %v1930
    %1934 = vrot.lane.b32.xlu0 %v1928, 64
    %v1935 = vpop.permute.xlu0 %1934
    %v1937 = vmul.f32 %v1927, %v1935
    %1939 = vrot.lane.b32.xlu0 %v1937, 32
    %v1940 = vpop.permute.xlu0 %1939
    %v1942 = vadd.f32 %v1932, %v1940
    %v1943 = vtanh.pop %v1942
    %1945 = vrot.lane.b32.xlu0 %v1943, 64
    %v1946 = vpop.permute.xlu0 %1945
    %v1948 = vmul.f32 %v1927, %v1946
    %vm1949 = vcmask 1041408
    %v1950 = vsel %vm1949, %v364, %v568
    %vm1951 = vcmask 1043456
    %v1952 = vsel %vm1951, %v1950, %v782
    %vm1953 = vcmask 1045504
    %v1954 = vsel %vm1953, %v1952, %v996
    %v1955 = vsel %vm1949, %v1204, %v1416
    %v1956 = vsel %vm1951, %v1955, %v1630
    %v1957 = vsel %vm1953, %v1956, %v1844
    %v1958 = vsel %vm1949, %v1948, %v1737
    %v1959 = vsel %vm1951, %v1958, %v1523
    %v1960 = vsel %vm1953, %v1959, %v1310
    %v1961 = vsel %vm1949, %v1100, %v889
    %v1962 = vsel %vm1951, %v1961, %v675
    %v1963 = vsel %vm1953, %v1962, %v462
    %1966 = vrot.lane.b32.xlu0 %v1954, 32
    %v1967 = vpop.permute.xlu0 %1966
    %1968 = vrot.lane.b32.xlu0 %v1957, 32
    %v1969 = vpop.permute.xlu0 %1968
    %1974 = vrot.lane.b32.xlu0 %v1960, 64
    %v1975 = vpop.permute.xlu0 %1974
    %1976 = vrot.lane.b32.xlu0 %v1963, 64
    %v1977 = vpop.permute.xlu0 %1976
    %v1980 = vsel %vm175, %v1967, %v1975
    %v1981 = vsel %vm175, %v1969, %v1977
    %v1982 = vld [vmem:[%s6] sm:$0xff]
    %v1983 = vld [vmem:[%s6 + $0x8] sm:$0xff]
    %v1984 = vld [vmem:[%s6 + $0x10] sm:$0xff]
    %v1985 = vld [vmem:[%s6 + $0x18] sm:$0xff]
    %v1986 = vld [vmem:[%s6 + $0x20] sm:$0xff]
    %v1987 = vld [vmem:[%s6 + $0x28] sm:$0xff]
    %v1988 = vld [vmem:[%s6 + $0x30] sm:$0xff]
    %v1989 = vld [vmem:[%s6 + $0x38] sm:$0xff]
    %v1990 = vld [vmem:[%s6 + $0x40] sm:$0xff]
    %v1991 = vld [vmem:[%s6 + $0x48] sm:$0xff]
    %v1992 = vld [vmem:[%s6 + $0x50] sm:$0xff]
    %v1993 = vld [vmem:[%s6 + $0x58] sm:$0xff]
    %v1994 = vld [vmem:[%s6 + $0x60] sm:$0xff]
    %v1995 = vld [vmem:[%s6 + $0x68] sm:$0xff]
    %v1996 = vld [vmem:[%s6 + $0x70] sm:$0xff]
    %v1997 = vld [vmem:[%s6 + $0x78] sm:$0xff]
    %v1998 = vld [vmem:[%s7] sm:$0x3]
    %v2000 = vlaneseq
    %v2001 = vshrl.u32 %v2000, 7
    %v2002 = vsub.s32 0, %v2001
    %v2003 = vrot.slane %v1998, %v2002
    %v2004 = vlaneseq
    %v2005 = vshrl.u32 %v2004, 7
    %v2006 = vsub.s32 1, %v2005
    %v2007 = vrot.slane %v1998, %v2006
    %vm2010 = vcmask 523264
    %v2012 = vsel %vm2010, %v1980, 0
    %v2015 = vsel %vm2010, %v1981, 0
    %2017 = vmatprep.subr.mxu0 %v1983
    %2018 = vmatpush1.msra.mxu0 %v1982
    %2019 = vmatprep.subr.mxu0 %v1985
    %2020 = vmatpush1.msra.mxu0 %v1984
    %2021 = vmatprep.subr.mxu0 %v1987
    %2022 = vmatpush1.msra.mxu0 %v1986
    %2023 = vmatprep.subr.mxu0 %v1989
    %2024 = vmatpush1.msra.mxu0 %v1988
    %2025 = vmatprep.subr.mxu0 %v1991
    %2026 = vmatpush1.msra.mxu0 %v1990
    %2027 = vmatprep.subr.mxu0 %v1993
    %2028 = vmatpush1.msra.mxu0 %v1992
    %2029 = vmatprep.subr.mxu0 %v1995
    %2030 = vmatpush1.msra.mxu0 %v1994
    %2031 = vmatprep.subr.mxu0 %v1997
    %2032 = vmatpush1.msra.mxu0 %v1996
    %2033 = vmatprep.subr.mxu0 0.0
    %2034 = vmatpush1.msra.mxu0 0.0
    %2035 = vmatprep.subr.mxu0 0.0
    %2036 = vmatpush1.msra.mxu0 0.0
    %2037 = vmatprep.subr.mxu0 0.0
    %2038 = vmatpush1.msra.mxu0 0.0
    %2039 = vmatprep.subr.mxu0 0.0
    %2040 = vmatpush1.msra.mxu0 0.0
    %2041 = vmatprep.subr.mxu0 0.0
    %2042 = vmatpush1.msra.mxu0 0.0
    %2043 = vmatprep.subr.mxu0 0.0
    %2044 = vmatpush1.msra.mxu0 0.0
    %2045 = vmatprep.subr.mxu0 0.0
    %2046 = vmatpush1.msra.mxu0 0.0
    %2047 = vmatprep.subr.mxu0 0.0
    %2048 = vmatpush1.msra.mxu0 0.0
    %2049 = vmatprep.subr.mxu0 0.0
    %2050 = vmatpush1.msra.mxu0 0.0
    %2051 = vmatprep.subr.mxu0 0.0
    %2052 = vmatpush1.msra.mxu0 0.0
    %2053 = vmatprep.subr.mxu0 0.0
    %2054 = vmatpush1.msra.mxu0 0.0
    %2055 = vmatprep.subr.mxu0 0.0
    %2056 = vmatpush1.msra.mxu0 0.0
    %2057 = vmatprep.subr.mxu0 0.0
    %2058 = vmatpush1.msra.mxu0 0.0
    %2059 = vmatprep.subr.mxu0 0.0
    %2060 = vmatpush1.msra.mxu0 0.0
    %2061 = vmatprep.subr.mxu0 0.0
    %2062 = vmatpush1.msra.mxu0 0.0
    %2063 = vmatprep.subr.mxu0 0.0
    %2064 = vmatpush1.msra.mxu0 0.0
    %2065 = vmatprep.subr.mxu0 0.0
    %2066 = vmatpush1.msra.mxu0 0.0
    %2067 = vmatprep.subr.mxu0 0.0
    %2068 = vmatpush1.msra.mxu0 0.0
    %2069 = vmatprep.subr.mxu0 0.0
    %2070 = vmatpush1.msra.mxu0 0.0
    %2071 = vmatprep.subr.mxu0 0.0
    %2072 = vmatpush1.msra.mxu0 0.0
    %2073 = vmatprep.subr.mxu0 0.0
    %2074 = vmatpush1.msra.mxu0 0.0
    %2075 = vmatprep.subr.mxu0 0.0
    %2076 = vmatpush1.msra.mxu0 0.0
    %2077 = vmatprep.subr.mxu0 0.0
    %2078 = vmatpush1.msra.mxu0 0.0
    %2079 = vmatprep.subr.mxu0 0.0
    %2080 = vmatpush1.msra.mxu0 0.0
    %2081 = vmatprep.mubr.f32.mxu0 0.0
    %2082 = vmatmul.mubr.f32.gmra.mrb[0].mxu0 %v2012
    %v2083 = vpop.f32.mrb[0].mxu0
    %v2084 = vadd.f32 %v2003, %v2083
    %v2085 = vpop.f32.mrb[0].mxu0
    %v2086 = vadd.f32 %v2007, %v2085
    %2087 = vmatprep.mubr.f32.mxu0 0.0
    %2088 = vmatmul.mubr.f32.gmra.mrb[0].mxu0 %v2015
    %v2089 = vpop.f32.mrb[0].mxu0
    %v2090 = vadd.f32 %v2003, %v2089
    %v2091 = vpop.f32.mrb[0].mxu0
    %v2092 = vadd.f32 %v2007, %v2091
    %2093 = vdwg.mxu0
    %v2094 = vld [vmem:[%s8] sm:$0xff]
    %v2095 = vld [vmem:[%s8 + $0x8] sm:$0xff]
    %v2096 = vld [vmem:[%s8 + $0x10] sm:$0xff]
    %v2097 = vld [vmem:[%s8 + $0x18] sm:$0xff]
    %v2098 = vld [vmem:[%s9] sm:$0xff]
    %v2099 = vld [vmem:[%s9 + $0x8] sm:$0xff]
    %v2100 = vld [vmem:[%s9 + $0x10] sm:$0xff]
    %v2101 = vld [vmem:[%s9 + $0x18] sm:$0xff]
    %2102 = vmatprep.subr.mxu0 0.0
    %2103 = vmatpush1.msra.mxu0 %v2094
    %2104 = vmatprep.subr.mxu0 0.0
    %2105 = vmatpush1.msra.mxu0 %v2095
    %2106 = vmatprep.subr.mxu0 0.0
    %2107 = vmatpush1.msra.mxu0 %v2096
    %2108 = vmatprep.subr.mxu0 0.0
    %2109 = vmatpush1.msra.mxu0 %v2097
    %2110 = vmatprep.subr.mxu0 0.0
    %2111 = vmatpush1.msra.mxu0 0.0
    %2112 = vmatprep.subr.mxu0 0.0
    %2113 = vmatpush1.msra.mxu0 0.0
    %2114 = vmatprep.subr.mxu0 0.0
    %2115 = vmatpush1.msra.mxu0 0.0
    %2116 = vmatprep.subr.mxu0 0.0
    %2117 = vmatpush1.msra.mxu0 0.0
    %2118 = vmatprep.subr.mxu0 0.0
    %2119 = vmatpush1.msra.mxu0 0.0
    %2120 = vmatprep.subr.mxu0 0.0
    %2121 = vmatpush1.msra.mxu0 0.0
    %2122 = vmatprep.subr.mxu0 0.0
    %2123 = vmatpush1.msra.mxu0 0.0
    %2124 = vmatprep.subr.mxu0 0.0
    %2125 = vmatpush1.msra.mxu0 0.0
    %2126 = vmatprep.subr.mxu0 0.0
    %2127 = vmatpush1.msra.mxu0 0.0
    %2128 = vmatprep.subr.mxu0 0.0
    %2129 = vmatpush1.msra.mxu0 0.0
    %2130 = vmatprep.subr.mxu0 0.0
    %2131 = vmatpush1.msra.mxu0 0.0
    %2132 = vmatprep.subr.mxu0 0.0
    %2133 = vmatpush1.msra.mxu0 0.0
    %2134 = vmatprep.subr.mxu0 0.0
    %2135 = vmatpush1.msra.mxu0 0.0
    %2136 = vmatprep.subr.mxu0 0.0
    %2137 = vmatpush1.msra.mxu0 0.0
    %2138 = vmatprep.subr.mxu0 0.0
    %2139 = vmatpush1.msra.mxu0 0.0
    %2140 = vmatprep.subr.mxu0 0.0
    %2141 = vmatpush1.msra.mxu0 0.0
    %2142 = vmatprep.subr.mxu0 0.0
    %2143 = vmatpush1.msra.mxu0 0.0
    %2144 = vmatprep.subr.mxu0 0.0
    %2145 = vmatpush1.msra.mxu0 0.0
    %2146 = vmatprep.subr.mxu0 0.0
    %2147 = vmatpush1.msra.mxu0 0.0
    %2148 = vmatprep.subr.mxu0 0.0
    %2149 = vmatpush1.msra.mxu0 0.0
    %2150 = vmatprep.subr.mxu0 0.0
    %2151 = vmatpush1.msra.mxu0 0.0
    %2152 = vmatprep.subr.mxu0 0.0
    %2153 = vmatpush1.msra.mxu0 0.0
    %2154 = vmatprep.subr.mxu0 0.0
    %2155 = vmatpush1.msra.mxu0 0.0
    %2156 = vmatprep.subr.mxu0 0.0
    %2157 = vmatpush1.msra.mxu0 0.0
    %2158 = vmatprep.subr.mxu0 0.0
    %2159 = vmatpush1.msra.mxu0 0.0
    %2160 = vmatprep.subr.mxu0 0.0
    %2161 = vmatpush1.msra.mxu0 0.0
    %2162 = vmatprep.subr.mxu0 0.0
    %2163 = vmatpush1.msra.mxu0 0.0
    %2164 = vmatprep.subr.mxu0 0.0
    %2165 = vmatpush1.msra.mxu0 0.0
    %2166 = vmatprep.mubr.f32.mxu0 0.0
    %2167 = vmatmul.mubr.f32.gmra.mrb[0].mxu0 %v268
    %v2168 = vpop.f32.mrb[0].mxu0
    %v2169 = vadd.f32 0.0, %v2168
    %v2170 = vpop.f32.mrb[0].mxu0
    %2171 = vdwg.mxu0
    %v2172 = vadd.f32 %v2084, %v2169
    %v2173 = vxor.u32 %v2172, 2147483648
    %v2174 = vmul.f32 %v2173, 1.442695
    %v2175 = vpow.pop %v2174
    %v2176 = vadd.f32 %v2175, 1.0
    %v2177 = vrcp.pop %v2176
    %v2178 = vmul.f32 1.0, %v2177
    %v2179 = vtanh.pop %v2172
    %v2180 = vmul.f32 %v2178, 0.0
    %2182 = vrot.lane.b32.xlu0 %v2179, 64
    %v2183 = vpop.permute.xlu0 %2182
    %v2185 = vmul.f32 %v2178, %v2183
    %2187 = vrot.lane.b32.xlu0 %v2185, 32
    %v2188 = vpop.permute.xlu0 %2187
    %v2190 = vadd.f32 %v2180, %v2188
    %v2191 = vtanh.pop %v2190
    %2193 = vrot.lane.b32.xlu0 %v2191, 64
    %v2194 = vpop.permute.xlu0 %2193
    %v2196 = vmul.f32 %v2178, %v2194
    %2197 = vmatprep.subr.mxu0 0.0
    %2198 = vmatpush1.msra.mxu0 %v2098
    %2199 = vmatprep.subr.mxu0 0.0
    %2200 = vmatpush1.msra.mxu0 %v2099
    %2201 = vmatprep.subr.mxu0 0.0
    %2202 = vmatpush1.msra.mxu0 %v2100
    %2203 = vmatprep.subr.mxu0 0.0
    %2204 = vmatpush1.msra.mxu0 %v2101
    %2205 = vmatprep.subr.mxu0 0.0
    %2206 = vmatpush1.msra.mxu0 0.0
    %2207 = vmatprep.subr.mxu0 0.0
    %2208 = vmatpush1.msra.mxu0 0.0
    %2209 = vmatprep.subr.mxu0 0.0
    %2210 = vmatpush1.msra.mxu0 0.0
    %2211 = vmatprep.subr.mxu0 0.0
    %2212 = vmatpush1.msra.mxu0 0.0
    %2213 = vmatprep.subr.mxu0 0.0
    %2214 = vmatpush1.msra.mxu0 0.0
    %2215 = vmatprep.subr.mxu0 0.0
    %2216 = vmatpush1.msra.mxu0 0.0
    %2217 = vmatprep.subr.mxu0 0.0
    %2218 = vmatpush1.msra.mxu0 0.0
    %2219 = vmatprep.subr.mxu0 0.0
    %2220 = vmatpush1.msra.mxu0 0.0
    %2221 = vmatprep.subr.mxu0 0.0
    %2222 = vmatpush1.msra.mxu0 0.0
    %2223 = vmatprep.subr.mxu0 0.0
    %2224 = vmatpush1.msra.mxu0 0.0
    %2225 = vmatprep.subr.mxu0 0.0
    %2226 = vmatpush1.msra.mxu0 0.0
    %2227 = vmatprep.subr.mxu0 0.0
    %2228 = vmatpush1.msra.mxu0 0.0
    %2229 = vmatprep.subr.mxu0 0.0
    %2230 = vmatpush1.msra.mxu0 0.0
    %2231 = vmatprep.subr.mxu0 0.0
    %2232 = vmatpush1.msra.mxu0 0.0
    %2233 = vmatprep.subr.mxu0 0.0
    %2234 = vmatpush1.msra.mxu0 0.0
    %2235 = vmatprep.subr.mxu0 0.0
    %2236 = vmatpush1.msra.mxu0 0.0
    %2237 = vmatprep.subr.mxu0 0.0
    %2238 = vmatpush1.msra.mxu0 0.0
    %2239 = vmatprep.subr.mxu0 0.0
    %2240 = vmatpush1.msra.mxu0 0.0
    %2241 = vmatprep.subr.mxu0 0.0
    %2242 = vmatpush1.msra.mxu0 0.0
    %2243 = vmatprep.subr.mxu0 0.0
    %2244 = vmatpush1.msra.mxu0 0.0
    %2245 = vmatprep.subr.mxu0 0.0
    %2246 = vmatpush1.msra.mxu0 0.0
    %2247 = vmatprep.subr.mxu0 0.0
    %2248 = vmatpush1.msra.mxu0 0.0
    %2249 = vmatprep.subr.mxu0 0.0
    %2250 = vmatpush1.msra.mxu0 0.0
    %2251 = vmatprep.subr.mxu0 0.0
    %2252 = vmatpush1.msra.mxu0 0.0
    %2253 = vmatprep.subr.mxu0 0.0
    %2254 = vmatpush1.msra.mxu0 0.0
    %2255 = vmatprep.subr.mxu0 0.0
    %2256 = vmatpush1.msra.mxu0 0.0
    %2257 = vmatprep.subr.mxu0 0.0
    %2258 = vmatpush1.msra.mxu0 0.0
    %2259 = vmatprep.subr.mxu0 0.0
    %2260 = vmatpush1.msra.mxu0 0.0
    %2261 = vmatprep.mubr.f32.mxu0 0.0
    %2262 = vmatmul.mubr.f32.gmra.mrb[0].mxu0 %v268
    %v2263 = vpop.f32.mrb[0].mxu0
    %v2264 = vadd.f32 0.0, %v2263
    %v2265 = vpop.f32.mrb[0].mxu0
    %2266 = vdwg.mxu0
    %v2268 = vrot.slane %v2264, 2
    %v2270 = vadd.f32 %v2092, %v2268
    %v2271 = vxor.u32 %v2270, 2147483648
    %v2272 = vmul.f32 %v2271, 1.442695
    %v2273 = vpow.pop %v2272
    %v2274 = vadd.f32 %v2273, 1.0
    %v2275 = vrcp.pop %v2274
    %v2276 = vmul.f32 1.0, %v2275
    %v2277 = vtanh.pop %v2270
    %v2278 = vmul.f32 %v2276, 0.0
    %2280 = vrot.lane.b32.xlu0 %v2277, 64
    %v2281 = vpop.permute.xlu0 %2280
    %v2283 = vmul.f32 %v2276, %v2281
    %2285 = vrot.lane.b32.xlu0 %v2283, 32
    %v2286 = vpop.permute.xlu0 %2285
    %v2288 = vadd.f32 %v2278, %v2286
    %v2289 = vtanh.pop %v2288
    %2291 = vrot.lane.b32.xlu0 %v2289, 64
    %v2292 = vpop.permute.xlu0 %2291
    %v2294 = vmul.f32 %v2276, %v2292
    %2296 = vrot.lane.b32.xlu0 %v2196, 32
    %v2297 = vpop.permute.xlu0 %2296
    %v2298 = vsel %vm175, %v2297, 0
    %2300 = vmatprep.subr.mxu0 0.0
    %2301 = vmatpush1.msra.mxu0 %v2094
    %2302 = vmatprep.subr.mxu0 0.0
    %2303 = vmatpush1.msra.mxu0 %v2095
    %2304 = vmatprep.subr.mxu0 0.0
    %2305 = vmatpush1.msra.mxu0 %v2096
    %2306 = vmatprep.subr.mxu0 0.0
    %2307 = vmatpush1.msra.mxu0 %v2097
    %2308 = vmatprep.subr.mxu0 0.0
    %2309 = vmatpush1.msra.mxu0 0.0
    %2310 = vmatprep.subr.mxu0 0.0
    %2311 = vmatpush1.msra.mxu0 0.0
    %2312 = vmatprep.subr.mxu0 0.0
    %2313 = vmatpush1.msra.mxu0 0.0
    %2314 = vmatprep.subr.mxu0 0.0
    %2315 = vmatpush1.msra.mxu0 0.0
    %2316 = vmatprep.subr.mxu0 0.0
    %2317 = vmatpush1.msra.mxu0 0.0
    %2318 = vmatprep.subr.mxu0 0.0
    %2319 = vmatpush1.msra.mxu0 0.0
    %2320 = vmatprep.subr.mxu0 0.0
    %2321 = vmatpush1.msra.mxu0 0.0
    %2322 = vmatprep.subr.mxu0 0.0
    %2323 = vmatpush1.msra.mxu0 0.0
    %2324 = vmatprep.subr.mxu0 0.0
    %2325 = vmatpush1.msra.mxu0 0.0
    %2326 = vmatprep.subr.mxu0 0.0
    %2327 = vmatpush1.msra.mxu0 0.0
    %2328 = vmatprep.subr.mxu0 0.0
    %2329 = vmatpush1.msra.mxu0 0.0
    %2330 = vmatprep.subr.mxu0 0.0
    %2331 = vmatpush1.msra.mxu0 0.0
    %2332 = vmatprep.subr.mxu0 0.0
    %2333 = vmatpush1.msra.mxu0 0.0
    %2334 = vmatprep.subr.mxu0 0.0
    %2335 = vmatpush1.msra.mxu0 0.0
    %2336 = vmatprep.subr.mxu0 0.0
    %2337 = vmatpush1.msra.mxu0 0.0
    %2338 = vmatprep.subr.mxu0 0.0
    %2339 = vmatpush1.msra.mxu0 0.0
    %2340 = vmatprep.subr.mxu0 0.0
    %2341 = vmatpush1.msra.mxu0 0.0
    %2342 = vmatprep.subr.mxu0 0.0
    %2343 = vmatpush1.msra.mxu0 0.0
    %2344 = vmatprep.subr.mxu0 0.0
    %2345 = vmatpush1.msra.mxu0 0.0
    %2346 = vmatprep.subr.mxu0 0.0
    %2347 = vmatpush1.msra.mxu0 0.0
    %2348 = vmatprep.subr.mxu0 0.0
    %2349 = vmatpush1.msra.mxu0 0.0
    %2350 = vmatprep.subr.mxu0 0.0
    %2351 = vmatpush1.msra.mxu0 0.0
    %2352 = vmatprep.subr.mxu0 0.0
    %2353 = vmatpush1.msra.mxu0 0.0
    %2354 = vmatprep.subr.mxu0 0.0
    %2355 = vmatpush1.msra.mxu0 0.0
    %2356 = vmatprep.subr.mxu0 0.0
    %2357 = vmatpush1.msra.mxu0 0.0
    %2358 = vmatprep.subr.mxu0 0.0
    %2359 = vmatpush1.msra.mxu0 0.0
    %2360 = vmatprep.subr.mxu0 0.0
    %2361 = vmatpush1.msra.mxu0 0.0
    %2362 = vmatprep.subr.mxu0 0.0
    %2363 = vmatpush1.msra.mxu0 0.0
    %2364 = vmatprep.mubr.f32.mxu0 0.0
    %2365 = vmatmul.mubr.f32.gmra.mrb[0].mxu0 %v2298
    %v2366 = vpop.f32.mrb[0].mxu0
    %v2367 = vadd.f32 0.0, %v2366
    %v2368 = vpop.f32.mrb[0].mxu0
    %2369 = vdwg.mxu0
    %v2371 = vrot.slane %v2367, 6
    %v2373 = vadd.f32 %v2084, %v2371
    %v2374 = vxor.u32 %v2373, 2147483648
    %v2375 = vmul.f32 %v2374, 1.442695
    %v2376 = vpow.pop %v2375
    %v2377 = vadd.f32 %v2376, 1.0
    %v2378 = vrcp.pop %v2377
    %v2379 = vmul.f32 1.0, %v2378
    %v2380 = vtanh.pop %v2373
    %v2382 = vrot.slane %v2190, 6
    %v2384 = vmul.f32 %v2379, %v2382
    %2386 = vrot.lane.b32.xlu0 %v2380, 64
    %v2387 = vpop.permute.xlu0 %2386
    %v2389 = vmul.f32 %v2379, %v2387
    %2391 = vrot.lane.b32.xlu0 %v2389, 32
    %v2392 = vpop.permute.xlu0 %2391
    %v2394 = vadd.f32 %v2384, %v2392
    %v2395 = vtanh.pop %v2394
    %2397 = vrot.lane.b32.xlu0 %v2395, 64
    %v2398 = vpop.permute.xlu0 %2397
    %v2400 = vmul.f32 %v2379, %v2398
    %v2402 = vrot.slane %v2294, 6
    %2403 = vrot.lane.b32.xlu0 %v2402, 32
    %v2404 = vpop.permute.xlu0 %2403
    %v2405 = vsel %vm175, %v2404, 0
    %2407 = vmatprep.subr.mxu0 0.0
    %2408 = vmatpush1.msra.mxu0 %v2098
    %2409 = vmatprep.subr.mxu0 0.0
    %2410 = vmatpush1.msra.mxu0 %v2099
    %2411 = vmatprep.subr.mxu0 0.0
    %2412 = vmatpush1.msra.mxu0 %v2100
    %2413 = vmatprep.subr.mxu0 0.0
    %2414 = vmatpush1.msra.mxu0 %v2101
    %2415 = vmatprep.subr.mxu0 0.0
    %2416 = vmatpush1.msra.mxu0 0.0
    %2417 = vmatprep.subr.mxu0 0.0
    %2418 = vmatpush1.msra.mxu0 0.0
    %2419 = vmatprep.subr.mxu0 0.0
    %2420 = vmatpush1.msra.mxu0 0.0
    %2421 = vmatprep.subr.mxu0 0.0
    %2422 = vmatpush1.msra.mxu0 0.0
    %2423 = vmatprep.subr.mxu0 0.0
    %2424 = vmatpush1.msra.mxu0 0.0
    %2425 = vmatprep.subr.mxu0 0.0
    %2426 = vmatpush1.msra.mxu0 0.0
    %2427 = vmatprep.subr.mxu0 0.0
    %2428 = vmatpush1.msra.mxu0 0.0
    %2429 = vmatprep.subr.mxu0 0.0
    %2430 = vmatpush1.msra.mxu0 0.0
    %2431 = vmatprep.subr.mxu0 0.0
    %2432 = vmatpush1.msra.mxu0 0.0
    %2433 = vmatprep.subr.mxu0 0.0
    %2434 = vmatpush1.msra.mxu0 0.0
    %2435 = vmatprep.subr.mxu0 0.0
    %2436 = vmatpush1.msra.mxu0 0.0
    %2437 = vmatprep.subr.mxu0 0.0
    %2438 = vmatpush1.msra.mxu0 0.0
    %2439 = vmatprep.subr.mxu0 0.0
    %2440 = vmatpush1.msra.mxu0 0.0
    %2441 = vmatprep.subr.mxu0 0.0
    %2442 = vmatpush1.msra.mxu0 0.0
    %2443 = vmatprep.subr.mxu0 0.0
    %2444 = vmatpush1.msra.mxu0 0.0
    %2445 = vmatprep.subr.mxu0 0.0
    %2446 = vmatpush1.msra.mxu0 0.0
    %2447 = vmatprep.subr.mxu0 0.0
    %2448 = vmatpush1.msra.mxu0 0.0
    %2449 = vmatprep.subr.mxu0 0.0
    %2450 = vmatpush1.msra.mxu0 0.0
    %2451 = vmatprep.subr.mxu0 0.0
    %2452 = vmatpush1.msra.mxu0 0.0
    %2453 = vmatprep.subr.mxu0 0.0
    %2454 = vmatpush1.msra.mxu0 0.0
    %2455 = vmatprep.subr.mxu0 0.0
    %2456 = vmatpush1.msra.mxu0 0.0
    %2457 = vmatprep.subr.mxu0 0.0
    %2458 = vmatpush1.msra.mxu0 0.0
    %2459 = vmatprep.subr.mxu0 0.0
    %2460 = vmatpush1.msra.mxu0 0.0
    %2461 = vmatprep.subr.mxu0 0.0
    %2462 = vmatpush1.msra.mxu0 0.0
    %2463 = vmatprep.subr.mxu0 0.0
    %2464 = vmatpush1.msra.mxu0 0.0
    %2465 = vmatprep.subr.mxu0 0.0
    %2466 = vmatpush1.msra.mxu0 0.0
    %2467 = vmatprep.subr.mxu0 0.0
    %2468 = vmatpush1.msra.mxu0 0.0
    %2469 = vmatprep.subr.mxu0 0.0
    %2470 = vmatpush1.msra.mxu0 0.0
    %2471 = vmatprep.mubr.f32.mxu0 0.0
    %2472 = vmatmul.mubr.f32.gmra.mrb[0].mxu0 %v2405
    %v2473 = vpop.f32.mrb[0].mxu0
    %v2474 = vadd.f32 0.0, %v2473
    %v2475 = vpop.f32.mrb[0].mxu0
    %2476 = vdwg.mxu0
    %v2478 = vrot.slane %v2474, 4
    %v2480 = vadd.f32 %v2092, %v2478
    %v2481 = vxor.u32 %v2480, 2147483648
    %v2482 = vmul.f32 %v2481, 1.442695
    %v2483 = vpow.pop %v2482
    %v2484 = vadd.f32 %v2483, 1.0
    %v2485 = vrcp.pop %v2484
    %v2486 = vmul.f32 1.0, %v2485
    %v2487 = vtanh.pop %v2480
    %v2489 = vrot.slane %v2288, 2
    %v2491 = vmul.f32 %v2486, %v2489
    %2493 = vrot.lane.b32.xlu0 %v2487, 64
    %v2494 = vpop.permute.xlu0 %2493
    %v2496 = vmul.f32 %v2486, %v2494
    %2498 = vrot.lane.b32.xlu0 %v2496, 32
    %v2499 = vpop.permute.xlu0 %2498
    %v2501 = vadd.f32 %v2491, %v2499
    %v2502 = vtanh.pop %v2501
    %2504 = vrot.lane.b32.xlu0 %v2502, 64
    %v2505 = vpop.permute.xlu0 %2504
    %v2507 = vmul.f32 %v2486, %v2505
    %v2509 = vrot.slane %v2400, 2
    %2510 = vrot.lane.b32.xlu0 %v2509, 32
    %v2511 = vpop.permute.xlu0 %2510
    %v2512 = vsel %vm175, %v2511, 0
    %2514 = vmatprep.subr.mxu0 0.0
    %2515 = vmatpush1.msra.mxu0 %v2094
    %2516 = vmatprep.subr.mxu0 0.0
    %2517 = vmatpush1.msra.mxu0 %v2095
    %2518 = vmatprep.subr.mxu0 0.0
    %2519 = vmatpush1.msra.mxu0 %v2096
    %2520 = vmatprep.subr.mxu0 0.0
    %2521 = vmatpush1.msra.mxu0 %v2097
    %2522 = vmatprep.subr.mxu0 0.0
    %2523 = vmatpush1.msra.mxu0 0.0
    %2524 = vmatprep.subr.mxu0 0.0
    %2525 = vmatpush1.msra.mxu0 0.0
    %2526 = vmatprep.subr.mxu0 0.0
    %2527 = vmatpush1.msra.mxu0 0.0
    %2528 = vmatprep.subr.mxu0 0.0
    %2529 = vmatpush1.msra.mxu0 0.0
    %2530 = vmatprep.subr.mxu0 0.0
    %2531 = vmatpush1.msra.mxu0 0.0
    %2532 = vmatprep.subr.mxu0 0.0
    %2533 = vmatpush1.msra.mxu0 0.0
    %2534 = vmatprep.subr.mxu0 0.0
    %2535 = vmatpush1.msra.mxu0 0.0
    %2536 = vmatprep.subr.mxu0 0.0
    %2537 = vmatpush1.msra.mxu0 0.0
    %2538 = vmatprep.subr.mxu0 0.0
    %2539 = vmatpush1.msra.mxu0 0.0
    %2540 = vmatprep.subr.mxu0 0.0
    %2541 = vmatpush1.msra.mxu0 0.0
    %2542 = vmatprep.subr.mxu0 0.0
    %2543 = vmatpush1.msra.mxu0 0.0
    %2544 = vmatprep.subr.mxu0 0.0
    %2545 = vmatpush1.msra.mxu0 0.0
    %2546 = vmatprep.subr.mxu0 0.0
    %2547 = vmatpush1.msra.mxu0 0.0
    %2548 = vmatprep.subr.mxu0 0.0
    %2549 = vmatpush1.msra.mxu0 0.0
    %2550 = vmatprep.subr.mxu0 0.0
    %2551 = vmatpush1.msra.mxu0 0.0
    %2552 = vmatprep.subr.mxu0 0.0
    %2553 = vmatpush1.msra.mxu0 0.0
    %2554 = vmatprep.subr.mxu0 0.0
    %2555 = vmatpush1.msra.mxu0 0.0
    %2556 = vmatprep.subr.mxu0 0.0
    %2557 = vmatpush1.msra.mxu0 0.0
    %2558 = vmatprep.subr.mxu0 0.0
    %2559 = vmatpush1.msra.mxu0 0.0
    %2560 = vmatprep.subr.mxu0 0.0
    %2561 = vmatpush1.msra.mxu0 0.0
    %2562 = vmatprep.subr.mxu0 0.0
    %2563 = vmatpush1.msra.mxu0 0.0
    %2564 = vmatprep.subr.mxu0 0.0
    %2565 = vmatpush1.msra.mxu0 0.0
    %2566 = vmatprep.subr.mxu0 0.0
    %2567 = vmatpush1.msra.mxu0 0.0
    %2568 = vmatprep.subr.mxu0 0.0
    %2569 = vmatpush1.msra.mxu0 0.0
    %2570 = vmatprep.subr.mxu0 0.0
    %2571 = vmatpush1.msra.mxu0 0.0
    %2572 = vmatprep.subr.mxu0 0.0
    %2573 = vmatpush1.msra.mxu0 0.0
    %2574 = vmatprep.subr.mxu0 0.0
    %2575 = vmatpush1.msra.mxu0 0.0
    %2576 = vmatprep.subr.mxu0 0.0
    %2577 = vmatpush1.msra.mxu0 0.0
    %2578 = vmatprep.mubr.f32.mxu0 0.0
    %2579 = vmatmul.mubr.f32.gmra.mrb[0].mxu0 %v2512
    %v2580 = vpop.f32.mrb[0].mxu0
    %v2581 = vadd.f32 0.0, %v2580
    %v2582 = vpop.f32.mrb[0].mxu0
    %2583 = vdwg.mxu0
    %v2585 = vrot.slane %v2581, 4
    %v2587 = vadd.f32 %v2084, %v2585
    %v2588 = vxor.u32 %v2587, 2147483648
    %v2589 = vmul.f32 %v2588, 1.442695
    %v2590 = vpow.pop %v2589
    %v2591 = vadd.f32 %v2590, 1.0
    %v2592 = vrcp.pop %v2591
    %v2593 = vmul.f32 1.0, %v2592
    %v2594 = vtanh.pop %v2587
    %v2596 = vrot.slane %v2394, 6
    %v2598 = vmul.f32 %v2593, %v2596
    %2600 = vrot.lane.b32.xlu0 %v2594, 64
    %v2601 = vpop.permute.xlu0 %2600
    %v2603 = vmul.f32 %v2593, %v2601
    %2605 = vrot.lane.b32.xlu0 %v2603, 32
    %v2606 = vpop.permute.xlu0 %2605
    %v2608 = vadd.f32 %v2598, %v2606
    %v2609 = vtanh.pop %v2608
    %2611 = vrot.lane.b32.xlu0 %v2609, 64
    %v2612 = vpop.permute.xlu0 %2611
    %v2614 = vmul.f32 %v2593, %v2612
    %v2616 = vrot.slane %v2507, 4
    %2617 = vrot.lane.b32.xlu0 %v2616, 32
    %v2618 = vpop.permute.xlu0 %2617
    %v2619 = vsel %vm175, %v2618, 0
    %2621 = vmatprep.subr.mxu0 0.0
    %2622 = vmatpush1.msra.mxu0 %v2098
    %2623 = vmatprep.subr.mxu0 0.0
    %2624 = vmatpush1.msra.mxu0 %v2099
    %2625 = vmatprep.subr.mxu0 0.0
    %2626 = vmatpush1.msra.mxu0 %v2100
    %2627 = vmatprep.subr.mxu0 0.0
    %2628 = vmatpush1.msra.mxu0 %v2101
    %2629 = vmatprep.subr.mxu0 0.0
    %2630 = vmatpush1.msra.mxu0 0.0
    %2631 = vmatprep.subr.mxu0 0.0
    %2632 = vmatpush1.msra.mxu0 0.0
    %2633 = vmatprep.subr.mxu0 0.0
    %2634 = vmatpush1.msra.mxu0 0.0
    %2635 = vmatprep.subr.mxu0 0.0
    %2636 = vmatpush1.msra.mxu0 0.0
    %2637 = vmatprep.subr.mxu0 0.0
    %2638 = vmatpush1.msra.mxu0 0.0
    %2639 = vmatprep.subr.mxu0 0.0
    %2640 = vmatpush1.msra.mxu0 0.0
    %2641 = vmatprep.subr.mxu0 0.0
    %2642 = vmatpush1.msra.mxu0 0.0
    %2643 = vmatprep.subr.mxu0 0.0
    %2644 = vmatpush1.msra.mxu0 0.0
    %2645 = vmatprep.subr.mxu0 0.0
    %2646 = vmatpush1.msra.mxu0 0.0
    %2647 = vmatprep.subr.mxu0 0.0
    %2648 = vmatpush1.msra.mxu0 0.0
    %2649 = vmatprep.subr.mxu0 0.0
    %2650 = vmatpush1.msra.mxu0 0.0
    %2651 = vmatprep.subr.mxu0 0.0
    %2652 = vmatpush1.msra.mxu0 0.0
    %2653 = vmatprep.subr.mxu0 0.0
    %2654 = vmatpush1.msra.mxu0 0.0
    %2655 = vmatprep.subr.mxu0 0.0
    %2656 = vmatpush1.msra.mxu0 0.0
    %2657 = vmatprep.subr.mxu0 0.0
    %2658 = vmatpush1.msra.mxu0 0.0
    %2659 = vmatprep.subr.mxu0 0.0
    %2660 = vmatpush1.msra.mxu0 0.0
    %2661 = vmatprep.subr.mxu0 0.0
    %2662 = vmatpush1.msra.mxu0 0.0
    %2663 = vmatprep.subr.mxu0 0.0
    %2664 = vmatpush1.msra.mxu0 0.0
    %2665 = vmatprep.subr.mxu0 0.0
    %2666 = vmatpush1.msra.mxu0 0.0
    %2667 = vmatprep.subr.mxu0 0.0
    %2668 = vmatpush1.msra.mxu0 0.0
    %2669 = vmatprep.subr.mxu0 0.0
    %2670 = vmatpush1.msra.mxu0 0.0
    %2671 = vmatprep.subr.mxu0 0.0
    %2672 = vmatpush1.msra.mxu0 0.0
    %2673 = vmatprep.subr.mxu0 0.0
    %2674 = vmatpush1.msra.mxu0 0.0
    %2675 = vmatprep.subr.mxu0 0.0
    %2676 = vmatpush1.msra.mxu0 0.0
    %2677 = vmatprep.subr.mxu0 0.0
    %2678 = vmatpush1.msra.mxu0 0.0
    %2679 = vmatprep.subr.mxu0 0.0
    %2680 = vmatpush1.msra.mxu0 0.0
    %2681 = vmatprep.subr.mxu0 0.0
    %2682 = vmatpush1.msra.mxu0 0.0
    %2683 = vmatprep.subr.mxu0 0.0
    %2684 = vmatpush1.msra.mxu0 0.0
    %2685 = vmatprep.mubr.f32.mxu0 0.0
    %2686 = vmatmul.mubr.f32.gmra.mrb[0].mxu0 %v2619
    %v2687 = vpop.f32.mrb[0].mxu0
    %v2688 = vadd.f32 0.0, %v2687
    %v2689 = vpop.f32.mrb[0].mxu0
    %2690 = vdwg.mxu0
    %v2692 = vrot.slane %v2688, 6
    %v2694 = vadd.f32 %v2092, %v2692
    %v2695 = vxor.u32 %v2694, 2147483648
    %v2696 = vmul.f32 %v2695, 1.442695
    %v2697 = vpow.pop %v2696
    %v2698 = vadd.f32 %v2697, 1.0
    %v2699 = vrcp.pop %v2698
    %v2700 = vmul.f32 1.0, %v2699
    %v2701 = vtanh.pop %v2694
    %v2703 = vrot.slane %v2501, 2
    %v2705 = vmul.f32 %v2700, %v2703
    %2707 = vrot.lane.b32.xlu0 %v2701, 64
    %v2708 = vpop.permute.xlu0 %2707
    %v2710 = vmul.f32 %v2700, %v2708
    %2712 = vrot.lane.b32.xlu0 %v2710, 32
    %v2713 = vpop.permute.xlu0 %2712
    %v2715 = vadd.f32 %v2705, %v2713
    %v2716 = vtanh.pop %v2715
    %2718 = vrot.lane.b32.xlu0 %v2716, 64
    %v2719 = vpop.permute.xlu0 %2718
    %v2721 = vmul.f32 %v2700, %v2719
    %v2723 = vrot.slane %v2614, 4
    %2724 = vrot.lane.b32.xlu0 %v2723, 32
    %v2725 = vpop.permute.xlu0 %2724
    %v2726 = vsel %vm175, %v2725, 0
    %2728 = vmatprep.subr.mxu0 0.0
    %2729 = vmatpush1.msra.mxu0 %v2094
    %2730 = vmatprep.subr.mxu0 0.0
    %2731 = vmatpush1.msra.mxu0 %v2095
    %2732 = vmatprep.subr.mxu0 0.0
    %2733 = vmatpush1.msra.mxu0 %v2096
    %2734 = vmatprep.subr.mxu0 0.0
    %2735 = vmatpush1.msra.mxu0 %v2097
    %2736 = vmatprep.subr.mxu0 0.0
    %2737 = vmatpush1.msra.mxu0 0.0
    %2738 = vmatprep.subr.mxu0 0.0
    %2739 = vmatpush1.msra.mxu0 0.0
    %2740 = vmatprep.subr.mxu0 0.0
    %2741 = vmatpush1.msra.mxu0 0.0
    %2742 = vmatprep.subr.mxu0 0.0
    %2743 = vmatpush1.msra.mxu0 0.0
    %2744 = vmatprep.subr.mxu0 0.0
    %2745 = vmatpush1.msra.mxu0 0.0
    %2746 = vmatprep.subr.mxu0 0.0
    %2747 = vmatpush1.msra.mxu0 0.0
    %2748 = vmatprep.subr.mxu0 0.0
    %2749 = vmatpush1.msra.mxu0 0.0
    %2750 = vmatprep.subr.mxu0 0.0
    %2751 = vmatpush1.msra.mxu0 0.0
    %2752 = vmatprep.subr.mxu0 0.0
    %2753 = vmatpush1.msra.mxu0 0.0
    %2754 = vmatprep.subr.mxu0 0.0
    %2755 = vmatpush1.msra.mxu0 0.0
    %2756 = vmatprep.subr.mxu0 0.0
    %2757 = vmatpush1.msra.mxu0 0.0
    %2758 = vmatprep.subr.mxu0 0.0
    %2759 = vmatpush1.msra.mxu0 0.0
    %2760 = vmatprep.subr.mxu0 0.0
    %2761 = vmatpush1.msra.mxu0 0.0
    %2762 = vmatprep.subr.mxu0 0.0
    %2763 = vmatpush1.msra.mxu0 0.0
    %2764 = vmatprep.subr.mxu0 0.0
    %2765 = vmatpush1.msra.mxu0 0.0
    %2766 = vmatprep.subr.mxu0 0.0
    %2767 = vmatpush1.msra.mxu0 0.0
    %2768 = vmatprep.subr.mxu0 0.0
    %2769 = vmatpush1.msra.mxu0 0.0
    %2770 = vmatprep.subr.mxu0 0.0
    %2771 = vmatpush1.msra.mxu0 0.0
    %2772 = vmatprep.subr.mxu0 0.0
    %2773 = vmatpush1.msra.mxu0 0.0
    %2774 = vmatprep.subr.mxu0 0.0
    %2775 = vmatpush1.msra.mxu0 0.0
    %2776 = vmatprep.subr.mxu0 0.0
    %2777 = vmatpush1.msra.mxu0 0.0
    %2778 = vmatprep.subr.mxu0 0.0
    %2779 = vmatpush1.msra.mxu0 0.0
    %2780 = vmatprep.subr.mxu0 0.0
    %2781 = vmatpush1.msra.mxu0 0.0
    %2782 = vmatprep.subr.mxu0 0.0
    %2783 = vmatpush1.msra.mxu0 0.0
    %2784 = vmatprep.subr.mxu0 0.0
    %2785 = vmatpush1.msra.mxu0 0.0
    %2786 = vmatprep.subr.mxu0 0.0
    %2787 = vmatpush1.msra.mxu0 0.0
    %2788 = vmatprep.subr.mxu0 0.0
    %2789 = vmatpush1.msra.mxu0 0.0
    %2790 = vmatprep.subr.mxu0 0.0
    %2791 = vmatpush1.msra.mxu0 0.0
    %2792 = vmatprep.mubr.f32.mxu0 0.0
    %2793 = vmatmul.mubr.f32.gmra.mrb[0].mxu0 %v2726
    %v2794 = vpop.f32.mrb[0].mxu0
    %v2795 = vadd.f32 0.0, %v2794
    %v2796 = vpop.f32.mrb[0].mxu0
    %2797 = vdwg.mxu0
    %v2799 = vrot.slane %v2795, 2
    %v2801 = vadd.f32 %v2084, %v2799
    %v2802 = vxor.u32 %v2801, 2147483648
    %v2803 = vmul.f32 %v2802, 1.442695
    %v2804 = vpow.pop %v2803
    %v2805 = vadd.f32 %v2804, 1.0
    %v2806 = vrcp.pop %v2805
    %v2807 = vmul.f32 1.0, %v2806
    %v2808 = vtanh.pop %v2801
    %v2810 = vrot.slane %v2608, 6
    %v2812 = vmul.f32 %v2807, %v2810
    %2814 = vrot.lane.b32.xlu0 %v2808, 64
    %v2815 = vpop.permute.xlu0 %2814
    %v2817 = vmul.f32 %v2807, %v2815
    %2819 = vrot.lane.b32.xlu0 %v2817, 32
    %v2820 = vpop.permute.xlu0 %2819
    %v2822 = vadd.f32 %v2812, %v2820
    %v2823 = vtanh.pop %v2822
    %2825 = vrot.lane.b32.xlu0 %v2823, 64
    %v2826 = vpop.permute.xlu0 %2825
    %v2828 = vmul.f32 %v2807, %v2826
    %v2830 = vrot.slane %v2721, 2
    %2831 = vrot.lane.b32.xlu0 %v2830, 32
    %v2832 = vpop.permute.xlu0 %2831
    %v2833 = vsel %vm175, %v2832, 0
    %2835 = vmatprep.subr.mxu0 0.0
    %2836 = vmatpush1.msra.mxu0 %v2098
    %2837 = vmatprep.subr.mxu0 0.0
    %2838 = vmatpush1.msra.mxu0 %v2099
    %2839 = vmatprep.subr.mxu0 0.0
    %2840 = vmatpush1.msra.mxu0 %v2100
    %2841 = vmatprep.subr.mxu0 0.0
    %2842 = vmatpush1.msra.mxu0 %v2101
    %2843 = vmatprep.subr.mxu0 0.0
    %2844 = vmatpush1.msra.mxu0 0.0
    %2845 = vmatprep.subr.mxu0 0.0
    %2846 = vmatpush1.msra.mxu0 0.0
    %2847 = vmatprep.subr.mxu0 0.0
    %2848 = vmatpush1.msra.mxu0 0.0
    %2849 = vmatprep.subr.mxu0 0.0
    %2850 = vmatpush1.msra.mxu0 0.0
    %2851 = vmatprep.subr.mxu0 0.0
    %2852 = vmatpush1.msra.mxu0 0.0
    %2853 = vmatprep.subr.mxu0 0.0
    %2854 = vmatpush1.msra.mxu0 0.0
    %2855 = vmatprep.subr.mxu0 0.0
    %2856 = vmatpush1.msra.mxu0 0.0
    %2857 = vmatprep.subr.mxu0 0.0
    %2858 = vmatpush1.msra.mxu0 0.0
    %2859 = vmatprep.subr.mxu0 0.0
    %2860 = vmatpush1.msra.mxu0 0.0
    %2861 = vmatprep.subr.mxu0 0.0
    %2862 = vmatpush1.msra.mxu0 0.0
    %2863 = vmatprep.subr.mxu0 0.0
    %2864 = vmatpush1.msra.mxu0 0.0
    %2865 = vmatprep.subr.mxu0 0.0
    %2866 = vmatpush1.msra.mxu0 0.0
    %2867 = vmatprep.subr.mxu0 0.0
    %2868 = vmatpush1.msra.mxu0 0.0
    %2869 = vmatprep.subr.mxu0 0.0
    %2870 = vmatpush1.msra.mxu0 0.0
    %2871 = vmatprep.subr.mxu0 0.0
    %2872 = vmatpush1.msra.mxu0 0.0
    %2873 = vmatprep.subr.mxu0 0.0
    %2874 = vmatpush1.msra.mxu0 0.0
    %2875 = vmatprep.subr.mxu0 0.0
    %2876 = vmatpush1.msra.mxu0 0.0
    %2877 = vmatprep.subr.mxu0 0.0
    %2878 = vmatpush1.msra.mxu0 0.0
    %2879 = vmatprep.subr.mxu0 0.0
    %2880 = vmatpush1.msra.mxu0 0.0
    %2881 = vmatprep.subr.mxu0 0.0
    %2882 = vmatpush1.msra.mxu0 0.0
    %2883 = vmatprep.subr.mxu0 0.0
    %2884 = vmatpush1.msra.mxu0 0.0
    %2885 = vmatprep.subr.mxu0 0.0
    %2886 = vmatpush1.msra.mxu0 0.0
    %2887 = vmatprep.subr.mxu0 0.0
    %2888 = vmatpush1.msra.mxu0 0.0
    %2889 = vmatprep.subr.mxu0 0.0
    %2890 = vmatpush1.msra.mxu0 0.0
    %2891 = vmatprep.subr.mxu0 0.0
    %2892 = vmatpush1.msra.mxu0 0.0
    %2893 = vmatprep.subr.mxu0 0.0
    %2894 = vmatpush1.msra.mxu0 0.0
    %2895 = vmatprep.subr.mxu0 0.0
    %2896 = vmatpush1.msra.mxu0 0.0
    %2897 = vmatprep.subr.mxu0 0.0
    %2898 = vmatpush1.msra.mxu0 0.0
    %2899 = vmatprep.mubr.f32.mxu0 0.0
    %2900 = vmatmul.mubr.f32.gmra.mrb[0].mxu0 %v2833
    %v2901 = vpop.f32.mrb[0].mxu0
    %v2902 = vadd.f32 0.0, %v2901
    %v2903 = vpop.f32.mrb[0].mxu0
    %2904 = vdwg.mxu0
    %v2905 = vadd.f32 %v2092, %v2902
    %v2906 = vxor.u32 %v2905, 2147483648
    %v2907 = vmul.f32 %v2906, 1.442695
    %v2908 = vpow.pop %v2907
    %v2909 = vadd.f32 %v2908, 1.0
    %v2910 = vrcp.pop %v2909
    %v2911 = vmul.f32 1.0, %v2910
    %v2912 = vtanh.pop %v2905
    %v2914 = vrot.slane %v2715, 2
    %v2916 = vmul.f32 %v2911, %v2914
    %2918 = vrot.lane.b32.xlu0 %v2912, 64
    %v2919 = vpop.permute.xlu0 %2918
    %v2921 = vmul.f32 %v2911, %v2919
    %2923 = vrot.lane.b32.xlu0 %v2921, 32
    %v2924 = vpop.permute.xlu0 %2923
    %v2926 = vadd.f32 %v2916, %v2924
    %v2927 = vtanh.pop %v2926
    %2929 = vrot.lane.b32.xlu0 %v2927, 64
    %v2930 = vpop.permute.xlu0 %2929
    %v2932 = vmul.f32 %v2911, %v2930
    %v2934 = vrot.slane %v2828, 6
    %2935 = vrot.lane.b32.xlu0 %v2934, 32
    %v2936 = vpop.permute.xlu0 %2935
    %v2937 = vsel %vm175, %v2936, 0
    %2939 = vmatprep.subr.mxu0 0.0
    %2940 = vmatpush1.msra.mxu0 %v2094
    %2941 = vmatprep.subr.mxu0 0.0
    %2942 = vmatpush1.msra.mxu0 %v2095
    %2943 = vmatprep.subr.mxu0 0.0
    %2944 = vmatpush1.msra.mxu0 %v2096
    %2945 = vmatprep.subr.mxu0 0.0
    %2946 = vmatpush1.msra.mxu0 %v2097
    %2947 = vmatprep.subr.mxu0 0.0
    %2948 = vmatpush1.msra.mxu0 0.0
    %2949 = vmatprep.subr.mxu0 0.0
    %2950 = vmatpush1.msra.mxu0 0.0
    %2951 = vmatprep.subr.mxu0 0.0
    %2952 = vmatpush1.msra.mxu0 0.0
    %2953 = vmatprep.subr.mxu0 0.0
    %2954 = vmatpush1.msra.mxu0 0.0
    %2955 = vmatprep.subr.mxu0 0.0
    %2956 = vmatpush1.msra.mxu0 0.0
    %2957 = vmatprep.subr.mxu0 0.0
    %2958 = vmatpush1.msra.mxu0 0.0
    %2959 = vmatprep.subr.mxu0 0.0
    %2960 = vmatpush1.msra.mxu0 0.0
    %2961 = vmatprep.subr.mxu0 0.0
    %2962 = vmatpush1.msra.mxu0 0.0
    %2963 = vmatprep.subr.mxu0 0.0
    %2964 = vmatpush1.msra.mxu0 0.0
    %2965 = vmatprep.subr.mxu0 0.0
    %2966 = vmatpush1.msra.mxu0 0.0
    %2967 = vmatprep.subr.mxu0 0.0
    %2968 = vmatpush1.msra.mxu0 0.0
    %2969 = vmatprep.subr.mxu0 0.0
    %2970 = vmatpush1.msra.mxu0 0.0
    %2971 = vmatprep.subr.mxu0 0.0
    %2972 = vmatpush1.msra.mxu0 0.0
    %2973 = vmatprep.subr.mxu0 0.0
    %2974 = vmatpush1.msra.mxu0 0.0
    %2975 = vmatprep.subr.mxu0 0.0
    %2976 = vmatpush1.msra.mxu0 0.0
    %2977 = vmatprep.subr.mxu0 0.0
    %2978 = vmatpush1.msra.mxu0 0.0
    %2979 = vmatprep.subr.mxu0 0.0
    %2980 = vmatpush1.msra.mxu0 0.0
    %2981 = vmatprep.subr.mxu0 0.0
    %2982 = vmatpush1.msra.mxu0 0.0
    %2983 = vmatprep.subr.mxu0 0.0
    %2984 = vmatpush1.msra.mxu0 0.0
    %2985 = vmatprep.subr.mxu0 0.0
    %2986 = vmatpush1.msra.mxu0 0.0
    %2987 = vmatprep.subr.mxu0 0.0
    %2988 = vmatpush1.msra.mxu0 0.0
    %2989 = vmatprep.subr.mxu0 0.0
    %2990 = vmatpush1.msra.mxu0 0.0
    %2991 = vmatprep.subr.mxu0 0.0
    %2992 = vmatpush1.msra.mxu0 0.0
    %2993 = vmatprep.subr.mxu0 0.0
    %2994 = vmatpush1.msra.mxu0 0.0
    %2995 = vmatprep.subr.mxu0 0.0
    %2996 = vmatpush1.msra.mxu0 0.0
    %2997 = vmatprep.subr.mxu0 0.0
    %2998 = vmatpush1.msra.mxu0 0.0
    %2999 = vmatprep.subr.mxu0 0.0
    %3000 = vmatpush1.msra.mxu0 0.0
    %3001 = vmatprep.subr.mxu0 0.0
    %3002 = vmatpush1.msra.mxu0 0.0
    %3003 = vmatprep.mubr.f32.mxu0 0.0
    %3004 = vmatmul.mubr.f32.gmra.mrb[0].mxu0 %v2937
    %v3005 = vpop.f32.mrb[0].mxu0
    %v3006 = vadd.f32 0.0, %v3005
    %v3007 = vpop.f32.mrb[0].mxu0
    %3008 = vdwg.mxu0
    %v3009 = vadd.f32 %v2090, %v3006
    %v3010 = vxor.u32 %v3009, 2147483648
    %v3011 = vmul.f32 %v3010, 1.442695
    %v3012 = vpow.pop %v3011
    %v3013 = vadd.f32 %v3012, 1.0
    %v3014 = vrcp.pop %v3013
    %v3015 = vmul.f32 1.0, %v3014
    %v3016 = vtanh.pop %v3009
    %v3018 = vrot.slane %v2822, 6
    %v3020 = vmul.f32 %v3015, %v3018
    %3022 = vrot.lane.b32.xlu0 %v3016, 64
    %v3023 = vpop.permute.xlu0 %3022
    %v3025 = vmul.f32 %v3015, %v3023
    %3027 = vrot.lane.b32.xlu0 %v3025, 32
    %v3028 = vpop.permute.xlu0 %3027
    %v3030 = vadd.f32 %v3020, %v3028
    %v3031 = vtanh.pop %v3030
    %3033 = vrot.lane.b32.xlu0 %v3031, 64
    %v3034 = vpop.permute.xlu0 %3033
    %v3036 = vmul.f32 %v3015, %v3034
    %3038 = vrot.lane.b32.xlu0 %v2932, 32
    %v3039 = vpop.permute.xlu0 %3038
    %v3040 = vsel %vm175, %v3039, 0
    %3042 = vmatprep.subr.mxu0 0.0
    %3043 = vmatpush1.msra.mxu0 %v2098
    %3044 = vmatprep.subr.mxu0 0.0
    %3045 = vmatpush1.msra.mxu0 %v2099
    %3046 = vmatprep.subr.mxu0 0.0
    %3047 = vmatpush1.msra.mxu0 %v2100
    %3048 = vmatprep.subr.mxu0 0.0
    %3049 = vmatpush1.msra.mxu0 %v2101
    %3050 = vmatprep.subr.mxu0 0.0
    %3051 = vmatpush1.msra.mxu0 0.0
    %3052 = vmatprep.subr.mxu0 0.0
    %3053 = vmatpush1.msra.mxu0 0.0
    %3054 = vmatprep.subr.mxu0 0.0
    %3055 = vmatpush1.msra.mxu0 0.0
    %3056 = vmatprep.subr.mxu0 0.0
    %3057 = vmatpush1.msra.mxu0 0.0
    %3058 = vmatprep.subr.mxu0 0.0
    %3059 = vmatpush1.msra.mxu0 0.0
    %3060 = vmatprep.subr.mxu0 0.0
    %3061 = vmatpush1.msra.mxu0 0.0
    %3062 = vmatprep.subr.mxu0 0.0
    %3063 = vmatpush1.msra.mxu0 0.0
    %3064 = vmatprep.subr.mxu0 0.0
    %3065 = vmatpush1.msra.mxu0 0.0
    %3066 = vmatprep.subr.mxu0 0.0
    %3067 = vmatpush1.msra.mxu0 0.0
    %3068 = vmatprep.subr.mxu0 0.0
    %3069 = vmatpush1.msra.mxu0 0.0
    %3070 = vmatprep.subr.mxu0 0.0
    %3071 = vmatpush1.msra.mxu0 0.0
    %3072 = vmatprep.subr.mxu0 0.0
    %3073 = vmatpush1.msra.mxu0 0.0
    %3074 = vmatprep.subr.mxu0 0.0
    %3075 = vmatpush1.msra.mxu0 0.0
    %3076 = vmatprep.subr.mxu0 0.0
    %3077 = vmatpush1.msra.mxu0 0.0
    %3078 = vmatprep.subr.mxu0 0.0
    %3079 = vmatpush1.msra.mxu0 0.0
    %3080 = vmatprep.subr.mxu0 0.0
    %3081 = vmatpush1.msra.mxu0 0.0
    %3082 = vmatprep.subr.mxu0 0.0
    %3083 = vmatpush1.msra.mxu0 0.0
    %3084 = vmatprep.subr.mxu0 0.0
    %3085 = vmatpush1.msra.mxu0 0.0
    %3086 = vmatprep.subr.mxu0 0.0
    %3087 = vmatpush1.msra.mxu0 0.0
    %3088 = vmatprep.subr.mxu0 0.0
    %3089 = vmatpush1.msra.mxu0 0.0
    %3090 = vmatprep.subr.mxu0 0.0
    %3091 = vmatpush1.msra.mxu0 0.0
    %3092 = vmatprep.subr.mxu0 0.0
    %3093 = vmatpush1.msra.mxu0 0.0
    %3094 = vmatprep.subr.mxu0 0.0
    %3095 = vmatpush1.msra.mxu0 0.0
    %3096 = vmatprep.subr.mxu0 0.0
    %3097 = vmatpush1.msra.mxu0 0.0
    %3098 = vmatprep.subr.mxu0 0.0
    %3099 = vmatpush1.msra.mxu0 0.0
    %3100 = vmatprep.subr.mxu0 0.0
    %3101 = vmatpush1.msra.mxu0 0.0
    %3102 = vmatprep.subr.mxu0 0.0
    %3103 = vmatpush1.msra.mxu0 0.0
    %3104 = vmatprep.subr.mxu0 0.0
    %3105 = vmatpush1.msra.mxu0 0.0
    %3106 = vmatprep.mubr.f32.mxu0 0.0
    %3107 = vmatmul.mubr.f32.gmra.mrb[0].mxu0 %v3040
    %v3108 = vpop.f32.mrb[0].mxu0
    %v3109 = vadd.f32 0.0, %v3108
    %v3110 = vpop.f32.mrb[0].mxu0
    %3111 = vdwg.mxu0
    %v3113 = vrot.slane %v3109, 2
    %v3115 = vadd.f32 %v2086, %v3113
    %v3116 = vxor.u32 %v3115, 2147483648
    %v3117 = vmul.f32 %v3116, 1.442695
    %v3118 = vpow.pop %v3117
    %v3119 = vadd.f32 %v3118, 1.0
    %v3120 = vrcp.pop %v3119
    %v3121 = vmul.f32 1.0, %v3120
    %v3122 = vtanh.pop %v3115
    %v3124 = vrot.slane %v2926, 2
    %v3126 = vmul.f32 %v3121, %v3124
    %3128 = vrot.lane.b32.xlu0 %v3122, 64
    %v3129 = vpop.permute.xlu0 %3128
    %v3131 = vmul.f32 %v3121, %v3129
    %3133 = vrot.lane.b32.xlu0 %v3131, 32
    %v3134 = vpop.permute.xlu0 %3133
    %v3136 = vadd.f32 %v3126, %v3134
    %v3137 = vtanh.pop %v3136
    %3139 = vrot.lane.b32.xlu0 %v3137, 64
    %v3140 = vpop.permute.xlu0 %3139
    %v3142 = vmul.f32 %v3121, %v3140
    %3144 = vrot.lane.b32.xlu0 %v3036, 32
    %v3145 = vpop.permute.xlu0 %3144
    %v3146 = vsel %vm175, %v3145, 0
    %3148 = vmatprep.subr.mxu0 0.0
    %3149 = vmatpush1.msra.mxu0 %v2094
    %3150 = vmatprep.subr.mxu0 0.0
    %3151 = vmatpush1.msra.mxu0 %v2095
    %3152 = vmatprep.subr.mxu0 0.0
    %3153 = vmatpush1.msra.mxu0 %v2096
    %3154 = vmatprep.subr.mxu0 0.0
    %3155 = vmatpush1.msra.mxu0 %v2097
    %3156 = vmatprep.subr.mxu0 0.0
    %3157 = vmatpush1.msra.mxu0 0.0
    %3158 = vmatprep.subr.mxu0 0.0
    %3159 = vmatpush1.msra.mxu0 0.0
    %3160 = vmatprep.subr.mxu0 0.0
    %3161 = vmatpush1.msra.mxu0 0.0
    %3162 = vmatprep.subr.mxu0 0.0
    %3163 = vmatpush1.msra.mxu0 0.0
    %3164 = vmatprep.subr.mxu0 0.0
    %3165 = vmatpush1.msra.mxu0 0.0
    %3166 = vmatprep.subr.mxu0 0.0
    %3167 = vmatpush1.msra.mxu0 0.0
    %3168 = vmatprep.subr.mxu0 0.0
    %3169 = vmatpush1.msra.mxu0 0.0
    %3170 = vmatprep.subr.mxu0 0.0
    %3171 = vmatpush1.msra.mxu0 0.0
    %3172 = vmatprep.subr.mxu0 0.0
    %3173 = vmatpush1.msra.mxu0 0.0
    %3174 = vmatprep.subr.mxu0 0.0
    %3175 = vmatpush1.msra.mxu0 0.0
    %3176 = vmatprep.subr.mxu0 0.0
    %3177 = vmatpush1.msra.mxu0 0.0
    %3178 = vmatprep.subr.mxu0 0.0
    %3179 = vmatpush1.msra.mxu0 0.0
    %3180 = vmatprep.subr.mxu0 0.0
    %3181 = vmatpush1.msra.mxu0 0.0
    %3182 = vmatprep.subr.mxu0 0.0
    %3183 = vmatpush1.msra.mxu0 0.0
    %3184 = vmatprep.subr.mxu0 0.0
    %3185 = vmatpush1.msra.mxu0 0.0
    %3186 = vmatprep.subr.mxu0 0.0
    %3187 = vmatpush1.msra.mxu0 0.0
    %3188 = vmatprep.subr.mxu0 0.0
    %3189 = vmatpush1.msra.mxu0 0.0
    %3190 = vmatprep.subr.mxu0 0.0
    %3191 = vmatpush1.msra.mxu0 0.0
    %3192 = vmatprep.subr.mxu0 0.0
    %3193 = vmatpush1.msra.mxu0 0.0
    %3194 = vmatprep.subr.mxu0 0.0
    %3195 = vmatpush1.msra.mxu0 0.0
    %3196 = vmatprep.subr.mxu0 0.0
    %3197 = vmatpush1.msra.mxu0 0.0
    %3198 = vmatprep.subr.mxu0 0.0
    %3199 = vmatpush1.msra.mxu0 0.0
    %3200 = vmatprep.subr.mxu0 0.0
    %3201 = vmatpush1.msra.mxu0 0.0
    %3202 = vmatprep.subr.mxu0 0.0
    %3203 = vmatpush1.msra.mxu0 0.0
    %3204 = vmatprep.subr.mxu0 0.0
    %3205 = vmatpush1.msra.mxu0 0.0
    %3206 = vmatprep.subr.mxu0 0.0
    %3207 = vmatpush1.msra.mxu0 0.0
    %3208 = vmatprep.subr.mxu0 0.0
    %3209 = vmatpush1.msra.mxu0 0.0
    %3210 = vmatprep.subr.mxu0 0.0
    %3211 = vmatpush1.msra.mxu0 0.0
    %3212 = vmatprep.mubr.f32.mxu0 0.0
    %3213 = vmatmul.mubr.f32.gmra.mrb[0].mxu0 %v3146
    %v3214 = vpop.f32.mrb[0].mxu0
    %v3215 = vadd.f32 0.0, %v3214
    %v3216 = vpop.f32.mrb[0].mxu0
    %3217 = vdwg.mxu0
    %v3219 = vrot.slane %v3215, 6
    %v3221 = vadd.f32 %v2090, %v3219
    %v3222 = vxor.u32 %v3221, 2147483648
    %v3223 = vmul.f32 %v3222, 1.442695
    %v3224 = vpow.pop %v3223
    %v3225 = vadd.f32 %v3224, 1.0
    %v3226 = vrcp.pop %v3225
    %v3227 = vmul.f32 1.0, %v3226
    %v3228 = vtanh.pop %v3221
    %v3230 = vrot.slane %v3030, 6
    %v3232 = vmul.f32 %v3227, %v3230
    %3234 = vrot.lane.b32.xlu0 %v3228, 64
    %v3235 = vpop.permute.xlu0 %3234
    %v3237 = vmul.f32 %v3227, %v3235
    %3239 = vrot.lane.b32.xlu0 %v3237, 32
    %v3240 = vpop.permute.xlu0 %3239
    %v3242 = vadd.f32 %v3232, %v3240
    %v3243 = vtanh.pop %v3242
    %3245 = vrot.lane.b32.xlu0 %v3243, 64
    %v3246 = vpop.permute.xlu0 %3245
    %v3248 = vmul.f32 %v3227, %v3246
    %v3250 = vrot.slane %v3142, 6
    %3251 = vrot.lane.b32.xlu0 %v3250, 32
    %v3252 = vpop.permute.xlu0 %3251
    %v3253 = vsel %vm175, %v3252, 0
    %3255 = vmatprep.subr.mxu0 0.0
    %3256 = vmatpush1.msra.mxu0 %v2098
    %3257 = vmatprep.subr.mxu0 0.0
    %3258 = vmatpush1.msra.mxu0 %v2099
    %3259 = vmatprep.subr.mxu0 0.0
    %3260 = vmatpush1.msra.mxu0 %v2100
    %3261 = vmatprep.subr.mxu0 0.0
    %3262 = vmatpush1.msra.mxu0 %v2101
    %3263 = vmatprep.subr.mxu0 0.0
    %3264 = vmatpush1.msra.mxu0 0.0
    %3265 = vmatprep.subr.mxu0 0.0
    %3266 = vmatpush1.msra.mxu0 0.0
    %3267 = vmatprep.subr.mxu0 0.0
    %3268 = vmatpush1.msra.mxu0 0.0
    %3269 = vmatprep.subr.mxu0 0.0
    %3270 = vmatpush1.msra.mxu0 0.0
    %3271 = vmatprep.subr.mxu0 0.0
    %3272 = vmatpush1.msra.mxu0 0.0
    %3273 = vmatprep.subr.mxu0 0.0
    %3274 = vmatpush1.msra.mxu0 0.0
    %3275 = vmatprep.subr.mxu0 0.0
    %3276 = vmatpush1.msra.mxu0 0.0
    %3277 = vmatprep.subr.mxu0 0.0
    %3278 = vmatpush1.msra.mxu0 0.0
    %3279 = vmatprep.subr.mxu0 0.0
    %3280 = vmatpush1.msra.mxu0 0.0
    %3281 = vmatprep.subr.mxu0 0.0
    %3282 = vmatpush1.msra.mxu0 0.0
    %3283 = vmatprep.subr.mxu0 0.0
    %3284 = vmatpush1.msra.mxu0 0.0
    %3285 = vmatprep.subr.mxu0 0.0
    %3286 = vmatpush1.msra.mxu0 0.0
    %3287 = vmatprep.subr.mxu0 0.0
    %3288 = vmatpush1.msra.mxu0 0.0
    %3289 = vmatprep.subr.mxu0 0.0
    %3290 = vmatpush1.msra.mxu0 0.0
    %3291 = vmatprep.subr.mxu0 0.0
    %3292 = vmatpush1.msra.mxu0 0.0
    %3293 = vmatprep.subr.mxu0 0.0
    %3294 = vmatpush1.msra.mxu0 0.0
    %3295 = vmatprep.subr.mxu0 0.0
    %3296 = vmatpush1.msra.mxu0 0.0
    %3297 = vmatprep.subr.mxu0 0.0
    %3298 = vmatpush1.msra.mxu0 0.0
    %3299 = vmatprep.subr.mxu0 0.0
    %3300 = vmatpush1.msra.mxu0 0.0
    %3301 = vmatprep.subr.mxu0 0.0
    %3302 = vmatpush1.msra.mxu0 0.0
    %3303 = vmatprep.subr.mxu0 0.0
    %3304 = vmatpush1.msra.mxu0 0.0
    %3305 = vmatprep.subr.mxu0 0.0
    %3306 = vmatpush1.msra.mxu0 0.0
    %3307 = vmatprep.subr.mxu0 0.0
    %3308 = vmatpush1.msra.mxu0 0.0
    %3309 = vmatprep.subr.mxu0 0.0
    %3310 = vmatpush1.msra.mxu0 0.0
    %3311 = vmatprep.subr.mxu0 0.0
    %3312 = vmatpush1.msra.mxu0 0.0
    %3313 = vmatprep.subr.mxu0 0.0
    %3314 = vmatpush1.msra.mxu0 0.0
    %3315 = vmatprep.subr.mxu0 0.0
    %3316 = vmatpush1.msra.mxu0 0.0
    %3317 = vmatprep.subr.mxu0 0.0
    %3318 = vmatpush1.msra.mxu0 0.0
    %3319 = vmatprep.mubr.f32.mxu0 0.0
    %3320 = vmatmul.mubr.f32.gmra.mrb[0].mxu0 %v3253
    %v3321 = vpop.f32.mrb[0].mxu0
    %v3322 = vadd.f32 0.0, %v3321
    %v3323 = vpop.f32.mrb[0].mxu0
    %3324 = vdwg.mxu0
    %v3326 = vrot.slane %v3322, 4
    %v3328 = vadd.f32 %v2086, %v3326
    %v3329 = vxor.u32 %v3328, 2147483648
    %v3330 = vmul.f32 %v3329, 1.442695
    %v3331 = vpow.pop %v3330
    %v3332 = vadd.f32 %v3331, 1.0
    %v3333 = vrcp.pop %v3332
    %v3334 = vmul.f32 1.0, %v3333
    %v3335 = vtanh.pop %v3328
    %v3337 = vrot.slane %v3136, 2
    %v3339 = vmul.f32 %v3334, %v3337
    %3341 = vrot.lane.b32.xlu0 %v3335, 64
    %v3342 = vpop.permute.xlu0 %3341
    %v3344 = vmul.f32 %v3334, %v3342
    %3346 = vrot.lane.b32.xlu0 %v3344, 32
    %v3347 = vpop.permute.xlu0 %3346
    %v3349 = vadd.f32 %v3339, %v3347
    %v3350 = vtanh.pop %v3349
    %3352 = vrot.lane.b32.xlu0 %v3350, 64
    %v3353 = vpop.permute.xlu0 %3352
    %v3355 = vmul.f32 %v3334, %v3353
    %v3357 = vrot.slane %v3248, 2
    %3358 = vrot.lane.b32.xlu0 %v3357, 32
    %v3359 = vpop.permute.xlu0 %3358
    %v3360 = vsel %vm175, %v3359, 0
    %3362 = vmatprep.subr.mxu0 0.0
    %3363 = vmatpush1.msra.mxu0 %v2094
    %3364 = vmatprep.subr.mxu0 0.0
    %3365 = vmatpush1.msra.mxu0 %v2095
    %3366 = vmatprep.subr.mxu0 0.0
    %3367 = vmatpush1.msra.mxu0 %v2096
    %3368 = vmatprep.subr.mxu0 0.0
    %3369 = vmatpush1.msra.mxu0 %v2097
    %3370 = vmatprep.subr.mxu0 0.0
    %3371 = vmatpush1.msra.mxu0 0.0
    %3372 = vmatprep.subr.mxu0 0.0
    %3373 = vmatpush1.msra.mxu0 0.0
    %3374 = vmatprep.subr.mxu0 0.0
    %3375 = vmatpush1.msra.mxu0 0.0
    %3376 = vmatprep.subr.mxu0 0.0
    %3377 = vmatpush1.msra.mxu0 0.0
    %3378 = vmatprep.subr.mxu0 0.0
    %3379 = vmatpush1.msra.mxu0 0.0
    %3380 = vmatprep.subr.mxu0 0.0
    %3381 = vmatpush1.msra.mxu0 0.0
    %3382 = vmatprep.subr.mxu0 0.0
    %3383 = vmatpush1.msra.mxu0 0.0
    %3384 = vmatprep.subr.mxu0 0.0
    %3385 = vmatpush1.msra.mxu0 0.0
    %3386 = vmatprep.subr.mxu0 0.0
    %3387 = vmatpush1.msra.mxu0 0.0
    %3388 = vmatprep.subr.mxu0 0.0
    %3389 = vmatpush1.msra.mxu0 0.0
    %3390 = vmatprep.subr.mxu0 0.0
    %3391 = vmatpush1.msra.mxu0 0.0
    %3392 = vmatprep.subr.mxu0 0.0
    %3393 = vmatpush1.msra.mxu0 0.0
    %3394 = vmatprep.subr.mxu0 0.0
    %3395 = vmatpush1.msra.mxu0 0.0
    %3396 = vmatprep.subr.mxu0 0.0
    %3397 = vmatpush1.msra.mxu0 0.0
    %3398 = vmatprep.subr.mxu0 0.0
    %3399 = vmatpush1.msra.mxu0 0.0
    %3400 = vmatprep.subr.mxu0 0.0
    %3401 = vmatpush1.msra.mxu0 0.0
    %3402 = vmatprep.subr.mxu0 0.0
    %3403 = vmatpush1.msra.mxu0 0.0
    %3404 = vmatprep.subr.mxu0 0.0
    %3405 = vmatpush1.msra.mxu0 0.0
    %3406 = vmatprep.subr.mxu0 0.0
    %3407 = vmatpush1.msra.mxu0 0.0
    %3408 = vmatprep.subr.mxu0 0.0
    %3409 = vmatpush1.msra.mxu0 0.0
    %3410 = vmatprep.subr.mxu0 0.0
    %3411 = vmatpush1.msra.mxu0 0.0
    %3412 = vmatprep.subr.mxu0 0.0
    %3413 = vmatpush1.msra.mxu0 0.0
    %3414 = vmatprep.subr.mxu0 0.0
    %3415 = vmatpush1.msra.mxu0 0.0
    %3416 = vmatprep.subr.mxu0 0.0
    %3417 = vmatpush1.msra.mxu0 0.0
    %3418 = vmatprep.subr.mxu0 0.0
    %3419 = vmatpush1.msra.mxu0 0.0
    %3420 = vmatprep.subr.mxu0 0.0
    %3421 = vmatpush1.msra.mxu0 0.0
    %3422 = vmatprep.subr.mxu0 0.0
    %3423 = vmatpush1.msra.mxu0 0.0
    %3424 = vmatprep.subr.mxu0 0.0
    %3425 = vmatpush1.msra.mxu0 0.0
    %3426 = vmatprep.mubr.f32.mxu0 0.0
    %3427 = vmatmul.mubr.f32.gmra.mrb[0].mxu0 %v3360
    %v3428 = vpop.f32.mrb[0].mxu0
    %v3429 = vadd.f32 0.0, %v3428
    %v3430 = vpop.f32.mrb[0].mxu0
    %3431 = vdwg.mxu0
    %v3433 = vrot.slane %v3429, 4
    %v3435 = vadd.f32 %v2090, %v3433
    %v3436 = vxor.u32 %v3435, 2147483648
    %v3437 = vmul.f32 %v3436, 1.442695
    %v3438 = vpow.pop %v3437
    %v3439 = vadd.f32 %v3438, 1.0
    %v3440 = vrcp.pop %v3439
    %v3441 = vmul.f32 1.0, %v3440
    %v3442 = vtanh.pop %v3435
    %v3444 = vrot.slane %v3242, 6
    %v3446 = vmul.f32 %v3441, %v3444
    %3448 = vrot.lane.b32.xlu0 %v3442, 64
    %v3449 = vpop.permute.xlu0 %3448
    %v3451 = vmul.f32 %v3441, %v3449
    %3453 = vrot.lane.b32.xlu0 %v3451, 32
    %v3454 = vpop.permute.xlu0 %3453
    %v3456 = vadd.f32 %v3446, %v3454
    %v3457 = vtanh.pop %v3456
    %3459 = vrot.lane.b32.xlu0 %v3457, 64
    %v3460 = vpop.permute.xlu0 %3459
    %v3462 = vmul.f32 %v3441, %v3460
    %v3464 = vrot.slane %v3355, 4
    %3465 = vrot.lane.b32.xlu0 %v3464, 32
    %v3466 = vpop.permute.xlu0 %3465
    %v3467 = vsel %vm175, %v3466, 0
    %3469 = vmatprep.subr.mxu0 0.0
    %3470 = vmatpush1.msra.mxu0 %v2098
    %3471 = vmatprep.subr.mxu0 0.0
    %3472 = vmatpush1.msra.mxu0 %v2099
    %3473 = vmatprep.subr.mxu0 0.0
    %3474 = vmatpush1.msra.mxu0 %v2100
    %3475 = vmatprep.subr.mxu0 0.0
    %3476 = vmatpush1.msra.mxu0 %v2101
    %3477 = vmatprep.subr.mxu0 0.0
    %3478 = vmatpush1.msra.mxu0 0.0
    %3479 = vmatprep.subr.mxu0 0.0
    %3480 = vmatpush1.msra.mxu0 0.0
    %3481 = vmatprep.subr.mxu0 0.0
    %3482 = vmatpush1.msra.mxu0 0.0
    %3483 = vmatprep.subr.mxu0 0.0
    %3484 = vmatpush1.msra.mxu0 0.0
    %3485 = vmatprep.subr.mxu0 0.0
    %3486 = vmatpush1.msra.mxu0 0.0
    %3487 = vmatprep.subr.mxu0 0.0
    %3488 = vmatpush1.msra.mxu0 0.0
    %3489 = vmatprep.subr.mxu0 0.0
    %3490 = vmatpush1.msra.mxu0 0.0
    %3491 = vmatprep.subr.mxu0 0.0
    %3492 = vmatpush1.msra.mxu0 0.0
    %3493 = vmatprep.subr.mxu0 0.0
    %3494 = vmatpush1.msra.mxu0 0.0
    %3495 = vmatprep.subr.mxu0 0.0
    %3496 = vmatpush1.msra.mxu0 0.0
    %3497 = vmatprep.subr.mxu0 0.0
    %3498 = vmatpush1.msra.mxu0 0.0
    %3499 = vmatprep.subr.mxu0 0.0
    %3500 = vmatpush1.msra.mxu0 0.0
    %3501 = vmatprep.subr.mxu0 0.0
    %3502 = vmatpush1.msra.mxu0 0.0
    %3503 = vmatprep.subr.mxu0 0.0
    %3504 = vmatpush1.msra.mxu0 0.0
    %3505 = vmatprep.subr.mxu0 0.0
    %3506 = vmatpush1.msra.mxu0 0.0
    %3507 = vmatprep.subr.mxu0 0.0
    %3508 = vmatpush1.msra.mxu0 0.0
    %3509 = vmatprep.subr.mxu0 0.0
    %3510 = vmatpush1.msra.mxu0 0.0
    %3511 = vmatprep.subr.mxu0 0.0
    %3512 = vmatpush1.msra.mxu0 0.0
    %3513 = vmatprep.subr.mxu0 0.0
    %3514 = vmatpush1.msra.mxu0 0.0
    %3515 = vmatprep.subr.mxu0 0.0
    %3516 = vmatpush1.msra.mxu0 0.0
    %3517 = vmatprep.subr.mxu0 0.0
    %3518 = vmatpush1.msra.mxu0 0.0
    %3519 = vmatprep.subr.mxu0 0.0
    %3520 = vmatpush1.msra.mxu0 0.0
    %3521 = vmatprep.subr.mxu0 0.0
    %3522 = vmatpush1.msra.mxu0 0.0
    %3523 = vmatprep.subr.mxu0 0.0
    %3524 = vmatpush1.msra.mxu0 0.0
    %3525 = vmatprep.subr.mxu0 0.0
    %3526 = vmatpush1.msra.mxu0 0.0
    %3527 = vmatprep.subr.mxu0 0.0
    %3528 = vmatpush1.msra.mxu0 0.0
    %3529 = vmatprep.subr.mxu0 0.0
    %3530 = vmatpush1.msra.mxu0 0.0
    %3531 = vmatprep.subr.mxu0 0.0
    %3532 = vmatpush1.msra.mxu0 0.0
    %3533 = vmatprep.mubr.f32.mxu0 0.0
    %3534 = vmatmul.mubr.f32.gmra.mrb[0].mxu0 %v3467
    %v3535 = vpop.f32.mrb[0].mxu0
    %v3536 = vadd.f32 0.0, %v3535
    %v3537 = vpop.f32.mrb[0].mxu0
    %3538 = vdwg.mxu0
    %v3540 = vrot.slane %v3536, 6
    %v3542 = vadd.f32 %v2086, %v3540
    %v3543 = vxor.u32 %v3542, 2147483648
    %v3544 = vmul.f32 %v3543, 1.442695
    %v3545 = vpow.pop %v3544
    %v3546 = vadd.f32 %v3545, 1.0
    %v3547 = vrcp.pop %v3546
    %v3548 = vmul.f32 1.0, %v3547
    %v3549 = vtanh.pop %v3542
    %v3551 = vrot.slane %v3349, 2
    %v3553 = vmul.f32 %v3548, %v3551
    %3555 = vrot.lane.b32.xlu0 %v3549, 64
    %v3556 = vpop.permute.xlu0 %3555
    %v3558 = vmul.f32 %v3548, %v3556
    %3560 = vrot.lane.b32.xlu0 %v3558, 32
    %v3561 = vpop.permute.xlu0 %3560
    %v3563 = vadd.f32 %v3553, %v3561
    %v3564 = vtanh.pop %v3563
    %3566 = vrot.lane.b32.xlu0 %v3564, 64
    %v3567 = vpop.permute.xlu0 %3566
    %v3569 = vmul.f32 %v3548, %v3567
    %v3571 = vrot.slane %v3462, 4
    %3572 = vrot.lane.b32.xlu0 %v3571, 32
    %v3573 = vpop.permute.xlu0 %3572
    %v3574 = vsel %vm175, %v3573, 0
    %3576 = vmatprep.subr.mxu0 0.0
    %3577 = vmatpush1.msra.mxu0 %v2094
    %3578 = vmatprep.subr.mxu0 0.0
    %3579 = vmatpush1.msra.mxu0 %v2095
    %3580 = vmatprep.subr.mxu0 0.0
    %3581 = vmatpush1.msra.mxu0 %v2096
    %3582 = vmatprep.subr.mxu0 0.0
    %3583 = vmatpush1.msra.mxu0 %v2097
    %3584 = vmatprep.subr.mxu0 0.0
    %3585 = vmatpush1.msra.mxu0 0.0
    %3586 = vmatprep.subr.mxu0 0.0
    %3587 = vmatpush1.msra.mxu0 0.0
    %3588 = vmatprep.subr.mxu0 0.0
    %3589 = vmatpush1.msra.mxu0 0.0
    %3590 = vmatprep.subr.mxu0 0.0
    %3591 = vmatpush1.msra.mxu0 0.0
    %3592 = vmatprep.subr.mxu0 0.0
    %3593 = vmatpush1.msra.mxu0 0.0
    %3594 = vmatprep.subr.mxu0 0.0
    %3595 = vmatpush1.msra.mxu0 0.0
    %3596 = vmatprep.subr.mxu0 0.0
    %3597 = vmatpush1.msra.mxu0 0.0
    %3598 = vmatprep.subr.mxu0 0.0
    %3599 = vmatpush1.msra.mxu0 0.0
    %3600 = vmatprep.subr.mxu0 0.0
    %3601 = vmatpush1.msra.mxu0 0.0
    %3602 = vmatprep.subr.mxu0 0.0
    %3603 = vmatpush1.msra.mxu0 0.0
    %3604 = vmatprep.subr.mxu0 0.0
    %3605 = vmatpush1.msra.mxu0 0.0
    %3606 = vmatprep.subr.mxu0 0.0
    %3607 = vmatpush1.msra.mxu0 0.0
    %3608 = vmatprep.subr.mxu0 0.0
    %3609 = vmatpush1.msra.mxu0 0.0
    %3610 = vmatprep.subr.mxu0 0.0
    %3611 = vmatpush1.msra.mxu0 0.0
    %3612 = vmatprep.subr.mxu0 0.0
    %3613 = vmatpush1.msra.mxu0 0.0
    %3614 = vmatprep.subr.mxu0 0.0
    %3615 = vmatpush1.msra.mxu0 0.0
    %3616 = vmatprep.subr.mxu0 0.0
    %3617 = vmatpush1.msra.mxu0 0.0
    %3618 = vmatprep.subr.mxu0 0.0
    %3619 = vmatpush1.msra.mxu0 0.0
    %3620 = vmatprep.subr.mxu0 0.0
    %3621 = vmatpush1.msra.mxu0 0.0
    %3622 = vmatprep.subr.mxu0 0.0
    %3623 = vmatpush1.msra.mxu0 0.0
    %3624 = vmatprep.subr.mxu0 0.0
    %3625 = vmatpush1.msra.mxu0 0.0
    %3626 = vmatprep.subr.mxu0 0.0
    %3627 = vmatpush1.msra.mxu0 0.0
    %3628 = vmatprep.subr.mxu0 0.0
    %3629 = vmatpush1.msra.mxu0 0.0
    %3630 = vmatprep.subr.mxu0 0.0
    %3631 = vmatpush1.msra.mxu0 0.0
    %3632 = vmatprep.subr.mxu0 0.0
    %3633 = vmatpush1.msra.mxu0 0.0
    %3634 = vmatprep.subr.mxu0 0.0
    %3635 = vmatpush1.msra.mxu0 0.0
    %3636 = vmatprep.subr.mxu0 0.0
    %3637 = vmatpush1.msra.mxu0 0.0
    %3638 = vmatprep.subr.mxu0 0.0
    %3639 = vmatpush1.msra.mxu0 0.0
    %3640 = vmatprep.mubr.f32.mxu0 0.0
    %3641 = vmatmul.mubr.f32.gmra.mrb[0].mxu0 %v3574
    %v3642 = vpop.f32.mrb[0].mxu0
    %v3643 = vadd.f32 0.0, %v3642
    %v3644 = vpop.f32.mrb[0].mxu0
    %3645 = vdwg.mxu0
    %v3647 = vrot.slane %v3643, 2
    %v3649 = vadd.f32 %v2090, %v3647
    %v3650 = vxor.u32 %v3649, 2147483648
    %v3651 = vmul.f32 %v3650, 1.442695
    %v3652 = vpow.pop %v3651
    %v3653 = vadd.f32 %v3652, 1.0
    %v3654 = vrcp.pop %v3653
    %v3655 = vmul.f32 1.0, %v3654
    %v3656 = vtanh.pop %v3649
    %v3658 = vrot.slane %v3456, 6
    %v3660 = vmul.f32 %v3655, %v3658
    %3662 = vrot.lane.b32.xlu0 %v3656, 64
    %v3663 = vpop.permute.xlu0 %3662
    %v3665 = vmul.f32 %v3655, %v3663
    %3667 = vrot.lane.b32.xlu0 %v3665, 32
    %v3668 = vpop.permute.xlu0 %3667
    %v3670 = vadd.f32 %v3660, %v3668
    %v3671 = vtanh.pop %v3670
    %3673 = vrot.lane.b32.xlu0 %v3671, 64
    %v3674 = vpop.permute.xlu0 %3673
    %v3676 = vmul.f32 %v3655, %v3674
    %v3678 = vrot.slane %v3569, 2
    %3679 = vrot.lane.b32.xlu0 %v3678, 32
    %v3680 = vpop.permute.xlu0 %3679
    %v3681 = vsel %vm175, %v3680, 0
    %3683 = vmatprep.subr.mxu0 0.0
    %3684 = vmatpush1.msra.mxu0 %v2098
    %3685 = vmatprep.subr.mxu0 0.0
    %3686 = vmatpush1.msra.mxu0 %v2099
    %3687 = vmatprep.subr.mxu0 0.0
    %3688 = vmatpush1.msra.mxu0 %v2100
    %3689 = vmatprep.subr.mxu0 0.0
    %3690 = vmatpush1.msra.mxu0 %v2101
    %3691 = vmatprep.subr.mxu0 0.0
    %3692 = vmatpush1.msra.mxu0 0.0
    %3693 = vmatprep.subr.mxu0 0.0
    %3694 = vmatpush1.msra.mxu0 0.0
    %3695 = vmatprep.subr.mxu0 0.0
    %3696 = vmatpush1.msra.mxu0 0.0
    %3697 = vmatprep.subr.mxu0 0.0
    %3698 = vmatpush1.msra.mxu0 0.0
    %3699 = vmatprep.subr.mxu0 0.0
    %3700 = vmatpush1.msra.mxu0 0.0
    %3701 = vmatprep.subr.mxu0 0.0
    %3702 = vmatpush1.msra.mxu0 0.0
    %3703 = vmatprep.subr.mxu0 0.0
    %3704 = vmatpush1.msra.mxu0 0.0
    %3705 = vmatprep.subr.mxu0 0.0
    %3706 = vmatpush1.msra.mxu0 0.0
    %3707 = vmatprep.subr.mxu0 0.0
    %3708 = vmatpush1.msra.mxu0 0.0
    %3709 = vmatprep.subr.mxu0 0.0
    %3710 = vmatpush1.msra.mxu0 0.0
    %3711 = vmatprep.subr.mxu0 0.0
    %3712 = vmatpush1.msra.mxu0 0.0
    %3713 = vmatprep.subr.mxu0 0.0
    %3714 = vmatpush1.msra.mxu0 0.0
    %3715 = vmatprep.subr.mxu0 0.0
    %3716 = vmatpush1.msra.mxu0 0.0
    %3717 = vmatprep.subr.mxu0 0.0
    %3718 = vmatpush1.msra.mxu0 0.0
    %3719 = vmatprep.subr.mxu0 0.0
    %3720 = vmatpush1.msra.mxu0 0.0
    %3721 = vmatprep.subr.mxu0 0.0
    %3722 = vmatpush1.msra.mxu0 0.0
    %3723 = vmatprep.subr.mxu0 0.0
    %3724 = vmatpush1.msra.mxu0 0.0
    %3725 = vmatprep.subr.mxu0 0.0
    %3726 = vmatpush1.msra.mxu0 0.0
    %3727 = vmatprep.subr.mxu0 0.0
    %3728 = vmatpush1.msra.mxu0 0.0
    %3729 = vmatprep.subr.mxu0 0.0
    %3730 = vmatpush1.msra.mxu0 0.0
    %3731 = vmatprep.subr.mxu0 0.0
    %3732 = vmatpush1.msra.mxu0 0.0
    %3733 = vmatprep.subr.mxu0 0.0
    %3734 = vmatpush1.msra.mxu0 0.0
    %3735 = vmatprep.subr.mxu0 0.0
    %3736 = vmatpush1.msra.mxu0 0.0
    %3737 = vmatprep.subr.mxu0 0.0
    %3738 = vmatpush1.msra.mxu0 0.0
    %3739 = vmatprep.subr.mxu0 0.0
    %3740 = vmatpush1.msra.mxu0 0.0
    %3741 = vmatprep.subr.mxu0 0.0
    %3742 = vmatpush1.msra.mxu0 0.0
    %3743 = vmatprep.subr.mxu0 0.0
    %3744 = vmatpush1.msra.mxu0 0.0
    %3745 = vmatprep.subr.mxu0 0.0
    %3746 = vmatpush1.msra.mxu0 0.0
    %3747 = vmatprep.mubr.f32.mxu0 0.0
    %3748 = vmatmul.mubr.f32.gmra.mrb[0].mxu0 %v3681
    %v3749 = vpop.f32.mrb[0].mxu0
    %v3750 = vadd.f32 0.0, %v3749
    %v3751 = vpop.f32.mrb[0].mxu0
    %3752 = vdwg.mxu0
    %v3753 = vadd.f32 %v2086, %v3750
    %v3754 = vxor.u32 %v3753, 2147483648
    %v3755 = vmul.f32 %v3754, 1.442695
    %v3756 = vpow.pop %v3755
    %v3757 = vadd.f32 %v3756, 1.0
    %v3758 = vrcp.pop %v3757
    %v3759 = vmul.f32 1.0, %v3758
    %v3760 = vtanh.pop %v3753
    %v3762 = vrot.slane %v3563, 2
    %v3764 = vmul.f32 %v3759, %v3762
    %3766 = vrot.lane.b32.xlu0 %v3760, 64
    %v3767 = vpop.permute.xlu0 %3766
    %v3769 = vmul.f32 %v3759, %v3767
    %3771 = vrot.lane.b32.xlu0 %v3769, 32
    %v3772 = vpop.permute.xlu0 %3771
    %v3774 = vadd.f32 %v3764, %v3772
    %v3775 = vtanh.pop %v3774
    %3777 = vrot.lane.b32.xlu0 %v3775, 64
    %v3778 = vpop.permute.xlu0 %3777
    %v3780 = vmul.f32 %v3759, %v3778
    %v3781 = vsel %vm1949, %v2196, %v2400
    %v3782 = vsel %vm1951, %v3781, %v2614
    %v3783 = vsel %vm1953, %v3782, %v2828
    %v3784 = vsel %vm1949, %v3036, %v3248
    %v3785 = vsel %vm1951, %v3784, %v3462
    %v3786 = vsel %vm1953, %v3785, %v3676
    %v3787 = vsel %vm1949, %v3780, %v3569
    %v3788 = vsel %vm1951, %v3787, %v3355
    %v3789 = vsel %vm1953, %v3788, %v3142
    %v3790 = vsel %vm1949, %v2932, %v2721
    %v3791 = vsel %vm1951, %v3790, %v2507
    %v3792 = vsel %vm1953, %v3791, %v2294
    %3795 = vrot.lane.b32.xlu0 %v3783, 32
    %v3796 = vpop.permute.xlu0 %3795
    %3797 = vrot.lane.b32.xlu0 %v3786, 32
    %v3798 = vpop.permute.xlu0 %3797
    %3803 = vrot.lane.b32.xlu0 %v3789, 64
    %v3804 = vpop.permute.xlu0 %3803
    %3805 = vrot.lane.b32.xlu0 %v3792, 64
    %v3806 = vpop.permute.xlu0 %3805
    %v3809 = vsel %vm175, %v3796, %v3804
    %v3810 = vsel %vm175, %v3798, %v3806
    %v3812 = vrot.slane %v3810, 6
    %3813 = vrot.lane.b32.xlu0 %v3812, 64
    %v3814 = vpop.permute.xlu0 %3813
    %v3816 = vsel %vm2010, %v3809, %v3814
    %v3817 = vld [vmem:[%s10] sm:$0xff]
    %v3818 = vld [vmem:[%s10 + $0x8] sm:$0xff]
    %v3819 = vld [vmem:[%s10 + $0x10] sm:$0xff]
    %v3820 = vld [vmem:[%s10 + $0x18] sm:$0xff]
    %v3821 = vld [vmem:[%s10 + $0x20] sm:$0xff]
    %v3822 = vld [vmem:[%s10 + $0x28] sm:$0xff]
    %v3823 = vld [vmem:[%s10 + $0x30] sm:$0xff]
    %v3824 = vld [vmem:[%s10 + $0x38] sm:$0xff]
    %v3825 = vld [vmem:[%s10 + $0x40] sm:$0xff]
    %v3826 = vld [vmem:[%s10 + $0x48] sm:$0xff]
    %v3827 = vld [vmem:[%s10 + $0x50] sm:$0xff]
    %v3828 = vld [vmem:[%s10 + $0x58] sm:$0xff]
    %v3829 = vld [vmem:[%s10 + $0x60] sm:$0xff]
    %v3830 = vld [vmem:[%s10 + $0x68] sm:$0xff]
    %v3831 = vld [vmem:[%s10 + $0x70] sm:$0xff]
    %v3832 = vld [vmem:[%s10 + $0x78] sm:$0xff]
    %v3833 = vld [vmem:[%s11] sm:$0x1]
    %v3835 = vlaneseq
    %v3836 = vshrl.u32 %v3835, 7
    %v3837 = vsub.s32 0, %v3836
    %v3838 = vrot.slane %v3833, %v3837
    %3840 = vmatprep.subr.mxu0 0.0
    %3841 = vmatpush1.msra.mxu0 %v3817
    %3842 = vmatprep.subr.mxu0 0.0
    %3843 = vmatpush1.msra.mxu0 %v3818
    %3844 = vmatprep.subr.mxu0 0.0
    %3845 = vmatpush1.msra.mxu0 %v3819
    %3846 = vmatprep.subr.mxu0 0.0
    %3847 = vmatpush1.msra.mxu0 %v3820
    %3848 = vmatprep.subr.mxu0 0.0
    %3849 = vmatpush1.msra.mxu0 %v3821
    %3850 = vmatprep.subr.mxu0 0.0
    %3851 = vmatpush1.msra.mxu0 %v3822
    %3852 = vmatprep.subr.mxu0 0.0
    %3853 = vmatpush1.msra.mxu0 %v3823
    %3854 = vmatprep.subr.mxu0 0.0
    %3855 = vmatpush1.msra.mxu0 %v3824
    %3856 = vmatprep.subr.mxu0 0.0
    %3857 = vmatpush1.msra.mxu0 %v3825
    %3858 = vmatprep.subr.mxu0 0.0
    %3859 = vmatpush1.msra.mxu0 %v3826
    %3860 = vmatprep.subr.mxu0 0.0
    %3861 = vmatpush1.msra.mxu0 %v3827
    %3862 = vmatprep.subr.mxu0 0.0
    %3863 = vmatpush1.msra.mxu0 %v3828
    %3864 = vmatprep.subr.mxu0 0.0
    %3865 = vmatpush1.msra.mxu0 %v3829
    %3866 = vmatprep.subr.mxu0 0.0
    %3867 = vmatpush1.msra.mxu0 %v3830
    %3868 = vmatprep.subr.mxu0 0.0
    %3869 = vmatpush1.msra.mxu0 %v3831
    %3870 = vmatprep.subr.mxu0 0.0
    %3871 = vmatpush1.msra.mxu0 %v3832
    %3872 = vmatprep.subr.mxu0 0.0
    %3873 = vmatpush1.msra.mxu0 0.0
    %3874 = vmatprep.subr.mxu0 0.0
    %3875 = vmatpush1.msra.mxu0 0.0
    %3876 = vmatprep.subr.mxu0 0.0
    %3877 = vmatpush1.msra.mxu0 0.0
    %3878 = vmatprep.subr.mxu0 0.0
    %3879 = vmatpush1.msra.mxu0 0.0
    %3880 = vmatprep.subr.mxu0 0.0
    %3881 = vmatpush1.msra.mxu0 0.0
    %3882 = vmatprep.subr.mxu0 0.0
    %3883 = vmatpush1.msra.mxu0 0.0
    %3884 = vmatprep.subr.mxu0 0.0
    %3885 = vmatpush1.msra.mxu0 0.0
    %3886 = vmatprep.subr.mxu0 0.0
    %3887 = vmatpush1.msra.mxu0 0.0
    %3888 = vmatprep.subr.mxu0 0.0
    %3889 = vmatpush1.msra.mxu0 0.0
    %3890 = vmatprep.subr.mxu0 0.0
    %3891 = vmatpush1.msra.mxu0 0.0
    %3892 = vmatprep.subr.mxu0 0.0
    %3893 = vmatpush1.msra.mxu0 0.0
    %3894 = vmatprep.subr.mxu0 0.0
    %3895 = vmatpush1.msra.mxu0 0.0
    %3896 = vmatprep.subr.mxu0 0.0
    %3897 = vmatpush1.msra.mxu0 0.0
    %3898 = vmatprep.subr.mxu0 0.0
    %3899 = vmatpush1.msra.mxu0 0.0
    %3900 = vmatprep.subr.mxu0 0.0
    %3901 = vmatpush1.msra.mxu0 0.0
    %3902 = vmatprep.subr.mxu0 0.0
    %3903 = vmatpush1.msra.mxu0 0.0
    %3904 = vmatprep.mubr.f32.mxu0 0.0
    %3905 = vmatmul.mubr.f32.gmra.mrb[0].mxu0 %v3816
    %v3906 = vpop.f32.mrb[0].mxu0
    %v3907 = vadd.f32 %v3838, %v3906
    %v3908 = vpop.f32.mrb[0].mxu0
    %3909 = vdwg.mxu0
    %v3910 = vld [vmem:[%s12] sm:$0xff]
    %v3911 = vld [vmem:[%s12 + $0x8] sm:$0xff]
    %v3912 = vld [vmem:[%s12 + $0x10] sm:$0xff]
    %v3913 = vld [vmem:[%s12 + $0x18] sm:$0xff]
    %v3914 = vld [vmem:[%s13] sm:$0x1]
    %v3916 = vlaneseq
    %v3917 = vshrl.u32 %v3916, 7
    %v3918 = vsub.s32 0, %v3917
    %v3919 = vrot.slane %v3914, %v3918
    %v3922 = vsel %vm175, %v3907, 0
    %3924 = vmatprep.subr.mxu0 0.0
    %3925 = vmatpush1.msra.mxu0 %v3910
    %3926 = vmatprep.subr.mxu0 0.0
    %3927 = vmatpush1.msra.mxu0 %v3911
    %3928 = vmatprep.subr.mxu0 0.0
    %3929 = vmatpush1.msra.mxu0 %v3912
    %3930 = vmatprep.subr.mxu0 0.0
    %3931 = vmatpush1.msra.mxu0 %v3913
    %3932 = vmatprep.subr.mxu0 0.0
    %3933 = vmatpush1.msra.mxu0 0.0
    %3934 = vmatprep.subr.mxu0 0.0
    %3935 = vmatpush1.msra.mxu0 0.0
    %3936 = vmatprep.subr.mxu0 0.0
    %3937 = vmatpush1.msra.mxu0 0.0
    %3938 = vmatprep.subr.mxu0 0.0
    %3939 = vmatpush1.msra.mxu0 0.0
    %3940 = vmatprep.subr.mxu0 0.0
    %3941 = vmatpush1.msra.mxu0 0.0
    %3942 = vmatprep.subr.mxu0 0.0
    %3943 = vmatpush1.msra.mxu0 0.0
    %3944 = vmatprep.subr.mxu0 0.0
    %3945 = vmatpush1.msra.mxu0 0.0
    %3946 = vmatprep.subr.mxu0 0.0
    %3947 = vmatpush1.msra.mxu0 0.0
    %3948 = vmatprep.subr.mxu0 0.0
    %3949 = vmatpush1.msra.mxu0 0.0
    %3950 = vmatprep.subr.mxu0 0.0
    %3951 = vmatpush1.msra.mxu0 0.0
    %3952 = vmatprep.subr.mxu0 0.0
    %3953 = vmatpush1.msra.mxu0 0.0
    %3954 = vmatprep.subr.mxu0 0.0
    %3955 = vmatpush1.msra.mxu0 0.0
    %3956 = vmatprep.subr.mxu0 0.0
    %3957 = vmatpush1.msra.mxu0 0.0
    %3958 = vmatprep.subr.mxu0 0.0
    %3959 = vmatpush1.msra.mxu0 0.0
    %3960 = vmatprep.subr.mxu0 0.0
    %3961 = vmatpush1.msra.mxu0 0.0
    %3962 = vmatprep.subr.mxu0 0.0
    %3963 = vmatpush1.msra.mxu0 0.0
    %3964 = vmatprep.subr.mxu0 0.0
    %3965 = vmatpush1.msra.mxu0 0.0
    %3966 = vmatprep.subr.mxu0 0.0
    %3967 = vmatpush1.msra.mxu0 0.0
    %3968 = vmatprep.subr.mxu0 0.0
    %3969 = vmatpush1.msra.mxu0 0.0
    %3970 = vmatprep.subr.mxu0 0.0
    %3971 = vmatpush1.msra.mxu0 0.0
    %3972 = vmatprep.subr.mxu0 0.0
    %3973 = vmatpush1.msra.mxu0 0.0
    %3974 = vmatprep.subr.mxu0 0.0
    %3975 = vmatpush1.msra.mxu0 0.0
    %3976 = vmatprep.subr.mxu0 0.0
    %3977 = vmatpush1.msra.mxu0 0.0
    %3978 = vmatprep.subr.mxu0 0.0
    %3979 = vmatpush1.msra.mxu0 0.0
    %3980 = vmatprep.subr.mxu0 0.0
    %3981 = vmatpush1.msra.mxu0 0.0
    %3982 = vmatprep.subr.mxu0 0.0
    %3983 = vmatpush1.msra.mxu0 0.0
    %3984 = vmatprep.subr.mxu0 0.0
    %3985 = vmatpush1.msra.mxu0 0.0
    %3986 = vmatprep.subr.mxu0 0.0
    %3987 = vmatpush1.msra.mxu0 0.0
    %3988 = vmatprep.mubr.f32.mxu0 0.0
    %3989 = vmatmul.mubr.f32.gmra.mrb[0].mxu0 %v3922
    %v3990 = vpop.f32.mrb[0].mxu0
    %v3991 = vadd.f32 %v3919, %v3990
    %v3992 = vpop.f32.mrb[0].mxu0
    %3993 = vdwg.mxu0
    %vm3994 = vcmask 9216
    %3995 = vst.msk [vmem:[#allocation2] sm:$0x3] %vm3994, %v3991
    // Predicated region
    $region58: #{_lambda_.1} parent=1 // pred_check
      _
    $region59: #{_lambda_.1} parent=1 // pred_check_branch
      %3997 = sbr.rel (0) target = $region61
    $region60: #{_lambda_.1} parent=1 // pred_region
      %s3999 = ssub.s32 32, 32
      %4000 = vsyncadd [#allocation3], %s3999
      %s4002 = sshll.u32 [#allocation2], 4
      %s4003 = int_to_ptr.vmem [resolvable:$true] %s4002
      %4005 = dma.vmem_to_hbm [thread:$0]  %s4003, 32, %s14, [#allocation3]
    $region61: #{_lambda_.1} parent=1 // pred_fallthru
      _
    // Predicated region
    $region62: #{_lambda_.1} parent=1 // pred_check
      _
    $region63: #{_lambda_.1} parent=1 // pred_check_branch
      %4007 = sbr.rel (0) target = $region65
    $region64: #{_lambda_.1} parent=1 // pred_region
      %4008 = dma.done [#allocation3], 32
    $region65: #{_lambda_.1} parent=1 // pred_fallthru
      _
    %4009 = vsyncpa [#allocation3], 1

</llo_original>
